<compile_context>
chip_gen: v7x
topology: tpu7x:2x2x1
jax: 0.10.0
libtpu: 0.0.40
codegen_flags: <defaults>
</compile_context>

<pallas_src>
import jax
import jax.numpy as jnp
import numpy as np
from jax.experimental import pallas as pl
from jax.experimental.pallas import tpu as pltpu


# ----------------------------------------------------------------------------
# VMEM budget helper: ~2x (double buffering) the live blocks + margin, clamped
# to a range that is valid on every generation (v5e/v6e/v7x).
# ----------------------------------------------------------------------------
def _vmem_limit_bytes(blocks, scratch_bytes=0):
    total = sum(int(np.prod(shape)) * jnp.dtype(dtype).itemsize
                for shape, dtype in blocks)
    est = 2 * total + scratch_bytes + 4 * 1024 * 1024
    return int(min(32 * 1024 * 1024, max(16 * 1024 * 1024, est)))


# ----------------------------------------------------------------------------
# Pallas kernel: out = relu(x @ w + b), tiled over rows ("parallel" grid axis).
# Used for the three conv layers (im2col patches @ flattened conv weight).
# ----------------------------------------------------------------------------
def _linear_relu_kernel(x_ref, w_ref, b_ref, o_ref):
    acc = jnp.dot(x_ref[...], w_ref[...], preferred_element_type=jnp.float32)
    acc = jnp.maximum(acc + b_ref[...], 0.0)
    o_ref[...] = acc.astype(o_ref.dtype)


def pallas_linear_relu(x, w, b, *, tm=128, out_dtype=jnp.bfloat16):
    """x: [M, K] bf16, w: [K, N] bf16, b: [1, N] f32 -> relu(x @ w + b)."""
    m, k = x.shape
    k2, n = w.shape
    assert k == k2, (k, k2)
    mp = -(-m // tm) * tm
    if mp != m:
        x = jnp.pad(x, ((0, mp - m), (0, 0)))
    vmem = _vmem_limit_bytes([((tm, k), x.dtype), ((k, n), w.dtype),
                              ((1, n), b.dtype), ((tm, n), out_dtype)])
    out = pl.pallas_call(
        _linear_relu_kernel,
        out_shape=jax.ShapeDtypeStruct((mp, n), out_dtype),
        grid=(mp // tm,),
        in_specs=[
            pl.BlockSpec((tm, k), lambda i: (i, 0)),
            pl.BlockSpec((k, n), lambda i: (0, 0)),
            pl.BlockSpec((1, n), lambda i: (0, 0)),
        ],
        out_specs=pl.BlockSpec((tm, n), lambda i: (i, 0)),
        compiler_params=pltpu.CompilerParams(
            dimension_semantics=("parallel",),
            vmem_limit_bytes=vmem),
    )(x, w, b)
    return out[:m]


def conv2d_relu(x, w2d, b, *, ksize, stride, padding, input_nchw=False):
    """Conv2d + ReLU: fused XLA patch extraction + Pallas matmul. NHWC out."""
    # TODO(synk): patch extraction stays in XLA (conv_general_dilated_patches);
    # in-kernel strided pl.ds patch reads from a VMEM tile are not implemented.
    kh, kw = ksize
    sh, sw = stride
    ph, pw = padding
    dn = ("NCHW", "OIHW", "NHWC") if input_nchw else ("NHWC", "HWIO", "NHWC")
    patches = jax.lax.conv_general_dilated_patches(
        x, filter_shape=(kh, kw), window_strides=(sh, sw),
        padding=((ph, ph), (pw, pw)), dimension_numbers=dn)
    bsz, ho, wo, kdim = patches.shape            # feature order = (cin, kh, kw)
    cout = w2d.shape[1]
    out = pallas_linear_relu(patches.reshape(bsz * ho * wo, kdim), w2d, b)
    return out.reshape(bsz, ho, wo, cout)


# ----------------------------------------------------------------------------
# Fused FC head: fc_img (K tiled over the grid, f32 accumulator) + the three
# small FCs (block-diagonal weight) + img_goal_ray1 + img_goal_ray2 + tanh,
# all inside a single pallas_call with VMEM-resident intermediates.
# ----------------------------------------------------------------------------
def _fused_fc_kernel(ximg_ref, wimg_ref, bimg_ref,
                     xs_ref, ws_ref, bs_ref,
                     w1a_ref, w1b_ref, b1_ref,
                     w2_ref, b2_ref,
                     o_ref, acc_ref):
    k = pl.program_id(0)

    @pl.when(k == 0)
    def _():
        acc_ref[...] = jnp.zeros_like(acc_ref)

    # fc_img partial product for this K block (bf16 x bf16 -> f32 accumulate).
    acc_ref[...] += jnp.dot(ximg_ref[...], wimg_ref[...],
                            preferred_element_type=jnp.float32)

    @pl.when(k == pl.num_programs(0) - 1)
    def _():
        img = jnp.maximum(acc_ref[...] + bimg_ref[...], 0.0)            # [Mp,512]
        small = jnp.dot(xs_ref[...], ws_ref[...],
                        preferred_element_type=jnp.float32) + bs_ref[...]
        small = jnp.maximum(small, 0.0)                                  # [Mp,192]
        h = jnp.dot(img.astype(jnp.bfloat16), w1a_ref[...],
                    preferred_element_type=jnp.float32)
        h = h + jnp.dot(small.astype(jnp.bfloat16), w1b_ref[...],
                        preferred_element_type=jnp.float32)
        h = jnp.maximum(h + b1_ref[...], 0.0)                            # [Mp,512]
        v = jnp.dot(h.astype(jnp.bfloat16), w2_ref[...],
                    preferred_element_type=jnp.float32) + b2_ref[...]
        o_ref[...] = jnp.tanh(v)                                         # [Mp,128]


def fused_fc_head(x_img, x_small, p):
    b, k_img = x_img.shape
    mp = max(16, -(-b // 16) * 16)           # pad batch rows to 16 sublanes (bf16)
    ksp = p["w_small"].shape[0]              # 128 (lane-padded 6*HIST)
    n_hidden = p["w_img"].shape[1]           # 512
    n_small = p["w_small"].shape[1]          # 192
    n_out = p["w2"].shape[1]                 # 128 (lane-dense padded final layer)

    x_img = jnp.pad(x_img.astype(jnp.bfloat16), ((0, mp - b), (0, 0)))
    x_small = jnp.pad(x_small.astype(jnp.bfloat16),
                      ((0, mp - b), (0, ksp - x_small.shape[1])))

    # K tile for fc_img: largest nice multiple of 128 dividing K (5120 -> 640).
    tk = next((t for t in (640, 512, 256, 128) if k_img % t == 0), k_img)
    nk = k_img // tk

    blocks = [((mp, tk), jnp.bfloat16), ((tk, n_hidden), jnp.bfloat16),
              ((1, n_hidden), jnp.float32),
              ((mp, ksp), jnp.bfloat16), ((ksp, n_small), jnp.bfloat16),
              ((1, n_small), jnp.float32),
              ((n_hidden, n_hidden), jnp.bfloat16),
              ((n_small, n_hidden), jnp.bfloat16), ((1, n_hidden), jnp.float32),
              ((n_hidden, n_out), jnp.bfloat16), ((1, n_out), jnp.float32),
              ((mp, n_out), jnp.float32)]
    vmem = _vmem_limit_bytes(blocks, scratch_bytes=mp * n_hidden * 4)

    out = pl.pallas_call(
        _fused_fc_kernel,
        out_shape=jax.ShapeDtypeStruct((mp, n_out), jnp.float32),
        grid=(nk,),
        in_specs=[
            pl.BlockSpec((mp, tk), lambda k: (0, k)),           # x_img (K blocks)
            pl.BlockSpec((tk, n_hidden), lambda k: (k, 0)),     # w_img (K blocks)
            pl.BlockSpec((1, n_hidden), lambda k: (0, 0)),      # b_img
            pl.BlockSpec((mp, ksp), lambda k: (0, 0)),          # x_small
            pl.BlockSpec((ksp, n_small), lambda k: (0, 0)),     # w_small blockdiag
            pl.BlockSpec((1, n_small), lambda k: (0, 0)),       # b_small
            pl.BlockSpec((n_hidden, n_hidden), lambda k: (0, 0)),  # W1 (img rows)
            pl.BlockSpec((n_small, n_hidden), lambda k: (0, 0)),   # W1 (small rows)
            pl.BlockSpec((1, n_hidden), lambda k: (0, 0)),      # b1
            pl.BlockSpec((n_hidden, n_out), lambda k: (0, 0)),  # W2 (padded 128)
            pl.BlockSpec((1, n_out), lambda k: (0, 0)),         # b2 (padded 128)
        ],
        out_specs=pl.BlockSpec((mp, n_out), lambda k: (0, 0)),
        scratch_shapes=[pltpu.VMEM((mp, n_hidden), jnp.float32)],
        compiler_params=pltpu.CompilerParams(
            dimension_semantics=("arbitrary",),
            vmem_limit_bytes=vmem),
    )(x_img, p["w_img"], p["b_img"], x_small, p["w_small"], p["b_small"],
      p["w1_img"], p["w1_small"], p["b1"], p["w2"], p["b2"])
    return out[:b, :1]


# ----------------------------------------------------------------------------
# Parameter init (PyTorch-default-style uniform) + one-time kernel-ready
# preprocessing (bf16 casts, conv weight flatten, block-diag fusion, padding).
# ----------------------------------------------------------------------------
def _uniform(key, shape, bound):
    return jax.random.uniform(key, shape, jnp.float32, -bound, bound)


def init_value_params(key, hist):
    keys = jax.random.split(key, 18)

    def linear(i, fan_in, fan_out, zero_bias=False):
        bound = 1.0 / np.sqrt(fan_in)
        w = _uniform(keys[i], (fan_in, fan_out), bound)
        b = (jnp.zeros((fan_out,), jnp.float32) if zero_bias
             else _uniform(keys[i + 1], (fan_out,), bound))
        return w, b

    def conv(i, cin, cout, kh, kw):
        bound = 1.0 / np.sqrt(cin * kh * kw)
        w = _uniform(keys[i], (cout, cin, kh, kw), bound)
        b = _uniform(keys[i + 1], (cout,), bound)
        return w, b

    raw = {
        "conv1": conv(0, hist, 32, 10, 14),
        "conv2": conv(2, 32, 64, 4, 4),
        "conv3": conv(4, 64, 64, 3, 3),
        "fc_img": linear(6, 8 * 10 * 64, 512),
        "fc_goal": linear(8, hist * 3, 96),
        "fc_ray": linear(10, hist * 1, 32),
        "fc_action": linear(12, hist * 2, 64),
        "img_goal_ray1": linear(14, 704, 512),
        # torch: img_goal_ray2.bias.data.mul_(0.0) -> zero bias
        "img_goal_ray2": linear(16, 512, 1, zero_bias=True),
    }
    return _prepare_params(raw, hist)


def _prepare_params(raw, hist):
    p = {}
    # conv weights -> [Cin*kh*kw, Cout]; feature order (cin, kh, kw) matches
    # both the torch weight flatten and conv_general_dilated_patches.
    for name in ("conv1", "conv2", "conv3"):
        w, b = raw[name]
        cout = w.shape[0]
        p[name + "_w"] = jnp.asarray(w.reshape(cout, -1).T, jnp.bfloat16)
        p[name + "_b"] = jnp.asarray(b.reshape(1, cout), jnp.float32)

    w, b = raw["fc_img"]
    p["w_img"] = w.astype(jnp.bfloat16)                          # [5120, 512]
    p["b_img"] = b.reshape(1, -1).astype(jnp.float32)

    # fc_goal / fc_ray / fc_action fused into one block-diagonal weight,
    # K padded up to a lane-friendly multiple of 128.
    wg, bg = raw["fc_goal"]
    wr, br = raw["fc_ray"]
    wa, ba = raw["fc_action"]
    ks = 6 * hist
    ksp = max(128, -(-ks // 128) * 128)
    w_small = np.zeros((ksp, 192), np.float32)
    w_small[0:3 * hist, 0:96] = np.asarray(wg)
    w_small[3 * hist:4 * hist, 96:128] = np.asarray(wr)
    w_small[4 * hist:6 * hist, 128:192] = np.asarray(wa)
    p["w_small"] = jnp.asarray(w_small, jnp.bfloat16)
    p["b_small"] = jnp.concatenate([bg, br, ba]).reshape(1, 192).astype(jnp.float32)

    # img_goal_ray1 split into rows that multiply `img` and rows that multiply
    # the (goal|ray|action) block, matching the torch concat order.
    w1, b1 = raw["img_goal_ray1"]                                # [704, 512]
    p["w1_img"] = w1[:512].astype(jnp.bfloat16)
    p["w1_small"] = w1[512:].astype(jnp.bfloat16)
    p["b1"] = b1.reshape(1, -1).astype(jnp.float32)

    # final layer padded from N=1 to N=128 for lane-dense unmasked stores.
    w2, b2 = raw["img_goal_ray2"]                                # [512, 1]
    w2p = np.zeros((512, 128), np.float32)
    w2p[:, :1] = np.asarray(w2)
    b2p = np.zeros((1, 128), np.float32)
    b2p[0, 0] = float(b2[0])
    p["w2"] = jnp.asarray(w2p, jnp.bfloat16)
    p["b2"] = jnp.asarray(b2p, jnp.float32)
    return p


# ----------------------------------------------------------------------------
# Forward pass (mirrors Value.forward)
# ----------------------------------------------------------------------------
def value_forward(params, depth_img, goal, ray, hist_action):
    b = depth_img.shape[0]

    x = depth_img.astype(jnp.bfloat16)                  # NCHW [B, HIST, 128, 160]
    x = conv2d_relu(x, params["conv1_w"], params["conv1_b"],
                    ksize=(10, 14), stride=(8, 8), padding=(1, 4),
                    input_nchw=True)                    # NHWC [B, 16, 20, 32]
    x = conv2d_relu(x, params["conv2_w"], params["conv2_b"],
                    ksize=(4, 4), stride=(2, 2), padding=(1, 1))   # [B, 8, 10, 64]
    x = conv2d_relu(x, params["conv3_w"], params["conv3_b"],
                    ksize=(3, 3), stride=(1, 1), padding=(1, 1))   # [B, 8, 10, 64]

    # torch does .view(B, -1) on NCHW -> flatten channel-major.
    x_img = x.transpose(0, 3, 1, 2).reshape(b, -1)      # [B, 5120]

    x_small = jnp.concatenate(
        [goal.reshape(b, -1), ray.reshape(b, -1), hist_action.reshape(b, -1)],
        axis=1)                                         # [B, 6*HIST]

    return fused_fc_head(x_img, x_small, params)        # [B, 1]


# ----------------------------------------------------------------------------
if __name__ == "__main__":
    HIST = 4   # history length (small)
    B = 2      # batch
    # Spatial size is dictated by fc_img (64 * 8 * 10): the conv stack maps
    # 128 x 160 -> 16 x 20 -> 8 x 10.
    H, W = 128, 160

    key = jax.random.PRNGKey(0)
    kp, kd, kg, kr, ka = jax.random.split(key, 5)

    params = init_value_params(kp, HIST)

    depth_img = jax.random.normal(kd, (B, HIST, H, W), jnp.float32)
    goal = jax.random.normal(kg, (B, HIST, 3), jnp.float32)
    ray = jax.random.normal(kr, (B, HIST, 1), jnp.float32)
    hist_action = jax.random.normal(ka, (B, HIST, 2), jnp.float32)

    fwd = jax.jit(value_forward)
    value = jax.block_until_ready(fwd(params, depth_img, goal, ray, hist_action))

    assert value.shape == (B, 1), value.shape
    assert bool(jnp.all(jnp.isfinite(value)))
    print("KERNEL_OK")
</pallas_src>

<mosaic_0001>
module attributes {stable_mosaic.version = 11 : i64} {
  func.func @_linear_relu_kernel(%arg0: i32, %arg1: memref<128x560xbf16, #tpu.memory_space<vmem>>, %arg2: memref<560x32xbf16, #tpu.memory_space<vmem>>, %arg3: memref<1x32xf32, #tpu.memory_space<vmem>>, %arg4: memref<128x32xbf16, #tpu.memory_space<vmem>>) attributes {dimension_semantics = [#tpu.dimension_semantics<parallel>], iteration_bounds = array<i64: 5>, scalar_prefetch = 0 : i64, scratch_operands = 0 : i64, tpu.core_type = #tpu.core_type<tc>, window_params = [{transform_indices = @transform_0, window_bounds = array<i64: 128, 560>}, {pipeline_mode = #tpu.pipeline_mode<synchronous>, transform_indices = @transform_1, window_bounds = array<i64: 560, 32>}, {pipeline_mode = #tpu.pipeline_mode<synchronous>, transform_indices = @transform_2, window_bounds = array<i64: 1, 32>}, {transform_indices = @transform_3, window_bounds = array<i64: 128, 32>}]} {
    %c0 = arith.constant 0 : index
    %c0_0 = arith.constant 0 : index
    %0 = vector.load %arg1[%c0, %c0_0] : memref<128x560xbf16, #tpu.memory_space<vmem>>, vector<128x560xbf16>
    %c0_1 = arith.constant 0 : index
    %c0_2 = arith.constant 0 : index
    %1 = vector.load %arg2[%c0_1, %c0_2] : memref<560x32xbf16, #tpu.memory_space<vmem>>, vector<560x32xbf16>
    %cst = arith.constant dense<0.000000e+00> : vector<128x32xf32>
    %2 = tpu.matmul %0, %1, %cst {dimension_numbers = #tpu.dot_dimension_numbers<[1], [0], [0], [1], [0, 0, 1, 1], [], []>} : vector<128x560xbf16>, vector<560x32xbf16>, vector<128x32xf32> -> vector<128x32xf32>
    %c0_3 = arith.constant 0 : index
    %c0_4 = arith.constant 0 : index
    %3 = vector.load %arg3[%c0_3, %c0_4] : memref<1x32xf32, #tpu.memory_space<vmem>>, vector<1x32xf32>
    %4 = vector.broadcast %3 : vector<1x32xf32> to vector<128x32xf32>
    %5 = arith.addf %2, %4 : vector<128x32xf32>
    %cst_5 = arith.constant 0.000000e+00 : f32
    %6 = vector.broadcast %cst_5 : f32 to vector<128x32xf32>
    %7 = arith.maximumf %5, %6 : vector<128x32xf32>
    %8 = arith.truncf %7 : vector<128x32xf32> to vector<128x32xbf16>
    %c0_6 = arith.constant 0 : index
    %c0_7 = arith.constant 0 : index
    %9 = vector.load %arg4[%c0_6, %c0_7] : memref<128x32xbf16, #tpu.memory_space<vmem>>, vector<128x32xbf16>
    tpu.vector_store %arg4[%c0_6, %c0_7], %8 {strides = array<i32>} : memref<128x32xbf16, #tpu.memory_space<vmem>>, vector<128x32xbf16>,
    return
  }
  func.func @transform_0(%arg0: i32) -> (i32, i32) {
    %c0_i32 = arith.constant 0 : i32
    %c0_i32_0 = arith.constant 0 : i32
    return %arg0, %c0_i32 : i32, i32
  }
  func.func @transform_1(%arg0: i32) -> (i32, i32) {
    %c0_i32 = arith.constant 0 : i32
    %c0_i32_0 = arith.constant 0 : i32
    %c0_i32_1 = arith.constant 0 : i32
    return %c0_i32, %c0_i32_0 : i32, i32
  }
  func.func @transform_2(%arg0: i32) -> (i32, i32) {
    %c0_i32 = arith.constant 0 : i32
    %c0_i32_0 = arith.constant 0 : i32
    %c0_i32_1 = arith.constant 0 : i32
    return %c0_i32, %c0_i32_0 : i32, i32
  }
  func.func @transform_3(%arg0: i32) -> (i32, i32) {
    %c0_i32 = arith.constant 0 : i32
    %c0_i32_0 = arith.constant 0 : i32
    return %arg0, %c0_i32 : i32, i32
  }
}

module attributes {stable_mosaic.version = 11 : i64} {
  func.func @_linear_relu_kernel(%arg0: i32, %arg1: memref<128x512xbf16, #tpu.memory_space<vmem>>, %arg2: memref<512x64xbf16, #tpu.memory_space<vmem>>, %arg3: memref<1x64xf32, #tpu.memory_space<vmem>>, %arg4: memref<128x64xbf16, #tpu.memory_space<vmem>>) attributes {dimension_semantics = [#tpu.dimension_semantics<parallel>], iteration_bounds = array<i64: 2>, scalar_prefetch = 0 : i64, scratch_operands = 0 : i64, tpu.core_type = #tpu.core_type<tc>, window_params = [{transform_indices = @transform_0, window_bounds = array<i64: 128, 512>}, {pipeline_mode = #tpu.pipeline_mode<synchronous>, transform_indices = @transform_1, window_bounds = array<i64: 512, 64>}, {pipeline_mode = #tpu.pipeline_mode<synchronous>, transform_indices = @transform_2, window_bounds = array<i64: 1, 64>}, {transform_indices = @transform_3, window_bounds = array<i64: 128, 64>}]} {
    %c0 = arith.constant 0 : index
    %c0_0 = arith.constant 0 : index
    %0 = vector.load %arg1[%c0, %c0_0] : memref<128x512xbf16, #tpu.memory_space<vmem>>, vector<128x512xbf16>
    %c0_1 = arith.constant 0 : index
    %c0_2 = arith.constant 0 : index
    %1 = vector.load %arg2[%c0_1, %c0_2] : memref<512x64xbf16, #tpu.memory_space<vmem>>, vector<512x64xbf16>
    %cst = arith.constant dense<0.000000e+00> : vector<128x64xf32>
    %2 = tpu.matmul %0, %1, %cst {dimension_numbers = #tpu.dot_dimension_numbers<[1], [0], [0], [1], [0, 0, 1, 1], [], []>} : vector<128x512xbf16>, vector<512x64xbf16>, vector<128x64xf32> -> vector<128x64xf32>
    %c0_3 = arith.constant 0 : index
    %c0_4 = arith.constant 0 : index
    %3 = vector.load %arg3[%c0_3, %c0_4] : memref<1x64xf32, #tpu.memory_space<vmem>>, vector<1x64xf32>
    %4 = vector.broadcast %3 : vector<1x64xf32> to vector<128x64xf32>
    %5 = arith.addf %2, %4 : vector<128x64xf32>
    %cst_5 = arith.constant 0.000000e+00 : f32
    %6 = vector.broadcast %cst_5 : f32 to vector<128x64xf32>
    %7 = arith.maximumf %5, %6 : vector<128x64xf32>
    %8 = arith.truncf %7 : vector<128x64xf32> to vector<128x64xbf16>
    %c0_6 = arith.constant 0 : index
    %c0_7 = arith.constant 0 : index
    %9 = vector.load %arg4[%c0_6, %c0_7] : memref<128x64xbf16, #tpu.memory_space<vmem>>, vector<128x64xbf16>
    tpu.vector_store %arg4[%c0_6, %c0_7], %8 {strides = array<i32>} : memref<128x64xbf16, #tpu.memory_space<vmem>>, vector<128x64xbf16>,
    return
  }
  func.func @transform_0(%arg0: i32) -> (i32, i32) {
    %c0_i32 = arith.constant 0 : i32
    %c0_i32_0 = arith.constant 0 : i32
    return %arg0, %c0_i32 : i32, i32
  }
  func.func @transform_1(%arg0: i32) -> (i32, i32) {
    %c0_i32 = arith.constant 0 : i32
    %c0_i32_0 = arith.constant 0 : i32
    %c0_i32_1 = arith.constant 0 : i32
    return %c0_i32, %c0_i32_0 : i32, i32
  }
  func.func @transform_2(%arg0: i32) -> (i32, i32) {
    %c0_i32 = arith.constant 0 : i32
    %c0_i32_0 = arith.constant 0 : i32
    %c0_i32_1 = arith.constant 0 : i32
    return %c0_i32, %c0_i32_0 : i32, i32
  }
  func.func @transform_3(%arg0: i32) -> (i32, i32) {
    %c0_i32 = arith.constant 0 : i32
    %c0_i32_0 = arith.constant 0 : i32
    return %arg0, %c0_i32 : i32, i32
  }
}

module attributes {stable_mosaic.version = 11 : i64} {
  func.func @_linear_relu_kernel(%arg0: i32, %arg1: memref<128x576xbf16, #tpu.memory_space<vmem>>, %arg2: memref<576x64xbf16, #tpu.memory_space<vmem>>, %arg3: memref<1x64xf32, #tpu.memory_space<vmem>>, %arg4: memref<128x64xbf16, #tpu.memory_space<vmem>>) attributes {dimension_semantics = [#tpu.dimension_semantics<parallel>], iteration_bounds = array<i64: 2>, scalar_prefetch = 0 : i64, scratch_operands = 0 : i64, tpu.core_type = #tpu.core_type<tc>, window_params = [{transform_indices = @transform_0, window_bounds = array<i64: 128, 576>}, {pipeline_mode = #tpu.pipeline_mode<synchronous>, transform_indices = @transform_1, window_bounds = array<i64: 576, 64>}, {pipeline_mode = #tpu.pipeline_mode<synchronous>, transform_indices = @transform_2, window_bounds = array<i64: 1, 64>}, {transform_indices = @transform_3, window_bounds = array<i64: 128, 64>}]} {
    %c0 = arith.constant 0 : index
    %c0_0 = arith.constant 0 : index
    %0 = vector.load %arg1[%c0, %c0_0] : memref<128x576xbf16, #tpu.memory_space<vmem>>, vector<128x576xbf16>
    %c0_1 = arith.constant 0 : index
    %c0_2 = arith.constant 0 : index
    %1 = vector.load %arg2[%c0_1, %c0_2] : memref<576x64xbf16, #tpu.memory_space<vmem>>, vector<576x64xbf16>
    %cst = arith.constant dense<0.000000e+00> : vector<128x64xf32>
    %2 = tpu.matmul %0, %1, %cst {dimension_numbers = #tpu.dot_dimension_numbers<[1], [0], [0], [1], [0, 0, 1, 1], [], []>} : vector<128x576xbf16>, vector<576x64xbf16>, vector<128x64xf32> -> vector<128x64xf32>
    %c0_3 = arith.constant 0 : index
    %c0_4 = arith.constant 0 : index
    %3 = vector.load %arg3[%c0_3, %c0_4] : memref<1x64xf32, #tpu.memory_space<vmem>>, vector<1x64xf32>
    %4 = vector.broadcast %3 : vector<1x64xf32> to vector<128x64xf32>
    %5 = arith.addf %2, %4 : vector<128x64xf32>
    %cst_5 = arith.constant 0.000000e+00 : f32
    %6 = vector.broadcast %cst_5 : f32 to vector<128x64xf32>
    %7 = arith.maximumf %5, %6 : vector<128x64xf32>
    %8 = arith.truncf %7 : vector<128x64xf32> to vector<128x64xbf16>
    %c0_6 = arith.constant 0 : index
    %c0_7 = arith.constant 0 : index
    %9 = vector.load %arg4[%c0_6, %c0_7] : memref<128x64xbf16, #tpu.memory_space<vmem>>, vector<128x64xbf16>
    tpu.vector_store %arg4[%c0_6, %c0_7], %8 {strides = array<i32>} : memref<128x64xbf16, #tpu.memory_space<vmem>>, vector<128x64xbf16>,
    return
  }
  func.func @transform_0(%arg0: i32) -> (i32, i32) {
    %c0_i32 = arith.constant 0 : i32
    %c0_i32_0 = arith.constant 0 : i32
    return %arg0, %c0_i32 : i32, i32
  }
  func.func @transform_1(%arg0: i32) -> (i32, i32) {
    %c0_i32 = arith.constant 0 : i32
    %c0_i32_0 = arith.constant 0 : i32
    %c0_i32_1 = arith.constant 0 : i32
    return %c0_i32, %c0_i32_0 : i32, i32
  }
  func.func @transform_2(%arg0: i32) -> (i32, i32) {
    %c0_i32 = arith.constant 0 : i32
    %c0_i32_0 = arith.constant 0 : i32
    %c0_i32_1 = arith.constant 0 : i32
    return %c0_i32, %c0_i32_0 : i32, i32
  }
  func.func @transform_3(%arg0: i32) -> (i32, i32) {
    %c0_i32 = arith.constant 0 : i32
    %c0_i32_0 = arith.constant 0 : i32
    return %arg0, %c0_i32 : i32, i32
  }
}

module attributes {stable_mosaic.version = 11 : i64} {
  func.func @_fused_fc_kernel(%arg0: i32, %arg1: memref<16x640xbf16, #tpu.memory_space<vmem>>, %arg2: memref<640x512xbf16, #tpu.memory_space<vmem>>, %arg3: memref<1x512xf32, #tpu.memory_space<vmem>>, %arg4: memref<16x128xbf16, #tpu.memory_space<vmem>>, %arg5: memref<128x192xbf16, #tpu.memory_space<vmem>>, %arg6: memref<1x192xf32, #tpu.memory_space<vmem>>, %arg7: memref<512x512xbf16, #tpu.memory_space<vmem>>, %arg8: memref<192x512xbf16, #tpu.memory_space<vmem>>, %arg9: memref<1x512xf32, #tpu.memory_space<vmem>>, %arg10: memref<512x128xbf16, #tpu.memory_space<vmem>>, %arg11: memref<1x128xf32, #tpu.memory_space<vmem>>, %arg12: memref<16x128xf32, #tpu.memory_space<vmem>>, %arg13: memref<16x512xf32, #tpu.memory_space<vmem>>) attributes {dimension_semantics = [#tpu.dimension_semantics<arbitrary>], iteration_bounds = array<i64: 8>, scalar_prefetch = 0 : i64, scratch_operands = 1 : i64, tpu.core_type = #tpu.core_type<tc>, window_params = [{transform_indices = @transform_0, window_bounds = array<i64: 16, 640>}, {transform_indices = @transform_1, window_bounds = array<i64: 640, 512>}, {pipeline_mode = #tpu.pipeline_mode<synchronous>, transform_indices = @transform_2, window_bounds = array<i64: 1, 512>}, {pipeline_mode = #tpu.pipeline_mode<synchronous>, transform_indices = @transform_3, window_bounds = array<i64: 16, 128>}, {pipeline_mode = #tpu.pipeline_mode<synchronous>, transform_indices = @transform_4, window_bounds = array<i64: 128, 192>}, {pipeline_mode = #tpu.pipeline_mode<synchronous>, transform_indices = @transform_5, window_bounds = array<i64: 1, 192>}, {pipeline_mode = #tpu.pipeline_mode<synchronous>, transform_indices = @transform_6, window_bounds = array<i64: 512, 512>}, {pipeline_mode = #tpu.pipeline_mode<synchronous>, transform_indices = @transform_7, window_bounds = array<i64: 192, 512>}, {pipeline_mode = #tpu.pipeline_mode<synchronous>, transform_indices = @transform_8, window_bounds = array<i64: 1, 512>}, {pipeline_mode = #tpu.pipeline_mode<synchronous>, transform_indices = @transform_9, window_bounds = array<i64: 512, 128>}, {pipeline_mode = #tpu.pipeline_mode<synchronous>, transform_indices = @transform_10, window_bounds = array<i64: 1, 128>}, {pipeline_mode = #tpu.pipeline_mode<synchronous>, transform_indices = @transform_11, window_bounds = array<i64: 16, 128>}]} {
    %c0_i32 = arith.constant 0 : i32
    %0 = arith.cmpi eq, %arg0, %c0_i32 : i32
    %1 = arith.extui %0 : i1 to i32
    %c0_i32_0 = arith.constant 0 : i32
    %2 = arith.cmpi ne, %1, %c0_i32_0 : i32
    scf.if %2 {
      %cst_9 = arith.constant 0.000000e+00 : f32
      %12 = vector.broadcast %cst_9 : f32 to vector<16x512xf32>
      %c0_10 = arith.constant 0 : index
      %c0_11 = arith.constant 0 : index
      %13 = vector.load %arg13[%c0_10, %c0_11] : memref<16x512xf32, #tpu.memory_space<vmem>>, vector<16x512xf32>
      tpu.vector_store %arg13[%c0_10, %c0_11], %12 {strides = array<i32>} : memref<16x512xf32, #tpu.memory_space<vmem>>, vector<16x512xf32>,
    } else {
    }
    %c0 = arith.constant 0 : index
    %c0_1 = arith.constant 0 : index
    %3 = vector.load %arg13[%c0, %c0_1] : memref<16x512xf32, #tpu.memory_space<vmem>>, vector<16x512xf32>
    %c0_2 = arith.constant 0 : index
    %c0_3 = arith.constant 0 : index
    %4 = vector.load %arg1[%c0_2, %c0_3] : memref<16x640xbf16, #tpu.memory_space<vmem>>, vector<16x640xbf16>
    %c0_4 = arith.constant 0 : index
    %c0_5 = arith.constant 0 : index
    %5 = vector.load %arg2[%c0_4, %c0_5] : memref<640x512xbf16, #tpu.memory_space<vmem>>, vector<640x512xbf16>
    %cst = arith.constant dense<0.000000e+00> : vector<16x512xf32>
    %6 = tpu.matmul %4, %5, %cst {dimension_numbers = #tpu.dot_dimension_numbers<[1], [0], [0], [1], [0, 0, 1, 1], [], []>} : vector<16x640xbf16>, vector<640x512xbf16>, vector<16x512xf32> -> vector<16x512xf32>
    %7 = arith.addf %3, %6 : vector<16x512xf32>
    %c0_6 = arith.constant 0 : index
    %c0_7 = arith.constant 0 : index
    %8 = vector.load %arg13[%c0_6, %c0_7] : memref<16x512xf32, #tpu.memory_space<vmem>>, vector<16x512xf32>
    tpu.vector_store %arg13[%c0_6, %c0_7], %7 {strides = array<i32>} : memref<16x512xf32, #tpu.memory_space<vmem>>, vector<16x512xf32>,
    %c7_i32 = arith.constant 7 : i32
    %9 = arith.cmpi eq, %arg0, %c7_i32 : i32
    %10 = arith.extui %9 : i1 to i32
    %c0_i32_8 = arith.constant 0 : i32
    %11 = arith.cmpi ne, %10, %c0_i32_8 : i32
    scf.if %11 {
      %c0_9 = arith.constant 0 : index
      %c0_10 = arith.constant 0 : index
      %12 = vector.load %arg13[%c0_9, %c0_10] : memref<16x512xf32, #tpu.memory_space<vmem>>, vector<16x512xf32>
      %c0_11 = arith.constant 0 : index
      %c0_12 = arith.constant 0 : index
      %13 = vector.load %arg3[%c0_11, %c0_12] : memref<1x512xf32, #tpu.memory_space<vmem>>, vector<1x512xf32>
      %14 = vector.broadcast %13 : vector<1x512xf32> to vector<16x512xf32>
      %15 = arith.addf %12, %14 : vector<16x512xf32>
      %cst_13 = arith.constant 0.000000e+00 : f32
      %16 = vector.broadcast %cst_13 : f32 to vector<16x512xf32>
      %17 = arith.maximumf %15, %16 : vector<16x512xf32>
      %c0_14 = arith.constant 0 : index
      %c0_15 = arith.constant 0 : index
      %18 = vector.load %arg4[%c0_14, %c0_15] : memref<16x128xbf16, #tpu.memory_space<vmem>>, vector<16x128xbf16>
      %c0_16 = arith.constant 0 : index
      %c0_17 = arith.constant 0 : index
      %19 = vector.load %arg5[%c0_16, %c0_17] : memref<128x192xbf16, #tpu.memory_space<vmem>>, vector<128x192xbf16>
      %cst_18 = arith.constant dense<0.000000e+00> : vector<16x192xf32>
      %20 = tpu.matmul %18, %19, %cst_18 {dimension_numbers = #tpu.dot_dimension_numbers<[1], [0], [0], [1], [0, 0, 1, 1], [], []>} : vector<16x128xbf16>, vector<128x192xbf16>, vector<16x192xf32> -> vector<16x192xf32>
      %c0_19 = arith.constant 0 : index
      %c0_20 = arith.constant 0 : index
      %21 = vector.load %arg6[%c0_19, %c0_20] : memref<1x192xf32, #tpu.memory_space<vmem>>, vector<1x192xf32>
      %22 = vector.broadcast %21 : vector<1x192xf32> to vector<16x192xf32>
      %23 = arith.addf %20, %22 : vector<16x192xf32>
      %cst_21 = arith.constant 0.000000e+00 : f32
      %24 = vector.broadcast %cst_21 : f32 to vector<16x192xf32>
      %25 = arith.maximumf %23, %24 : vector<16x192xf32>
      %26 = arith.truncf %17 : vector<16x512xf32> to vector<16x512xbf16>
      %c0_22 = arith.constant 0 : index
      %c0_23 = arith.constant 0 : index
      %27 = vector.load %arg7[%c0_22, %c0_23] : memref<512x512xbf16, #tpu.memory_space<vmem>>, vector<512x512xbf16>
      %cst_24 = arith.constant dense<0.000000e+00> : vector<16x512xf32>
      %28 = tpu.matmul %26, %27, %cst_24 {dimension_numbers = #tpu.dot_dimension_numbers<[1], [0], [0], [1], [0, 0, 1, 1], [], []>} : vector<16x512xbf16>, vector<512x512xbf16>, vector<16x512xf32> -> vector<16x512xf32>
      %29 = arith.truncf %25 : vector<16x192xf32> to vector<16x192xbf16>
      %c0_25 = arith.constant 0 : index
      %c0_26 = arith.constant 0 : index
      %30 = vector.load %arg8[%c0_25, %c0_26] : memref<192x512xbf16, #tpu.memory_space<vmem>>, vector<192x512xbf16>
      %cst_27 = arith.constant dense<0.000000e+00> : vector<16x512xf32>
      %31 = tpu.matmul %29, %30, %cst_27 {dimension_numbers = #tpu.dot_dimension_numbers<[1], [0], [0], [1], [0, 0, 1, 1], [], []>} : vector<16x192xbf16>, vector<192x512xbf16>, vector<16x512xf32> -> vector<16x512xf32>
      %32 = arith.addf %28, %31 : vector<16x512xf32>
      %c0_28 = arith.constant 0 : index
      %c0_29 = arith.constant 0 : index
      %33 = vector.load %arg9[%c0_28, %c0_29] : memref<1x512xf32, #tpu.memory_space<vmem>>, vector<1x512xf32>
      %34 = vector.broadcast %33 : vector<1x512xf32> to vector<16x512xf32>
      %35 = arith.addf %32, %34 : vector<16x512xf32>
      %cst_30 = arith.constant 0.000000e+00 : f32
      %36 = vector.broadcast %cst_30 : f32 to vector<16x512xf32>
      %37 = arith.maximumf %35, %36 : vector<16x512xf32>
      %38 = arith.truncf %37 : vector<16x512xf32> to vector<16x512xbf16>
      %c0_31 = arith.constant 0 : index
      %c0_32 = arith.constant 0 : index
      %39 = vector.load %arg10[%c0_31, %c0_32] : memref<512x128xbf16, #tpu.memory_space<vmem>>, vector<512x128xbf16>
      %cst_33 = arith.constant dense<0.000000e+00> : vector<16x128xf32>
      %40 = tpu.matmul %38, %39, %cst_33 {dimension_numbers = #tpu.dot_dimension_numbers<[1], [0], [0], [1], [0, 0, 1, 1], [], []>} : vector<16x512xbf16>, vector<512x128xbf16>, vector<16x128xf32> -> vector<16x128xf32>
      %c0_34 = arith.constant 0 : index
      %c0_35 = arith.constant 0 : index
      %41 = vector.load %arg11[%c0_34, %c0_35] : memref<1x128xf32, #tpu.memory_space<vmem>>, vector<1x128xf32>
      %42 = vector.broadcast %41 : vector<1x128xf32> to vector<16x128xf32>
      %43 = arith.addf %40, %42 : vector<16x128xf32>
      %44 = math.tanh %43 : vector<16x128xf32>
      %c0_36 = arith.constant 0 : index
      %c0_37 = arith.constant 0 : index
      %45 = vector.load %arg12[%c0_36, %c0_37] : memref<16x128xf32, #tpu.memory_space<vmem>>, vector<16x128xf32>
      tpu.vector_store %arg12[%c0_36, %c0_37], %44 {strides = array<i32>} : memref<16x128xf32, #tpu.memory_space<vmem>>, vector<16x128xf32>,
    } else {
    }
    return
  }
  func.func @transform_0(%arg0: i32) -> (i32, i32) {
    %c0_i32 = arith.constant 0 : i32
    %c0_i32_0 = arith.constant 0 : i32
    return %c0_i32, %arg0 : i32, i32
  }
  func.func @transform_1(%arg0: i32) -> (i32, i32) {
    %c0_i32 = arith.constant 0 : i32
    %c0_i32_0 = arith.constant 0 : i32
    return %arg0, %c0_i32 : i32, i32
  }
  func.func @transform_2(%arg0: i32) -> (i32, i32) {
    %c0_i32 = arith.constant 0 : i32
    %c0_i32_0 = arith.constant 0 : i32
    %c0_i32_1 = arith.constant 0 : i32
    return %c0_i32, %c0_i32_0 : i32, i32
  }
  func.func @transform_3(%arg0: i32) -> (i32, i32) {
    %c0_i32 = arith.constant 0 : i32
    %c0_i32_0 = arith.constant 0 : i32
    %c0_i32_1 = arith.constant 0 : i32
    return %c0_i32, %c0_i32_0 : i32, i32
  }
  func.func @transform_4(%arg0: i32) -> (i32, i32) {
    %c0_i32 = arith.constant 0 : i32
    %c0_i32_0 = arith.constant 0 : i32
    %c0_i32_1 = arith.constant 0 : i32
    return %c0_i32, %c0_i32_0 : i32, i32
  }
  func.func @transform_5(%arg0: i32) -> (i32, i32) {
    %c0_i32 = arith.constant 0 : i32
    %c0_i32_0 = arith.constant 0 : i32
    %c0_i32_1 = arith.constant 0 : i32
    return %c0_i32, %c0_i32_0 : i32, i32
  }
  func.func @transform_6(%arg0: i32) -> (i32, i32) {
    %c0_i32 = arith.constant 0 : i32
    %c0_i32_0 = arith.constant 0 : i32
    %c0_i32_1 = arith.constant 0 : i32
    return %c0_i32, %c0_i32_0 : i32, i32
  }
  func.func @transform_7(%arg0: i32) -> (i32, i32) {
    %c0_i32 = arith.constant 0 : i32
    %c0_i32_0 = arith.constant 0 : i32
    %c0_i32_1 = arith.constant 0 : i32
    return %c0_i32, %c0_i32_0 : i32, i32
  }
  func.func @transform_8(%arg0: i32) -> (i32, i32) {
    %c0_i32 = arith.constant 0 : i32
    %c0_i32_0 = arith.constant 0 : i32
    %c0_i32_1 = arith.constant 0 : i32
    return %c0_i32, %c0_i32_0 : i32, i32
  }
  func.func @transform_9(%arg0: i32) -> (i32, i32) {
    %c0_i32 = arith.constant 0 : i32
    %c0_i32_0 = arith.constant 0 : i32
    %c0_i32_1 = arith.constant 0 : i32
    return %c0_i32, %c0_i32_0 : i32, i32
  }
  func.func @transform_10(%arg0: i32) -> (i32, i32) {
    %c0_i32 = arith.constant 0 : i32
    %c0_i32_0 = arith.constant 0 : i32
    %c0_i32_1 = arith.constant 0 : i32
    return %c0_i32, %c0_i32_0 : i32, i32
  }
  func.func @transform_11(%arg0: i32) -> (i32, i32) {
    %c0_i32 = arith.constant 0 : i32
    %c0_i32_0 = arith.constant 0 : i32
    %c0_i32_1 = arith.constant 0 : i32
    return %c0_i32, %c0_i32_0 : i32, i32
  }
}

</mosaic_0001>

<llo_original>
// kernel: value_forward.4
$region0: #{value_forward.4}
  #allocation0 [shape = 'u32[]', space=smem, size = 0x4, offset = 0x4, fixed_abs, tag = 'smem constant byte address 0x4 - core index']
  #allocation1 [shape = 'u32[144,128]{1,0:T(1,128)}', space=vmem, size = 0x12000, scoped, tag = 'internal scratch']
  %s0 = inlined_call_operand.vmem [shape: bf16[640,560], index: 0, kind: input, shape index: {}]
  %s1 = inlined_call_operand.vmem [shape: bf16[560,32], index: 1, kind: input, shape index: {}]
  %s2 = inlined_call_operand.vmem [shape: f32[1,32], index: 2, kind: input, shape index: {}]
  %s3 = inlined_call_operand.vmem [shape: bf16[640,32], index: 3, kind: output, shape index: {}]
  %s4 = sld [smem:[#allocation0]]
  $region45: #{value_forward.4} parent=0
    _
  %s6 = ssub.s32 1, %s4
  %s7 = scalar_select 0, %s6, %s4
  loop: start=0, step=1, limit=7
  $region2: #{value_forward.4} parent=0 // loop_pre_header
    _
  $region3: #{value_forward.4} parent=0 // loop_header
    %s9 = sphi 0, %s13
    %p10 = scmp.ge.s32.totalorder %s9, 7
    %s19 = sphi 0, %s21
    %s22 = sphi 0, %s19
    %s23 = sphi 0, %s22
    %s39 = sphi 0, %s23
    %s43 = sphi 0, %s43
    %s45 = sphi 0, %s43
    %s46 = sphi 0, %s45
    %s60 = sphi 0, %s46
    %s64 = sphi 0, %s64
    %s66 = sphi 0, %s64
    %s67 = sphi 0, %s66
    %s81 = sphi 0, %s67
    %s87 = sphi 0, %s89
    %s90 = sphi 0, %s87
    %s91 = sphi 0, %s90
    %s107 = sphi 0, %s91
  $region4: #{value_forward.4} parent=0 // loop_header_branch
    %12 = sbr.rel (%p10) target = $region8
  $region5: #{value_forward.4} parent=0 // loop_body
    %s14 = ssub.s32 %s9, 1
    %s15 = ssub.s32 %s9, 2
    %s16 = sadd.s32 %s9, 1
    %s17 = ssub.s32 %s9, %s16
    %p18 = scmp.eq.s32.totalorder %s17, 0
    %s20 = sadd.s32 %s19, 1
    %s21 = scalar_select %p18, %s19, %s20
    %p24 = pneg %p18
    %p25 = scmp.eq.s32.totalorder %s9, 4
    %p26 = por %p24, %p25
    %p27 = scmp.ne.s32.totalorder %s19, %s22
    %p28 = scmp.eq.s32.totalorder %s9, 0
    %p29 = por %p27, %p28
    %p30 = scmp.ne.s32.totalorder %s19, %s22
    %p31 = scmp.eq.s32.totalorder %s14, 4
    %p32 = por %p30, %p31
    %p33 = scmp.ne.s32.totalorder %s22, %s23
    %p34 = scmp.eq.s32.totalorder %s14, 0
    %p35 = por %p33, %p34
    %p36 = scmp.ne.s32.totalorder %s22, %s23
    %p37 = scmp.eq.s32.totalorder %s15, 4
    %p38 = por %p36, %p37
    %p40 = scmp.ne.s32.totalorder %s23, %s39
    %p41 = scmp.eq.s32.totalorder %s15, 0
    %p42 = por %p40, %p41
    %s44 = sadd.s32 %s43, 1
    %p47 = scmp.eq.s32.totalorder %s9, 4
    %p48 = scmp.ne.s32.totalorder %s43, %s45
    %p49 = scmp.eq.s32.totalorder %s9, 0
    %p50 = por %p48, %p49
    %p51 = scmp.ne.s32.totalorder %s43, %s45
    %p52 = scmp.eq.s32.totalorder %s14, 4
    %p53 = por %p51, %p52
    %p54 = scmp.ne.s32.totalorder %s45, %s46
    %p55 = scmp.eq.s32.totalorder %s14, 0
    %p56 = por %p54, %p55
    %p57 = scmp.ne.s32.totalorder %s45, %s46
    %p58 = scmp.eq.s32.totalorder %s15, 4
    %p59 = por %p57, %p58
    %p61 = scmp.ne.s32.totalorder %s46, %s60
    %p62 = scmp.eq.s32.totalorder %s15, 0
    %p63 = por %p61, %p62
    %s65 = sadd.s32 %s64, 1
    %p68 = scmp.eq.s32.totalorder %s9, 4
    %p69 = scmp.ne.s32.totalorder %s64, %s66
    %p70 = scmp.eq.s32.totalorder %s9, 0
    %p71 = por %p69, %p70
    %p72 = scmp.ne.s32.totalorder %s64, %s66
    %p73 = scmp.eq.s32.totalorder %s14, 4
    %p74 = por %p72, %p73
    %p75 = scmp.ne.s32.totalorder %s66, %s67
    %p76 = scmp.eq.s32.totalorder %s14, 0
    %p77 = por %p75, %p76
    %p78 = scmp.ne.s32.totalorder %s66, %s67
    %p79 = scmp.eq.s32.totalorder %s15, 4
    %p80 = por %p78, %p79
    %p82 = scmp.ne.s32.totalorder %s67, %s81
    %p83 = scmp.eq.s32.totalorder %s15, 0
    %p84 = por %p82, %p83
    %s85 = ssub.s32 %s9, %s16
    %p86 = scmp.eq.s32.totalorder %s85, 0
    %s88 = sadd.s32 %s87, 1
    %s89 = scalar_select %p86, %s87, %s88
    %p92 = pneg %p86
    %p93 = scmp.eq.s32.totalorder %s9, 4
    %p94 = por %p92, %p93
    %p95 = scmp.ne.s32.totalorder %s87, %s90
    %p96 = scmp.eq.s32.totalorder %s9, 0
    %p97 = por %p95, %p96
    %p98 = scmp.ne.s32.totalorder %s87, %s90
    %p99 = scmp.eq.s32.totalorder %s14, 4
    %p100 = por %p98, %p99
    %p101 = scmp.ne.s32.totalorder %s90, %s91
    %p102 = scmp.eq.s32.totalorder %s14, 0
    %p103 = por %p101, %p102
    %p104 = scmp.ne.s32.totalorder %s90, %s91
    %p105 = scmp.eq.s32.totalorder %s15, 4
    %p106 = por %p104, %p105
    %p108 = scmp.ne.s32.totalorder %s91, %s107
    %p109 = scmp.eq.s32.totalorder %s15, 0
    %p110 = por %p108, %p109
    %p111 = scmp.le.s32.totalorder 1, %s9
    %p112 = scmp.lt.s32.totalorder %s9, 6
    %p113 = pnand %p111, %p112
    %p114 = pneg %p113
    // Predicated region
    $region9: #{value_forward.4} parent=5 // pred_check
      _
    $region10: #{value_forward.4} parent=5 // pred_check_branch
      %116 = sbr.rel (%p113) target = $region12
    $region11: #{value_forward.4} parent=5 // pred_region
      %s117 = ssub.s32 %s9, 1
      // Predicated region
      $region13: #{value_forward.4} parent=11 // pred_check
        %p118 = pneg %p56
      $region14: #{value_forward.4} parent=11 // pred_check_branch
        %120 = sbr.rel (%p118) target = $region16
      $region15: #{value_forward.4} parent=11 // pred_region
        _
      $region16: #{value_forward.4} parent=11 // pred_fallthru
        _
      // Predicated region
      $region17: #{value_forward.4} parent=11 // pred_check
        %p121 = pneg %p77
      $region18: #{value_forward.4} parent=11 // pred_check_branch
        %123 = sbr.rel (%p121) target = $region20
      $region19: #{value_forward.4} parent=11 // pred_region
        _
      $region20: #{value_forward.4} parent=11 // pred_fallthru
        _
    $region12: #{value_forward.4} parent=5 // pred_fallthru
      _
    %p124 = scmp.lt.s32.totalorder %s9, 5
    // Predicated region
    $region21: #{value_forward.4} parent=5 // pred_check
      %p125 = pneg %p124
    $region22: #{value_forward.4} parent=5 // pred_check_branch
      %127 = sbr.rel (%p125) target = $region24
    $region23: #{value_forward.4} parent=5 // pred_region
      // Predicated region
      $region25: #{value_forward.4} parent=23 // pred_check
        %p128 = pneg %p29
      $region26: #{value_forward.4} parent=23 // pred_check_branch
        %130 = sbr.rel (%p128) target = $region28
      $region27: #{value_forward.4} parent=23 // pred_region
        %s131 = smul.u32 16, %s9
        %p132 = scmp.lt.s32.totalorder %s131, 79
        %s133 = scalar_select %p132, %s131, 79
        %s134 = smul.addr %s133, 5
        %s135 = smul.addr %s134, 4
        %s136 = scalar_lea.vmem %s0, %s135
        %s137 = smul.u32 16, %s9
      $region28: #{value_forward.4} parent=23 // pred_fallthru
        _
    $region24: #{value_forward.4} parent=5 // pred_fallthru
      _
    %p138 = scmp.le.s32.totalorder 1, %s9
    %p139 = scmp.lt.s32.totalorder %s9, 6
    %p140 = pnand %p138, %p139
    %p141 = pneg %p140
    // Predicated region
    $region29: #{value_forward.4} parent=5 // pred_check
      _
    $region30: #{value_forward.4} parent=5 // pred_check_branch
      %143 = sbr.rel (%p140) target = $region32
    $region31: #{value_forward.4} parent=5 // pred_region
      %s144 = ssub.s32 %s9, 1
      %s145 = smul.u32 16, %s14
      %p146 = scmp.lt.s32.totalorder %s145, 79
      %s147 = scalar_select %p146, %s145, 79
      %s148 = smul.addr %s147, 5
      %s149 = smul.addr %s148, 4
      %s150 = scalar_lea.vmem %s0, %s149
      %p151 = pneg %p35
      %p152 = pneg %p32
      %p153 = pneg %p56
      %p154 = pneg %p53
      %p155 = pneg %p77
      %p156 = pneg %p74
      %p157 = pneg %p103
      %p158 = pneg %p100
      %s159 = smul.u32 16, %s14
      %p160 = scmp.lt.s32.totalorder %s159, 79
      %s161 = scalar_select %p160, %s159, 79
      %s162 = smul.addr %s161, 4
      %s163 = scalar_lea.vmem %s3, %s162
      %s164 = smul.u32 16, %s14
      %p165 = scmp.lt.s32.totalorder %s164, 79
      %s166 = scalar_select %p165, %s164, 79
      %s167 = smul.addr %s166, 5
      %s168 = smul.addr %s167, 4
      %s169 = scalar_lea.vmem %s0, %s168
      %s170 = smul.u32 16, %s14
      %s171 = smul.u32 16, %s14
      %p172 = scmp.lt.s32.totalorder %s171, 79
      %s173 = scalar_select %p172, %s171, 79
      %s174 = smul.addr %s173, 4
      %s175 = scalar_lea.vmem %s3, %s174
      %s176 = smul.u32 16, %s14
      %v178 = vld [vmem:[%s169] sm:$0xff]
      %v179 = vld [vmem:[%s169 + $0x8] sm:$0xff]
      %v180 = vld [vmem:[%s169 + $0x10] sm:$0xf]
      %v181 = vld [vmem:[%s169 + $0x14] sm:$0xff]
      %v182 = vld [vmem:[%s169 + $0x1c] sm:$0xff]
      %v183 = vld [vmem:[%s169 + $0x24] sm:$0xf]
      %v184 = vld [vmem:[%s169 + $0x28] sm:$0xff]
      %v185 = vld [vmem:[%s169 + $0x30] sm:$0xff]
      %v186 = vld [vmem:[%s169 + $0x38] sm:$0xf]
      %v187 = vld [vmem:[%s169 + $0x3c] sm:$0xff]
      %v188 = vld [vmem:[%s169 + $0x44] sm:$0xff]
      %v189 = vld [vmem:[%s169 + $0x4c] sm:$0xf]
      %v190 = vld [vmem:[%s169 + $0x50] sm:$0xff]
      %v191 = vld [vmem:[%s169 + $0x58] sm:$0xff]
      %v192 = vld [vmem:[%s169 + $0x60] sm:$0xf]
      %v193 = vld [vmem:[%s169 + $0x64] sm:$0xff]
      %v194 = vld [vmem:[%s169 + $0x6c] sm:$0xff]
      %v195 = vld [vmem:[%s169 + $0x74] sm:$0xf]
      %v196 = vld [vmem:[%s169 + $0x78] sm:$0xff]
      %v197 = vld [vmem:[%s169 + $0x80] sm:$0xff]
      %v198 = vld [vmem:[%s169 + $0x88] sm:$0xf]
      %v199 = vld [vmem:[%s169 + $0x8c] sm:$0xff]
      %v200 = vld [vmem:[%s169 + $0x94] sm:$0xff]
      %v201 = vld [vmem:[%s169 + $0x9c] sm:$0xf]
      %v202 = vld [vmem:[%s169 + $0xa0] sm:$0xff]
      %v203 = vld [vmem:[%s169 + $0xa8] sm:$0xff]
      %v204 = vld [vmem:[%s169 + $0xb0] sm:$0xf]
      %v205 = vld [vmem:[%s169 + $0xb4] sm:$0xff]
      %v206 = vld [vmem:[%s169 + $0xbc] sm:$0xff]
      %v207 = vld [vmem:[%s169 + $0xc4] sm:$0xf]
      %v208 = vld [vmem:[%s169 + $0xc8] sm:$0xff]
      %v209 = vld [vmem:[%s169 + $0xd0] sm:$0xff]
      %v210 = vld [vmem:[%s169 + $0xd8] sm:$0xf]
      %v211 = vld [vmem:[%s169 + $0xdc] sm:$0xff]
      %v212 = vld [vmem:[%s169 + $0xe4] sm:$0xff]
      %v213 = vld [vmem:[%s169 + $0xec] sm:$0xf]
      %v214 = vld [vmem:[%s169 + $0xf0] sm:$0xff]
      %v215 = vld [vmem:[%s169 + $0xf8] sm:$0xff]
      %v216 = vld [vmem:[%s169 + $0x100] sm:$0xf]
      %v217 = vld [vmem:[%s169 + $0x104] sm:$0xff]
      %v218 = vld [vmem:[%s169 + $0x10c] sm:$0xff]
      %v219 = vld [vmem:[%s169 + $0x114] sm:$0xf]
      %v220 = vld [vmem:[%s169 + $0x118] sm:$0xff]
      %v221 = vld [vmem:[%s169 + $0x120] sm:$0xff]
      %v222 = vld [vmem:[%s169 + $0x128] sm:$0xf]
      %v223 = vld [vmem:[%s169 + $0x12c] sm:$0xff]
      %v224 = vld [vmem:[%s169 + $0x134] sm:$0xff]
      %v225 = vld [vmem:[%s169 + $0x13c] sm:$0xf]
      %v226 = vld [vmem:[%s1] sm:$0xf]
      %v227 = vld [vmem:[%s1 + $0x4] sm:$0xf]
      %v228 = vld [vmem:[%s1 + $0x8] sm:$0xf]
      %v229 = vld [vmem:[%s1 + $0xc] sm:$0xf]
      %v230 = vld [vmem:[%s1 + $0x10] sm:$0xf]
      %v231 = vld [vmem:[%s1 + $0x14] sm:$0xf]
      %v232 = vld [vmem:[%s1 + $0x18] sm:$0xf]
      %v233 = vld [vmem:[%s1 + $0x1c] sm:$0xf]
      %v234 = vld [vmem:[%s1 + $0x20] sm:$0xf]
      %v235 = vld [vmem:[%s1 + $0x24] sm:$0xf]
      %v236 = vld [vmem:[%s1 + $0x28] sm:$0xf]
      %v237 = vld [vmem:[%s1 + $0x2c] sm:$0xf]
      %v238 = vld [vmem:[%s1 + $0x30] sm:$0xf]
      %v239 = vld [vmem:[%s1 + $0x34] sm:$0xf]
      %v240 = vld [vmem:[%s1 + $0x38] sm:$0xf]
      %v241 = vld [vmem:[%s1 + $0x3c] sm:$0xf]
      %v242 = vld [vmem:[%s1 + $0x40] sm:$0xf]
      %v243 = vld [vmem:[%s1 + $0x44] sm:$0xf]
      %v244 = vld [vmem:[%s1 + $0x48] sm:$0xf]
      %v245 = vld [vmem:[%s1 + $0x4c] sm:$0xf]
      %v246 = vld [vmem:[%s1 + $0x50] sm:$0xf]
      %v247 = vld [vmem:[%s1 + $0x54] sm:$0xf]
      %v248 = vld [vmem:[%s1 + $0x58] sm:$0xf]
      %v249 = vld [vmem:[%s1 + $0x5c] sm:$0xf]
      %v250 = vld [vmem:[%s1 + $0x60] sm:$0xf]
      %v251 = vld [vmem:[%s1 + $0x64] sm:$0xf]
      %v252 = vld [vmem:[%s1 + $0x68] sm:$0xf]
      %v253 = vld [vmem:[%s1 + $0x6c] sm:$0xf]
      %v254 = vld [vmem:[%s1 + $0x70] sm:$0xf]
      %v255 = vld [vmem:[%s1 + $0x74] sm:$0xf]
      %v256 = vld [vmem:[%s1 + $0x78] sm:$0xf]
      %v257 = vld [vmem:[%s1 + $0x7c] sm:$0xf]
      %v258 = vld [vmem:[%s1 + $0x80] sm:$0xf]
      %v259 = vld [vmem:[%s1 + $0x84] sm:$0xf]
      %v260 = vld [vmem:[%s1 + $0x88] sm:$0xf]
      %v261 = vld [vmem:[%s1 + $0x8c] sm:$0xf]
      %v262 = vld [vmem:[%s1 + $0x90] sm:$0xf]
      %v263 = vld [vmem:[%s1 + $0x94] sm:$0xf]
      %v264 = vld [vmem:[%s1 + $0x98] sm:$0xf]
      %v265 = vld [vmem:[%s1 + $0x9c] sm:$0xf]
      %v266 = vld [vmem:[%s1 + $0xa0] sm:$0xf]
      %v267 = vld [vmem:[%s1 + $0xa4] sm:$0xf]
      %v268 = vld [vmem:[%s1 + $0xa8] sm:$0xf]
      %v269 = vld [vmem:[%s1 + $0xac] sm:$0xf]
      %v270 = vld [vmem:[%s1 + $0xb0] sm:$0xf]
      %v271 = vld [vmem:[%s1 + $0xb4] sm:$0xf]
      %v272 = vld [vmem:[%s1 + $0xb8] sm:$0xf]
      %v273 = vld [vmem:[%s1 + $0xbc] sm:$0xf]
      %v274 = vld [vmem:[%s1 + $0xc0] sm:$0xf]
      %v275 = vld [vmem:[%s1 + $0xc4] sm:$0xf]
      %v276 = vld [vmem:[%s1 + $0xc8] sm:$0xf]
      %v277 = vld [vmem:[%s1 + $0xcc] sm:$0xf]
      %v278 = vld [vmem:[%s1 + $0xd0] sm:$0xf]
      %v279 = vld [vmem:[%s1 + $0xd4] sm:$0xf]
      %v280 = vld [vmem:[%s1 + $0xd8] sm:$0xf]
      %v281 = vld [vmem:[%s1 + $0xdc] sm:$0xf]
      %v282 = vld [vmem:[%s1 + $0xe0] sm:$0xf]
      %v283 = vld [vmem:[%s1 + $0xe4] sm:$0xf]
      %v284 = vld [vmem:[%s1 + $0xe8] sm:$0xf]
      %v285 = vld [vmem:[%s1 + $0xec] sm:$0xf]
      %v286 = vld [vmem:[%s1 + $0xf0] sm:$0xf]
      %v287 = vld [vmem:[%s1 + $0xf4] sm:$0xf]
      %v288 = vld [vmem:[%s1 + $0xf8] sm:$0xf]
      %v289 = vld [vmem:[%s1 + $0xfc] sm:$0xf]
      %v290 = vld [vmem:[%s1 + $0x100] sm:$0xf]
      %v291 = vld [vmem:[%s1 + $0x104] sm:$0xf]
      %v292 = vld [vmem:[%s1 + $0x108] sm:$0xf]
      %v293 = vld [vmem:[%s1 + $0x10c] sm:$0xf]
      %v294 = vld [vmem:[%s1 + $0x110] sm:$0xf]
      %v295 = vld [vmem:[%s1 + $0x114] sm:$0xf]
      %v296 = vld [vmem:[%s2] sm:$0x1]
      %v298 = vlaneseq
      %v299 = vshrl.u32 %v298, 7
      %v300 = vsub.s32 0, %v299
      %v301 = vrot.slane %v296, %v300
      %v351 = vunpack.c.l.b16 %v178
      %v352 = vunpack.c.h.b16 %v178
      %v353 = vunpack.c.l.b16 %v179
      %v354 = vunpack.c.h.b16 %v179
      %v355 = vunpack.c.l.b16 %v180
      %v356 = vunpack.c.l.b16 %v181
      %v357 = vunpack.c.h.b16 %v181
      %v358 = vunpack.c.l.b16 %v182
      %v359 = vunpack.c.h.b16 %v182
      %v360 = vunpack.c.l.b16 %v183
      %v361 = vunpack.c.l.b16 %v184
      %v362 = vunpack.c.h.b16 %v184
      %v363 = vunpack.c.l.b16 %v185
      %v364 = vunpack.c.h.b16 %v185
      %v365 = vunpack.c.l.b16 %v186
      %v366 = vunpack.c.l.b16 %v187
      %v367 = vunpack.c.h.b16 %v187
      %v368 = vunpack.c.l.b16 %v188
      %v369 = vunpack.c.h.b16 %v188
      %v370 = vunpack.c.l.b16 %v189
      %v371 = vunpack.c.l.b16 %v190
      %v372 = vunpack.c.h.b16 %v190
      %v373 = vunpack.c.l.b16 %v191
      %v374 = vunpack.c.h.b16 %v191
      %v375 = vunpack.c.l.b16 %v192
      %v376 = vunpack.c.l.b16 %v193
      %v377 = vunpack.c.h.b16 %v193
      %v378 = vunpack.c.l.b16 %v194
      %v379 = vunpack.c.h.b16 %v194
      %v380 = vunpack.c.l.b16 %v195
      %v381 = vunpack.c.l.b16 %v196
      %v382 = vunpack.c.h.b16 %v196
      %v383 = vunpack.c.l.b16 %v197
      %v384 = vunpack.c.h.b16 %v197
      %v385 = vunpack.c.l.b16 %v198
      %v386 = vunpack.c.l.b16 %v199
      %v387 = vunpack.c.h.b16 %v199
      %v388 = vunpack.c.l.b16 %v200
      %v389 = vunpack.c.h.b16 %v200
      %v390 = vunpack.c.l.b16 %v201
      %v391 = vunpack.c.l.b16 %v202
      %v392 = vunpack.c.h.b16 %v202
      %v393 = vunpack.c.l.b16 %v203
      %v394 = vunpack.c.h.b16 %v203
      %v395 = vunpack.c.l.b16 %v204
      %v396 = vunpack.c.l.b16 %v205
      %v397 = vunpack.c.h.b16 %v205
      %v398 = vunpack.c.l.b16 %v206
      %v399 = vunpack.c.h.b16 %v206
      %v400 = vunpack.c.l.b16 %v207
      %v401 = vunpack.c.l.b16 %v208
      %v402 = vunpack.c.h.b16 %v208
      %v403 = vunpack.c.l.b16 %v209
      %v404 = vunpack.c.h.b16 %v209
      %v405 = vunpack.c.l.b16 %v210
      %v406 = vunpack.c.l.b16 %v211
      %v407 = vunpack.c.h.b16 %v211
      %v408 = vunpack.c.l.b16 %v212
      %v409 = vunpack.c.h.b16 %v212
      %v410 = vunpack.c.l.b16 %v213
      %v411 = vunpack.c.l.b16 %v214
      %v412 = vunpack.c.h.b16 %v214
      %v413 = vunpack.c.l.b16 %v215
      %v414 = vunpack.c.h.b16 %v215
      %v415 = vunpack.c.l.b16 %v216
      %v416 = vunpack.c.l.b16 %v217
      %v417 = vunpack.c.h.b16 %v217
      %v418 = vunpack.c.l.b16 %v218
      %v419 = vunpack.c.h.b16 %v218
      %v420 = vunpack.c.l.b16 %v219
      %v421 = vunpack.c.l.b16 %v220
      %v422 = vunpack.c.h.b16 %v220
      %v423 = vunpack.c.l.b16 %v221
      %v424 = vunpack.c.h.b16 %v221
      %v425 = vunpack.c.l.b16 %v222
      %v426 = vunpack.c.l.b16 %v223
      %v427 = vunpack.c.h.b16 %v223
      %v428 = vunpack.c.l.b16 %v224
      %v429 = vunpack.c.h.b16 %v224
      %v430 = vunpack.c.l.b16 %v225
      %v431 = vpack.c.b16 %v356, %v351
      %v432 = vpack.c.b16 %v357, %v352
      %v433 = vpack.c.b16 %v358, %v353
      %v434 = vpack.c.b16 %v359, %v354
      %v435 = vpack.c.b16 %v360, %v355
      %v436 = vpack.c.b16 %v366, %v361
      %v437 = vpack.c.b16 %v367, %v362
      %v438 = vpack.c.b16 %v368, %v363
      %v439 = vpack.c.b16 %v369, %v364
      %v440 = vpack.c.b16 %v370, %v365
      %v441 = vpack.c.b16 %v376, %v371
      %v442 = vpack.c.b16 %v377, %v372
      %v443 = vpack.c.b16 %v378, %v373
      %v444 = vpack.c.b16 %v379, %v374
      %v445 = vpack.c.b16 %v380, %v375
      %v446 = vpack.c.b16 %v386, %v381
      %v447 = vpack.c.b16 %v387, %v382
      %v448 = vpack.c.b16 %v388, %v383
      %v449 = vpack.c.b16 %v389, %v384
      %v450 = vpack.c.b16 %v390, %v385
      %v451 = vpack.c.b16 %v396, %v391
      %v452 = vpack.c.b16 %v397, %v392
      %v453 = vpack.c.b16 %v398, %v393
      %v454 = vpack.c.b16 %v399, %v394
      %v455 = vpack.c.b16 %v400, %v395
      %v456 = vpack.c.b16 %v406, %v401
      %v457 = vpack.c.b16 %v407, %v402
      %v458 = vpack.c.b16 %v408, %v403
      %v459 = vpack.c.b16 %v409, %v404
      %v460 = vpack.c.b16 %v410, %v405
      %v461 = vpack.c.b16 %v416, %v411
      %v462 = vpack.c.b16 %v417, %v412
      %v463 = vpack.c.b16 %v418, %v413
      %v464 = vpack.c.b16 %v419, %v414
      %v465 = vpack.c.b16 %v420, %v415
      %v466 = vpack.c.b16 %v426, %v421
      %v467 = vpack.c.b16 %v427, %v422
      %v468 = vpack.c.b16 %v428, %v423
      %v469 = vpack.c.b16 %v429, %v424
      %v470 = vpack.c.b16 %v430, %v425
      %v573 = vunpack.c.l.b16 %v226
      %v574 = vunpack.c.l.b16 %v227
      %v575 = vunpack.c.l.b16 %v228
      %v576 = vunpack.c.l.b16 %v229
      %v577 = vunpack.c.l.b16 %v230
      %v578 = vunpack.c.l.b16 %v231
      %v579 = vunpack.c.l.b16 %v232
      %v580 = vunpack.c.l.b16 %v233
      %v581 = vunpack.c.l.b16 %v234
      %v582 = vunpack.c.l.b16 %v235
      %v583 = vunpack.c.l.b16 %v236
      %v584 = vunpack.c.l.b16 %v237
      %v585 = vunpack.c.l.b16 %v238
      %v586 = vunpack.c.l.b16 %v239
      %v587 = vunpack.c.l.b16 %v240
      %v588 = vunpack.c.l.b16 %v241
      %v589 = vunpack.c.l.b16 %v242
      %v590 = vunpack.c.l.b16 %v243
      %v591 = vunpack.c.l.b16 %v244
      %v592 = vunpack.c.l.b16 %v245
      %v593 = vunpack.c.l.b16 %v246
      %v594 = vunpack.c.l.b16 %v247
      %v595 = vunpack.c.l.b16 %v248
      %v596 = vunpack.c.l.b16 %v249
      %v597 = vunpack.c.l.b16 %v250
      %v598 = vunpack.c.l.b16 %v251
      %v599 = vunpack.c.l.b16 %v252
      %v600 = vunpack.c.l.b16 %v253
      %v601 = vunpack.c.l.b16 %v254
      %v602 = vunpack.c.l.b16 %v255
      %v603 = vunpack.c.l.b16 %v256
      %v604 = vunpack.c.l.b16 %v257
      %v605 = vunpack.c.l.b16 %v258
      %v606 = vunpack.c.l.b16 %v259
      %v607 = vunpack.c.l.b16 %v260
      %v608 = vunpack.c.l.b16 %v261
      %v609 = vunpack.c.l.b16 %v262
      %v610 = vunpack.c.l.b16 %v263
      %v611 = vunpack.c.l.b16 %v264
      %v612 = vunpack.c.l.b16 %v265
      %v613 = vunpack.c.l.b16 %v266
      %v614 = vunpack.c.l.b16 %v267
      %v615 = vunpack.c.l.b16 %v268
      %v616 = vunpack.c.l.b16 %v269
      %v617 = vunpack.c.l.b16 %v270
      %v618 = vunpack.c.l.b16 %v271
      %v619 = vunpack.c.l.b16 %v272
      %v620 = vunpack.c.l.b16 %v273
      %v621 = vunpack.c.l.b16 %v274
      %v622 = vunpack.c.l.b16 %v275
      %v623 = vunpack.c.l.b16 %v276
      %v624 = vunpack.c.l.b16 %v277
      %v625 = vunpack.c.l.b16 %v278
      %v626 = vunpack.c.l.b16 %v279
      %v627 = vunpack.c.l.b16 %v280
      %v628 = vunpack.c.l.b16 %v281
      %v629 = vunpack.c.l.b16 %v282
      %v630 = vunpack.c.l.b16 %v283
      %v631 = vunpack.c.l.b16 %v284
      %v632 = vunpack.c.l.b16 %v285
      %v633 = vunpack.c.l.b16 %v286
      %v634 = vunpack.c.l.b16 %v287
      %v635 = vunpack.c.l.b16 %v288
      %v636 = vunpack.c.l.b16 %v289
      %v637 = vunpack.c.l.b16 %v290
      %v638 = vunpack.c.l.b16 %v291
      %v639 = vunpack.c.l.b16 %v292
      %v640 = vunpack.c.l.b16 %v293
      %v641 = vunpack.c.l.b16 %v294
      %v642 = vunpack.c.l.b16 %v295
      %v643 = vpack.c.b16 %v574, %v573
      %v644 = vpack.c.b16 %v576, %v575
      %v645 = vpack.c.b16 %v578, %v577
      %v646 = vpack.c.b16 %v580, %v579
      %v647 = vpack.c.b16 %v582, %v581
      %v648 = vpack.c.b16 %v584, %v583
      %v649 = vpack.c.b16 %v586, %v585
      %v650 = vpack.c.b16 %v588, %v587
      %v651 = vpack.c.b16 %v590, %v589
      %v652 = vpack.c.b16 %v592, %v591
      %v653 = vpack.c.b16 %v594, %v593
      %v654 = vpack.c.b16 %v596, %v595
      %v655 = vpack.c.b16 %v598, %v597
      %v656 = vpack.c.b16 %v600, %v599
      %v657 = vpack.c.b16 %v602, %v601
      %v658 = vpack.c.b16 %v604, %v603
      %v659 = vpack.c.b16 %v606, %v605
      %v660 = vpack.c.b16 %v608, %v607
      %v661 = vpack.c.b16 %v610, %v609
      %v662 = vpack.c.b16 %v612, %v611
      %v663 = vpack.c.b16 %v614, %v613
      %v664 = vpack.c.b16 %v616, %v615
      %v665 = vpack.c.b16 %v618, %v617
      %v666 = vpack.c.b16 %v620, %v619
      %v667 = vpack.c.b16 %v622, %v621
      %v668 = vpack.c.b16 %v624, %v623
      %v669 = vpack.c.b16 %v626, %v625
      %v670 = vpack.c.b16 %v628, %v627
      %v671 = vpack.c.b16 %v630, %v629
      %v672 = vpack.c.b16 %v632, %v631
      %v673 = vpack.c.b16 %v634, %v633
      %v674 = vpack.c.b16 %v636, %v635
      %v675 = vpack.c.b16 %v638, %v637
      %v676 = vpack.c.b16 %v640, %v639
      %v677 = vpack.c.b16 %v642, %v641
      %vm713 = vcmask 392192
      %v715 = vsel %vm713, %v435, 0
      %v718 = vsel %vm713, %v440, 0
      %v721 = vsel %vm713, %v445, 0
      %v724 = vsel %vm713, %v450, 0
      %v727 = vsel %vm713, %v455, 0
      %v730 = vsel %vm713, %v460, 0
      %v733 = vsel %vm713, %v465, 0
      %v736 = vsel %vm713, %v470, 0
      %738 = vmatprep.subr.bf16.mxu0 0
      %739 = vmatpush1.bf16.msra.mxu0 %v643
      %740 = vmatprep.subr.bf16.mxu0 0
      %741 = vmatpush1.bf16.msra.mxu0 %v644
      %742 = vmatprep.subr.bf16.mxu0 0
      %743 = vmatpush1.bf16.msra.mxu0 %v645
      %744 = vmatprep.subr.bf16.mxu0 0
      %745 = vmatpush1.bf16.msra.mxu0 %v646
      %746 = vmatprep.subr.bf16.mxu0 0
      %747 = vmatpush1.bf16.msra.mxu0 %v647
      %748 = vmatprep.subr.bf16.mxu0 0
      %749 = vmatpush1.bf16.msra.mxu0 %v648
      %750 = vmatprep.subr.bf16.mxu0 0
      %751 = vmatpush1.bf16.msra.mxu0 %v649
      %752 = vmatprep.subr.bf16.mxu0 0
      %753 = vmatpush1.bf16.msra.mxu0 %v650
      %754 = vmatprep.subr.bf16.mxu0 0
      %755 = vmatpush1.bf16.msra.mxu0 %v651
      %756 = vmatprep.subr.bf16.mxu0 0
      %757 = vmatpush1.bf16.msra.mxu0 %v652
      %758 = vmatprep.subr.bf16.mxu0 0
      %759 = vmatpush1.bf16.msra.mxu0 %v653
      %760 = vmatprep.subr.bf16.mxu0 0
      %761 = vmatpush1.bf16.msra.mxu0 %v654
      %762 = vmatprep.subr.bf16.mxu0 0
      %763 = vmatpush1.bf16.msra.mxu0 %v655
      %764 = vmatprep.subr.bf16.mxu0 0
      %765 = vmatpush1.bf16.msra.mxu0 %v656
      %766 = vmatprep.subr.bf16.mxu0 0
      %767 = vmatpush1.bf16.msra.mxu0 %v657
      %768 = vmatprep.subr.bf16.mxu0 0
      %769 = vmatpush1.bf16.msra.mxu0 %v658
      %770 = vmatprep.mubr.bf16.mxu0 %v432
      %771 = vmatmul.mubr.bf16.gmra.mrb[0].mxu0 %v431
      %v772 = vpop.f32.mrb[0].mxu0
      %v773 = vadd.f32 %v301, %v772
      %v774 = vpop.f32.mrb[0].mxu0
      %v775 = vpop.f32.mrb[0].mxu0
      %v776 = vadd.f32 %v301, %v775
      %v777 = vpop.f32.mrb[0].mxu0
      %778 = vmatprep.mubr.bf16.mxu0 %v437
      %779 = vmatmul.mubr.bf16.gmra.mrb[0].mxu0 %v436
      %v780 = vpop.f32.mrb[0].mxu0
      %v781 = vadd.f32 %v301, %v780
      %v782 = vpop.f32.mrb[0].mxu0
      %v783 = vpop.f32.mrb[0].mxu0
      %v784 = vadd.f32 %v301, %v783
      %v785 = vpop.f32.mrb[0].mxu0
      %786 = vmatprep.mubr.bf16.mxu0 %v442
      %787 = vmatmul.mubr.bf16.gmra.mrb[0].mxu0 %v441
      %v788 = vpop.f32.mrb[0].mxu0
      %v789 = vadd.f32 %v301, %v788
      %v790 = vpop.f32.mrb[0].mxu0
      %v791 = vpop.f32.mrb[0].mxu0
      %v792 = vadd.f32 %v301, %v791
      %v793 = vpop.f32.mrb[0].mxu0
      %794 = vmatprep.mubr.bf16.mxu0 %v447
      %795 = vmatmul.mubr.bf16.gmra.mrb[0].mxu0 %v446
      %v796 = vpop.f32.mrb[0].mxu0
      %v797 = vadd.f32 %v301, %v796
      %v798 = vpop.f32.mrb[0].mxu0
      %v799 = vpop.f32.mrb[0].mxu0
      %v800 = vadd.f32 %v301, %v799
      %v801 = vpop.f32.mrb[0].mxu0
      %802 = vmatprep.mubr.bf16.mxu0 %v452
      %803 = vmatmul.mubr.bf16.gmra.mrb[0].mxu0 %v451
      %v804 = vpop.f32.mrb[0].mxu0
      %v805 = vadd.f32 %v301, %v804
      %v806 = vpop.f32.mrb[0].mxu0
      %v807 = vpop.f32.mrb[0].mxu0
      %v808 = vadd.f32 %v301, %v807
      %v809 = vpop.f32.mrb[0].mxu0
      %810 = vmatprep.mubr.bf16.mxu0 %v457
      %811 = vmatmul.mubr.bf16.gmra.mrb[0].mxu0 %v456
      %v812 = vpop.f32.mrb[0].mxu0
      %v813 = vadd.f32 %v301, %v812
      %v814 = vpop.f32.mrb[0].mxu0
      %v815 = vpop.f32.mrb[0].mxu0
      %v816 = vadd.f32 %v301, %v815
      %v817 = vpop.f32.mrb[0].mxu0
      %818 = vmatprep.mubr.bf16.mxu0 %v462
      %819 = vmatmul.mubr.bf16.gmra.mrb[0].mxu0 %v461
      %v820 = vpop.f32.mrb[0].mxu0
      %v821 = vadd.f32 %v301, %v820
      %v822 = vpop.f32.mrb[0].mxu0
      %v823 = vpop.f32.mrb[0].mxu0
      %v824 = vadd.f32 %v301, %v823
      %v825 = vpop.f32.mrb[0].mxu0
      %826 = vmatprep.mubr.bf16.mxu0 %v467
      %827 = vmatmul.mubr.bf16.gmra.mrb[0].mxu0 %v466
      %v828 = vpop.f32.mrb[0].mxu0
      %v829 = vadd.f32 %v301, %v828
      %v830 = vpop.f32.mrb[0].mxu0
      %v831 = vpop.f32.mrb[0].mxu0
      %v832 = vadd.f32 %v301, %v831
      %v833 = vpop.f32.mrb[0].mxu0
      %834 = vdwg.mxu0
      %835 = vmatprep.subr.bf16.mxu0 0
      %836 = vmatpush1.bf16.msra.mxu0 %v659
      %837 = vmatprep.subr.bf16.mxu0 0
      %838 = vmatpush1.bf16.msra.mxu0 %v660
      %839 = vmatprep.subr.bf16.mxu0 0
      %840 = vmatpush1.bf16.msra.mxu0 %v661
      %841 = vmatprep.subr.bf16.mxu0 0
      %842 = vmatpush1.bf16.msra.mxu0 %v662
      %843 = vmatprep.subr.bf16.mxu0 0
      %844 = vmatpush1.bf16.msra.mxu0 %v663
      %845 = vmatprep.subr.bf16.mxu0 0
      %846 = vmatpush1.bf16.msra.mxu0 %v664
      %847 = vmatprep.subr.bf16.mxu0 0
      %848 = vmatpush1.bf16.msra.mxu0 %v665
      %849 = vmatprep.subr.bf16.mxu0 0
      %850 = vmatpush1.bf16.msra.mxu0 %v666
      %851 = vmatprep.subr.bf16.mxu0 0
      %852 = vmatpush1.bf16.msra.mxu0 %v667
      %853 = vmatprep.subr.bf16.mxu0 0
      %854 = vmatpush1.bf16.msra.mxu0 %v668
      %855 = vmatprep.subr.bf16.mxu0 0
      %856 = vmatpush1.bf16.msra.mxu0 %v669
      %857 = vmatprep.subr.bf16.mxu0 0
      %858 = vmatpush1.bf16.msra.mxu0 %v670
      %859 = vmatprep.subr.bf16.mxu0 0
      %860 = vmatpush1.bf16.msra.mxu0 %v671
      %861 = vmatprep.subr.bf16.mxu0 0
      %862 = vmatpush1.bf16.msra.mxu0 %v672
      %863 = vmatprep.subr.bf16.mxu0 0
      %864 = vmatpush1.bf16.msra.mxu0 %v673
      %865 = vmatprep.subr.bf16.mxu0 0
      %866 = vmatpush1.bf16.msra.mxu0 %v674
      %867 = vmatprep.mubr.bf16.mxu0 %v434
      %868 = vmatmul.mubr.bf16.gmra.mrb[0].mxu0 %v433
      %v869 = vpop.f32.mrb[0].mxu0
      %v870 = vadd.f32 %v773, %v869
      %v871 = vpop.f32.mrb[0].mxu0
      %v872 = vpop.f32.mrb[0].mxu0
      %v873 = vadd.f32 %v776, %v872
      %v874 = vpop.f32.mrb[0].mxu0
      %875 = vmatprep.mubr.bf16.mxu0 %v439
      %876 = vmatmul.mubr.bf16.gmra.mrb[0].mxu0 %v438
      %v877 = vpop.f32.mrb[0].mxu0
      %v878 = vadd.f32 %v781, %v877
      %v879 = vpop.f32.mrb[0].mxu0
      %v880 = vpop.f32.mrb[0].mxu0
      %v881 = vadd.f32 %v784, %v880
      %v882 = vpop.f32.mrb[0].mxu0
      %883 = vmatprep.mubr.bf16.mxu0 %v444
      %884 = vmatmul.mubr.bf16.gmra.mrb[0].mxu0 %v443
      %v885 = vpop.f32.mrb[0].mxu0
      %v886 = vadd.f32 %v789, %v885
      %v887 = vpop.f32.mrb[0].mxu0
      %v888 = vpop.f32.mrb[0].mxu0
      %v889 = vadd.f32 %v792, %v888
      %v890 = vpop.f32.mrb[0].mxu0
      %891 = vmatprep.mubr.bf16.mxu0 %v449
      %892 = vmatmul.mubr.bf16.gmra.mrb[0].mxu0 %v448
      %v893 = vpop.f32.mrb[0].mxu0
      %v894 = vadd.f32 %v797, %v893
      %v895 = vpop.f32.mrb[0].mxu0
      %v896 = vpop.f32.mrb[0].mxu0
      %v897 = vadd.f32 %v800, %v896
      %v898 = vpop.f32.mrb[0].mxu0
      %899 = vmatprep.mubr.bf16.mxu0 %v454
      %900 = vmatmul.mubr.bf16.gmra.mrb[0].mxu0 %v453
      %v901 = vpop.f32.mrb[0].mxu0
      %v902 = vadd.f32 %v805, %v901
      %v903 = vpop.f32.mrb[0].mxu0
      %v904 = vpop.f32.mrb[0].mxu0
      %v905 = vadd.f32 %v808, %v904
      %v906 = vpop.f32.mrb[0].mxu0
      %907 = vmatprep.mubr.bf16.mxu0 %v459
      %908 = vmatmul.mubr.bf16.gmra.mrb[0].mxu0 %v458
      %v909 = vpop.f32.mrb[0].mxu0
      %v910 = vadd.f32 %v813, %v909
      %v911 = vpop.f32.mrb[0].mxu0
      %v912 = vpop.f32.mrb[0].mxu0
      %v913 = vadd.f32 %v816, %v912
      %v914 = vpop.f32.mrb[0].mxu0
      %915 = vmatprep.mubr.bf16.mxu0 %v464
      %916 = vmatmul.mubr.bf16.gmra.mrb[0].mxu0 %v463
      %v917 = vpop.f32.mrb[0].mxu0
      %v918 = vadd.f32 %v821, %v917
      %v919 = vpop.f32.mrb[0].mxu0
      %v920 = vpop.f32.mrb[0].mxu0
      %v921 = vadd.f32 %v824, %v920
      %v922 = vpop.f32.mrb[0].mxu0
      %923 = vmatprep.mubr.bf16.mxu0 %v469
      %924 = vmatmul.mubr.bf16.gmra.mrb[0].mxu0 %v468
      %v925 = vpop.f32.mrb[0].mxu0
      %v926 = vadd.f32 %v829, %v925
      %v927 = vpop.f32.mrb[0].mxu0
      %v928 = vpop.f32.mrb[0].mxu0
      %v929 = vadd.f32 %v832, %v928
      %v930 = vpop.f32.mrb[0].mxu0
      %931 = vdwg.mxu0
      %932 = vmatprep.subr.bf16.mxu0 0
      %933 = vmatpush1.bf16.msra.mxu0 %v675
      %934 = vmatprep.subr.bf16.mxu0 0
      %935 = vmatpush1.bf16.msra.mxu0 %v676
      %936 = vmatprep.subr.bf16.mxu0 0
      %937 = vmatpush1.bf16.msra.mxu0 %v677
      %938 = vmatprep.subr.bf16.mxu0 0
      %939 = vmatpush1.bf16.msra.mxu0 0
      %940 = vmatprep.subr.bf16.mxu0 0
      %941 = vmatpush1.bf16.msra.mxu0 0
      %942 = vmatprep.subr.bf16.mxu0 0
      %943 = vmatpush1.bf16.msra.mxu0 0
      %944 = vmatprep.subr.bf16.mxu0 0
      %945 = vmatpush1.bf16.msra.mxu0 0
      %946 = vmatprep.subr.bf16.mxu0 0
      %947 = vmatpush1.bf16.msra.mxu0 0
      %948 = vmatprep.subr.bf16.mxu0 0
      %949 = vmatpush1.bf16.msra.mxu0 0
      %950 = vmatprep.subr.bf16.mxu0 0
      %951 = vmatpush1.bf16.msra.mxu0 0
      %952 = vmatprep.subr.bf16.mxu0 0
      %953 = vmatpush1.bf16.msra.mxu0 0
      %954 = vmatprep.subr.bf16.mxu0 0
      %955 = vmatpush1.bf16.msra.mxu0 0
      %956 = vmatprep.subr.bf16.mxu0 0
      %957 = vmatpush1.bf16.msra.mxu0 0
      %958 = vmatprep.subr.bf16.mxu0 0
      %959 = vmatpush1.bf16.msra.mxu0 0
      %960 = vmatprep.subr.bf16.mxu0 0
      %961 = vmatpush1.bf16.msra.mxu0 0
      %962 = vmatprep.subr.bf16.mxu0 0
      %963 = vmatpush1.bf16.msra.mxu0 0
      %964 = vmatprep.mubr.bf16.mxu0 0
      %965 = vmatmul.mubr.bf16.gmra.mrb[0].mxu0 %v715
      %v966 = vpop.f32.mrb[0].mxu0
      %v967 = vadd.f32 %v870, %v966
      %v968 = vpop.f32.mrb[0].mxu0
      %v969 = vpop.f32.mrb[0].mxu0
      %v970 = vadd.f32 %v873, %v969
      %v971 = vpop.f32.mrb[0].mxu0
      %972 = vmatprep.mubr.bf16.mxu0 0
      %973 = vmatmul.mubr.bf16.gmra.mrb[0].mxu0 %v718
      %v974 = vpop.f32.mrb[0].mxu0
      %v975 = vadd.f32 %v878, %v974
      %v976 = vpop.f32.mrb[0].mxu0
      %v977 = vpop.f32.mrb[0].mxu0
      %v978 = vadd.f32 %v881, %v977
      %v979 = vpop.f32.mrb[0].mxu0
      %980 = vmatprep.mubr.bf16.mxu0 0
      %981 = vmatmul.mubr.bf16.gmra.mrb[0].mxu0 %v721
      %v982 = vpop.f32.mrb[0].mxu0
      %v983 = vadd.f32 %v886, %v982
      %v984 = vpop.f32.mrb[0].mxu0
      %v985 = vpop.f32.mrb[0].mxu0
      %v986 = vadd.f32 %v889, %v985
      %v987 = vpop.f32.mrb[0].mxu0
      %988 = vmatprep.mubr.bf16.mxu0 0
      %989 = vmatmul.mubr.bf16.gmra.mrb[0].mxu0 %v724
      %v990 = vpop.f32.mrb[0].mxu0
      %v991 = vadd.f32 %v894, %v990
      %v992 = vpop.f32.mrb[0].mxu0
      %v993 = vpop.f32.mrb[0].mxu0
      %v994 = vadd.f32 %v897, %v993
      %v995 = vpop.f32.mrb[0].mxu0
      %996 = vmatprep.mubr.bf16.mxu0 0
      %997 = vmatmul.mubr.bf16.gmra.mrb[0].mxu0 %v727
      %v998 = vpop.f32.mrb[0].mxu0
      %v999 = vadd.f32 %v902, %v998
      %v1000 = vpop.f32.mrb[0].mxu0
      %v1001 = vpop.f32.mrb[0].mxu0
      %v1002 = vadd.f32 %v905, %v1001
      %v1003 = vpop.f32.mrb[0].mxu0
      %1004 = vmatprep.mubr.bf16.mxu0 0
      %1005 = vmatmul.mubr.bf16.gmra.mrb[0].mxu0 %v730
      %v1006 = vpop.f32.mrb[0].mxu0
      %v1007 = vadd.f32 %v910, %v1006
      %v1008 = vpop.f32.mrb[0].mxu0
      %v1009 = vpop.f32.mrb[0].mxu0
      %v1010 = vadd.f32 %v913, %v1009
      %v1011 = vpop.f32.mrb[0].mxu0
      %1012 = vmatprep.mubr.bf16.mxu0 0
      %1013 = vmatmul.mubr.bf16.gmra.mrb[0].mxu0 %v733
      %v1014 = vpop.f32.mrb[0].mxu0
      %v1015 = vadd.f32 %v918, %v1014
      %v1016 = vpop.f32.mrb[0].mxu0
      %v1017 = vpop.f32.mrb[0].mxu0
      %v1018 = vadd.f32 %v921, %v1017
      %v1019 = vpop.f32.mrb[0].mxu0
      %1020 = vmatprep.mubr.bf16.mxu0 0
      %1021 = vmatmul.mubr.bf16.gmra.mrb[0].mxu0 %v736
      %v1022 = vpop.f32.mrb[0].mxu0
      %v1023 = vadd.f32 %v926, %v1022
      %v1024 = vpop.f32.mrb[0].mxu0
      %v1025 = vpop.f32.mrb[0].mxu0
      %v1026 = vadd.f32 %v929, %v1025
      %v1027 = vpop.f32.mrb[0].mxu0
      %1028 = vdwg.mxu0
      %v1029 = vmax.f32 %v967, 0.0
      %v1030 = vmax.f32 %v970, 0.0
      %v1031 = vmax.f32 %v975, 0.0
      %v1032 = vmax.f32 %v978, 0.0
      %v1033 = vmax.f32 %v983, 0.0
      %v1034 = vmax.f32 %v986, 0.0
      %v1035 = vmax.f32 %v991, 0.0
      %v1036 = vmax.f32 %v994, 0.0
      %v1037 = vmax.f32 %v999, 0.0
      %v1038 = vmax.f32 %v1002, 0.0
      %v1039 = vmax.f32 %v1007, 0.0
      %v1040 = vmax.f32 %v1010, 0.0
      %v1041 = vmax.f32 %v1015, 0.0
      %v1042 = vmax.f32 %v1018, 0.0
      %v1043 = vmax.f32 %v1023, 0.0
      %v1044 = vmax.f32 %v1026, 0.0
      %v1045 = vpack.c.bf16 %v1030, %v1029
      %v1046 = vpack.c.bf16 %v1032, %v1031
      %v1047 = vpack.c.bf16 %v1034, %v1033
      %v1048 = vpack.c.bf16 %v1036, %v1035
      %v1049 = vpack.c.bf16 %v1038, %v1037
      %v1050 = vpack.c.bf16 %v1040, %v1039
      %v1051 = vpack.c.bf16 %v1042, %v1041
      %v1052 = vpack.c.bf16 %v1044, %v1043
      %v1061 = vunpack.c.l.b16 %v1045
      %v1062 = vunpack.c.h.b16 %v1045
      %v1063 = vunpack.c.l.b16 %v1046
      %v1064 = vunpack.c.h.b16 %v1046
      %v1065 = vunpack.c.l.b16 %v1047
      %v1066 = vunpack.c.h.b16 %v1047
      %v1067 = vunpack.c.l.b16 %v1048
      %v1068 = vunpack.c.h.b16 %v1048
      %v1069 = vunpack.c.l.b16 %v1049
      %v1070 = vunpack.c.h.b16 %v1049
      %v1071 = vunpack.c.l.b16 %v1050
      %v1072 = vunpack.c.h.b16 %v1050
      %v1073 = vunpack.c.l.b16 %v1051
      %v1074 = vunpack.c.h.b16 %v1051
      %v1075 = vunpack.c.l.b16 %v1052
      %v1076 = vunpack.c.h.b16 %v1052
      %v1077 = vpack.c.b16 %v1061, %v1061
      %v1078 = vpack.c.b16 %v1062, %v1062
      %v1079 = vpack.c.b16 %v1063, %v1063
      %v1080 = vpack.c.b16 %v1064, %v1064
      %v1081 = vpack.c.b16 %v1065, %v1065
      %v1082 = vpack.c.b16 %v1066, %v1066
      %v1083 = vpack.c.b16 %v1067, %v1067
      %v1084 = vpack.c.b16 %v1068, %v1068
      %v1085 = vpack.c.b16 %v1069, %v1069
      %v1086 = vpack.c.b16 %v1070, %v1070
      %v1087 = vpack.c.b16 %v1071, %v1071
      %v1088 = vpack.c.b16 %v1072, %v1072
      %v1089 = vpack.c.b16 %v1073, %v1073
      %v1090 = vpack.c.b16 %v1074, %v1074
      %v1091 = vpack.c.b16 %v1075, %v1075
      %v1092 = vpack.c.b16 %v1076, %v1076
      %vm1109 = vcmask 257024
      %1110 = vst.msk [vmem:[%s175] sm:$0xf] %vm1109, %v1077
      %1111 = vst.msk [vmem:[%s175 + $0x4] sm:$0xf] %vm1109, %v1078
      %1112 = vst.msk [vmem:[%s175 + $0x8] sm:$0xf] %vm1109, %v1079
      %1113 = vst.msk [vmem:[%s175 + $0xc] sm:$0xf] %vm1109, %v1080
      %1114 = vst.msk [vmem:[%s175 + $0x10] sm:$0xf] %vm1109, %v1081
      %1115 = vst.msk [vmem:[%s175 + $0x14] sm:$0xf] %vm1109, %v1082
      %1116 = vst.msk [vmem:[%s175 + $0x18] sm:$0xf] %vm1109, %v1083
      %1117 = vst.msk [vmem:[%s175 + $0x1c] sm:$0xf] %vm1109, %v1084
      %1118 = vst.msk [vmem:[%s175 + $0x20] sm:$0xf] %vm1109, %v1085
      %1119 = vst.msk [vmem:[%s175 + $0x24] sm:$0xf] %vm1109, %v1086
      %1120 = vst.msk [vmem:[%s175 + $0x28] sm:$0xf] %vm1109, %v1087
      %1121 = vst.msk [vmem:[%s175 + $0x2c] sm:$0xf] %vm1109, %v1088
      %1122 = vst.msk [vmem:[%s175 + $0x30] sm:$0xf] %vm1109, %v1089
      %1123 = vst.msk [vmem:[%s175 + $0x34] sm:$0xf] %vm1109, %v1090
      %1124 = vst.msk [vmem:[%s175 + $0x38] sm:$0xf] %vm1109, %v1091
      %1125 = vst.msk [vmem:[%s175 + $0x3c] sm:$0xf] %vm1109, %v1092
      %s1126 = smul.u32 16, %s14
      %p1127 = scmp.lt.s32.totalorder %s1126, 79
      %s1128 = scalar_select %p1127, %s1126, 79
      %s1129 = smul.addr %s1128, 4
      %s1130 = scalar_lea.vmem %s3, %s1129
      // Predicated region
      $region33: #{value_forward.4} parent=31 // pred_check
        %p1131 = pneg %p100
      $region34: #{value_forward.4} parent=31 // pred_check_branch
        %1133 = sbr.rel (%p1131) target = $region36
      $region35: #{value_forward.4} parent=31 // pred_region
        %s1134 = smul.u32 16, %s14
      $region36: #{value_forward.4} parent=31 // pred_fallthru
        _
    $region32: #{value_forward.4} parent=5 // pred_fallthru
      _
    %p1135 = scmp.le.s32.totalorder 2, %s9
    // Predicated region
    $region37: #{value_forward.4} parent=5 // pred_check
      %p1136 = pneg %p1135
    $region38: #{value_forward.4} parent=5 // pred_check_branch
      %1138 = sbr.rel (%p1136) target = $region40
    $region39: #{value_forward.4} parent=5 // pred_region
      %s1139 = ssub.s32 %s9, 2
      // Predicated region
      $region41: #{value_forward.4} parent=39 // pred_check
        %p1140 = pneg %p106
      $region42: #{value_forward.4} parent=39 // pred_check_branch
        %1142 = sbr.rel (%p1140) target = $region44
      $region43: #{value_forward.4} parent=39 // pred_region
        %s1143 = smul.u32 16, %s15
        %p1144 = scmp.lt.s32.totalorder %s1143, 79
        %s1145 = scalar_select %p1144, %s1143, 79
        %s1146 = smul.addr %s1145, 4
        %s1147 = scalar_lea.vmem %s3, %s1146
      $region44: #{value_forward.4} parent=39 // pred_fallthru
        _
    $region40: #{value_forward.4} parent=5 // pred_fallthru
      _
  $region6: #{value_forward.4} parent=0 // loop_footer
    %s13 = sadd.s32 1, %s9
  $region7: #{value_forward.4} parent=0 // loop_footer_branch
    %8 = sbr.rel target = $region3
  $region8: #{value_forward.4} parent=0 // loop_exit
    _

// kernel: value_forward.5
$region0: #{value_forward.5}
  #allocation0 [shape = 'u32[]', space=smem, size = 0x4, offset = 0x4, fixed_abs, tag = 'smem constant byte address 0x4 - core index']
  #allocation1 [shape = 'u32[144,128]{1,0:T(1,128)}', space=vmem, size = 0x12000, scoped, tag = 'internal scratch']
  %s0 = inlined_call_operand.vmem [shape: bf16[256,512], index: 0, kind: input, shape index: {}]
  %s1 = inlined_call_operand.vmem [shape: bf16[512,64], index: 1, kind: input, shape index: {}]
  %s2 = inlined_call_operand.vmem [shape: f32[1,64], index: 2, kind: input, shape index: {}]
  %s3 = inlined_call_operand.vmem [shape: bf16[256,64], index: 3, kind: output, shape index: {}]
  %s4 = sld [smem:[#allocation0]]
  $region45: #{value_forward.5} parent=0
    _
  %s6 = ssub.s32 1, %s4
  %s7 = scalar_select 0, %s6, %s4
  loop: start=0, step=1, limit=4
  $region2: #{value_forward.5} parent=0 // loop_pre_header
    _
  $region3: #{value_forward.5} parent=0 // loop_header
    %s9 = sphi 0, %s13
    %p10 = scmp.ge.s32.totalorder %s9, 4
    %s19 = sphi 0, %s21
    %s22 = sphi 0, %s19
    %s23 = sphi 0, %s22
    %s39 = sphi 0, %s23
    %s43 = sphi 0, %s43
    %s45 = sphi 0, %s43
    %s46 = sphi 0, %s45
    %s60 = sphi 0, %s46
    %s64 = sphi 0, %s64
    %s66 = sphi 0, %s64
    %s67 = sphi 0, %s66
    %s81 = sphi 0, %s67
    %s87 = sphi 0, %s89
    %s90 = sphi 0, %s87
    %s91 = sphi 0, %s90
    %s107 = sphi 0, %s91
  $region4: #{value_forward.5} parent=0 // loop_header_branch
    %12 = sbr.rel (%p10) target = $region8
  $region5: #{value_forward.5} parent=0 // loop_body
    %s14 = ssub.s32 %s9, 1
    %s15 = ssub.s32 %s9, 2
    %s16 = sadd.s32 %s9, 1
    %s17 = ssub.s32 %s9, %s16
    %p18 = scmp.eq.s32.totalorder %s17, 0
    %s20 = sadd.s32 %s19, 1
    %s21 = scalar_select %p18, %s19, %s20
    %p24 = pneg %p18
    %p25 = scmp.eq.s32.totalorder %s9, 1
    %p26 = por %p24, %p25
    %p27 = scmp.ne.s32.totalorder %s19, %s22
    %p28 = scmp.eq.s32.totalorder %s9, 0
    %p29 = por %p27, %p28
    %p30 = scmp.ne.s32.totalorder %s19, %s22
    %p31 = scmp.eq.s32.totalorder %s14, 1
    %p32 = por %p30, %p31
    %p33 = scmp.ne.s32.totalorder %s22, %s23
    %p34 = scmp.eq.s32.totalorder %s14, 0
    %p35 = por %p33, %p34
    %p36 = scmp.ne.s32.totalorder %s22, %s23
    %p37 = scmp.eq.s32.totalorder %s15, 1
    %p38 = por %p36, %p37
    %p40 = scmp.ne.s32.totalorder %s23, %s39
    %p41 = scmp.eq.s32.totalorder %s15, 0
    %p42 = por %p40, %p41
    %s44 = sadd.s32 %s43, 1
    %p47 = scmp.eq.s32.totalorder %s9, 1
    %p48 = scmp.ne.s32.totalorder %s43, %s45
    %p49 = scmp.eq.s32.totalorder %s9, 0
    %p50 = por %p48, %p49
    %p51 = scmp.ne.s32.totalorder %s43, %s45
    %p52 = scmp.eq.s32.totalorder %s14, 1
    %p53 = por %p51, %p52
    %p54 = scmp.ne.s32.totalorder %s45, %s46
    %p55 = scmp.eq.s32.totalorder %s14, 0
    %p56 = por %p54, %p55
    %p57 = scmp.ne.s32.totalorder %s45, %s46
    %p58 = scmp.eq.s32.totalorder %s15, 1
    %p59 = por %p57, %p58
    %p61 = scmp.ne.s32.totalorder %s46, %s60
    %p62 = scmp.eq.s32.totalorder %s15, 0
    %p63 = por %p61, %p62
    %s65 = sadd.s32 %s64, 1
    %p68 = scmp.eq.s32.totalorder %s9, 1
    %p69 = scmp.ne.s32.totalorder %s64, %s66
    %p70 = scmp.eq.s32.totalorder %s9, 0
    %p71 = por %p69, %p70
    %p72 = scmp.ne.s32.totalorder %s64, %s66
    %p73 = scmp.eq.s32.totalorder %s14, 1
    %p74 = por %p72, %p73
    %p75 = scmp.ne.s32.totalorder %s66, %s67
    %p76 = scmp.eq.s32.totalorder %s14, 0
    %p77 = por %p75, %p76
    %p78 = scmp.ne.s32.totalorder %s66, %s67
    %p79 = scmp.eq.s32.totalorder %s15, 1
    %p80 = por %p78, %p79
    %p82 = scmp.ne.s32.totalorder %s67, %s81
    %p83 = scmp.eq.s32.totalorder %s15, 0
    %p84 = por %p82, %p83
    %s85 = ssub.s32 %s9, %s16
    %p86 = scmp.eq.s32.totalorder %s85, 0
    %s88 = sadd.s32 %s87, 1
    %s89 = scalar_select %p86, %s87, %s88
    %p92 = pneg %p86
    %p93 = scmp.eq.s32.totalorder %s9, 1
    %p94 = por %p92, %p93
    %p95 = scmp.ne.s32.totalorder %s87, %s90
    %p96 = scmp.eq.s32.totalorder %s9, 0
    %p97 = por %p95, %p96
    %p98 = scmp.ne.s32.totalorder %s87, %s90
    %p99 = scmp.eq.s32.totalorder %s14, 1
    %p100 = por %p98, %p99
    %p101 = scmp.ne.s32.totalorder %s90, %s91
    %p102 = scmp.eq.s32.totalorder %s14, 0
    %p103 = por %p101, %p102
    %p104 = scmp.ne.s32.totalorder %s90, %s91
    %p105 = scmp.eq.s32.totalorder %s15, 1
    %p106 = por %p104, %p105
    %p108 = scmp.ne.s32.totalorder %s91, %s107
    %p109 = scmp.eq.s32.totalorder %s15, 0
    %p110 = por %p108, %p109
    %p111 = scmp.le.s32.totalorder 1, %s9
    %p112 = scmp.lt.s32.totalorder %s9, 3
    %p113 = pnand %p111, %p112
    %p114 = pneg %p113
    // Predicated region
    $region9: #{value_forward.5} parent=5 // pred_check
      _
    $region10: #{value_forward.5} parent=5 // pred_check_branch
      %116 = sbr.rel (%p113) target = $region12
    $region11: #{value_forward.5} parent=5 // pred_region
      %s117 = ssub.s32 %s9, 1
      // Predicated region
      $region13: #{value_forward.5} parent=11 // pred_check
        %p118 = pneg %p56
      $region14: #{value_forward.5} parent=11 // pred_check_branch
        %120 = sbr.rel (%p118) target = $region16
      $region15: #{value_forward.5} parent=11 // pred_region
        _
      $region16: #{value_forward.5} parent=11 // pred_fallthru
        _
      // Predicated region
      $region17: #{value_forward.5} parent=11 // pred_check
        %p121 = pneg %p77
      $region18: #{value_forward.5} parent=11 // pred_check_branch
        %123 = sbr.rel (%p121) target = $region20
      $region19: #{value_forward.5} parent=11 // pred_region
        _
      $region20: #{value_forward.5} parent=11 // pred_fallthru
        _
    $region12: #{value_forward.5} parent=5 // pred_fallthru
      _
    %p124 = scmp.lt.s32.totalorder %s9, 2
    // Predicated region
    $region21: #{value_forward.5} parent=5 // pred_check
      %p125 = pneg %p124
    $region22: #{value_forward.5} parent=5 // pred_check_branch
      %127 = sbr.rel (%p125) target = $region24
    $region23: #{value_forward.5} parent=5 // pred_region
      // Predicated region
      $region25: #{value_forward.5} parent=23 // pred_check
        %p128 = pneg %p29
      $region26: #{value_forward.5} parent=23 // pred_check_branch
        %130 = sbr.rel (%p128) target = $region28
      $region27: #{value_forward.5} parent=23 // pred_region
        %s131 = smul.u32 16, %s9
        %p132 = scmp.lt.s32.totalorder %s131, 31
        %s133 = scalar_select %p132, %s131, 31
        %s134 = smul.addr %s133, 4
        %s135 = smul.addr %s134, 4
        %s136 = scalar_lea.vmem %s0, %s135
        %s137 = smul.u32 16, %s9
      $region28: #{value_forward.5} parent=23 // pred_fallthru
        _
    $region24: #{value_forward.5} parent=5 // pred_fallthru
      _
    %p138 = scmp.le.s32.totalorder 1, %s9
    %p139 = scmp.lt.s32.totalorder %s9, 3
    %p140 = pnand %p138, %p139
    %p141 = pneg %p140
    // Predicated region
    $region29: #{value_forward.5} parent=5 // pred_check
      _
    $region30: #{value_forward.5} parent=5 // pred_check_branch
      %143 = sbr.rel (%p140) target = $region32
    $region31: #{value_forward.5} parent=5 // pred_region
      %s144 = ssub.s32 %s9, 1
      %s145 = smul.u32 16, %s14
      %p146 = scmp.lt.s32.totalorder %s145, 31
      %s147 = scalar_select %p146, %s145, 31
      %s148 = smul.addr %s147, 4
      %s149 = smul.addr %s148, 4
      %s150 = scalar_lea.vmem %s0, %s149
      %p151 = pneg %p35
      %p152 = pneg %p32
      %p153 = pneg %p56
      %p154 = pneg %p53
      %p155 = pneg %p77
      %p156 = pneg %p74
      %p157 = pneg %p103
      %p158 = pneg %p100
      %s159 = smul.u32 16, %s14
      %p160 = scmp.lt.s32.totalorder %s159, 31
      %s161 = scalar_select %p160, %s159, 31
      %s162 = smul.addr %s161, 4
      %s163 = scalar_lea.vmem %s3, %s162
      %s164 = smul.u32 16, %s14
      %p165 = scmp.lt.s32.totalorder %s164, 31
      %s166 = scalar_select %p165, %s164, 31
      %s167 = smul.addr %s166, 4
      %s168 = smul.addr %s167, 4
      %s169 = scalar_lea.vmem %s0, %s168
      %s170 = smul.u32 16, %s14
      %s171 = smul.u32 16, %s14
      %p172 = scmp.lt.s32.totalorder %s171, 31
      %s173 = scalar_select %p172, %s171, 31
      %s174 = smul.addr %s173, 4
      %s175 = scalar_lea.vmem %s3, %s174
      %s176 = smul.u32 16, %s14
      %v178 = vld [vmem:[%s169] sm:$0xff]
      %v179 = vld [vmem:[%s169 + $0x8] sm:$0xff]
      %v180 = vld [vmem:[%s169 + $0x10] sm:$0xff]
      %v181 = vld [vmem:[%s169 + $0x18] sm:$0xff]
      %v182 = vld [vmem:[%s169 + $0x20] sm:$0xff]
      %v183 = vld [vmem:[%s169 + $0x28] sm:$0xff]
      %v184 = vld [vmem:[%s169 + $0x30] sm:$0xff]
      %v185 = vld [vmem:[%s169 + $0x38] sm:$0xff]
      %v186 = vld [vmem:[%s169 + $0x40] sm:$0xff]
      %v187 = vld [vmem:[%s169 + $0x48] sm:$0xff]
      %v188 = vld [vmem:[%s169 + $0x50] sm:$0xff]
      %v189 = vld [vmem:[%s169 + $0x58] sm:$0xff]
      %v190 = vld [vmem:[%s169 + $0x60] sm:$0xff]
      %v191 = vld [vmem:[%s169 + $0x68] sm:$0xff]
      %v192 = vld [vmem:[%s169 + $0x70] sm:$0xff]
      %v193 = vld [vmem:[%s169 + $0x78] sm:$0xff]
      %v194 = vld [vmem:[%s169 + $0x80] sm:$0xff]
      %v195 = vld [vmem:[%s169 + $0x88] sm:$0xff]
      %v196 = vld [vmem:[%s169 + $0x90] sm:$0xff]
      %v197 = vld [vmem:[%s169 + $0x98] sm:$0xff]
      %v198 = vld [vmem:[%s169 + $0xa0] sm:$0xff]
      %v199 = vld [vmem:[%s169 + $0xa8] sm:$0xff]
      %v200 = vld [vmem:[%s169 + $0xb0] sm:$0xff]
      %v201 = vld [vmem:[%s169 + $0xb8] sm:$0xff]
      %v202 = vld [vmem:[%s169 + $0xc0] sm:$0xff]
      %v203 = vld [vmem:[%s169 + $0xc8] sm:$0xff]
      %v204 = vld [vmem:[%s169 + $0xd0] sm:$0xff]
      %v205 = vld [vmem:[%s169 + $0xd8] sm:$0xff]
      %v206 = vld [vmem:[%s169 + $0xe0] sm:$0xff]
      %v207 = vld [vmem:[%s169 + $0xe8] sm:$0xff]
      %v208 = vld [vmem:[%s169 + $0xf0] sm:$0xff]
      %v209 = vld [vmem:[%s169 + $0xf8] sm:$0xff]
      %v210 = vld [vmem:[%s1] sm:$0xf]
      %v211 = vld [vmem:[%s1 + $0x4] sm:$0xf]
      %v212 = vld [vmem:[%s1 + $0x8] sm:$0xf]
      %v213 = vld [vmem:[%s1 + $0xc] sm:$0xf]
      %v214 = vld [vmem:[%s1 + $0x10] sm:$0xf]
      %v215 = vld [vmem:[%s1 + $0x14] sm:$0xf]
      %v216 = vld [vmem:[%s1 + $0x18] sm:$0xf]
      %v217 = vld [vmem:[%s1 + $0x1c] sm:$0xf]
      %v218 = vld [vmem:[%s1 + $0x20] sm:$0xf]
      %v219 = vld [vmem:[%s1 + $0x24] sm:$0xf]
      %v220 = vld [vmem:[%s1 + $0x28] sm:$0xf]
      %v221 = vld [vmem:[%s1 + $0x2c] sm:$0xf]
      %v222 = vld [vmem:[%s1 + $0x30] sm:$0xf]
      %v223 = vld [vmem:[%s1 + $0x34] sm:$0xf]
      %v224 = vld [vmem:[%s1 + $0x38] sm:$0xf]
      %v225 = vld [vmem:[%s1 + $0x3c] sm:$0xf]
      %v226 = vld [vmem:[%s1 + $0x40] sm:$0xf]
      %v227 = vld [vmem:[%s1 + $0x44] sm:$0xf]
      %v228 = vld [vmem:[%s1 + $0x48] sm:$0xf]
      %v229 = vld [vmem:[%s1 + $0x4c] sm:$0xf]
      %v230 = vld [vmem:[%s1 + $0x50] sm:$0xf]
      %v231 = vld [vmem:[%s1 + $0x54] sm:$0xf]
      %v232 = vld [vmem:[%s1 + $0x58] sm:$0xf]
      %v233 = vld [vmem:[%s1 + $0x5c] sm:$0xf]
      %v234 = vld [vmem:[%s1 + $0x60] sm:$0xf]
      %v235 = vld [vmem:[%s1 + $0x64] sm:$0xf]
      %v236 = vld [vmem:[%s1 + $0x68] sm:$0xf]
      %v237 = vld [vmem:[%s1 + $0x6c] sm:$0xf]
      %v238 = vld [vmem:[%s1 + $0x70] sm:$0xf]
      %v239 = vld [vmem:[%s1 + $0x74] sm:$0xf]
      %v240 = vld [vmem:[%s1 + $0x78] sm:$0xf]
      %v241 = vld [vmem:[%s1 + $0x7c] sm:$0xf]
      %v242 = vld [vmem:[%s1 + $0x80] sm:$0xf]
      %v243 = vld [vmem:[%s1 + $0x84] sm:$0xf]
      %v244 = vld [vmem:[%s1 + $0x88] sm:$0xf]
      %v245 = vld [vmem:[%s1 + $0x8c] sm:$0xf]
      %v246 = vld [vmem:[%s1 + $0x90] sm:$0xf]
      %v247 = vld [vmem:[%s1 + $0x94] sm:$0xf]
      %v248 = vld [vmem:[%s1 + $0x98] sm:$0xf]
      %v249 = vld [vmem:[%s1 + $0x9c] sm:$0xf]
      %v250 = vld [vmem:[%s1 + $0xa0] sm:$0xf]
      %v251 = vld [vmem:[%s1 + $0xa4] sm:$0xf]
      %v252 = vld [vmem:[%s1 + $0xa8] sm:$0xf]
      %v253 = vld [vmem:[%s1 + $0xac] sm:$0xf]
      %v254 = vld [vmem:[%s1 + $0xb0] sm:$0xf]
      %v255 = vld [vmem:[%s1 + $0xb4] sm:$0xf]
      %v256 = vld [vmem:[%s1 + $0xb8] sm:$0xf]
      %v257 = vld [vmem:[%s1 + $0xbc] sm:$0xf]
      %v258 = vld [vmem:[%s1 + $0xc0] sm:$0xf]
      %v259 = vld [vmem:[%s1 + $0xc4] sm:$0xf]
      %v260 = vld [vmem:[%s1 + $0xc8] sm:$0xf]
      %v261 = vld [vmem:[%s1 + $0xcc] sm:$0xf]
      %v262 = vld [vmem:[%s1 + $0xd0] sm:$0xf]
      %v263 = vld [vmem:[%s1 + $0xd4] sm:$0xf]
      %v264 = vld [vmem:[%s1 + $0xd8] sm:$0xf]
      %v265 = vld [vmem:[%s1 + $0xdc] sm:$0xf]
      %v266 = vld [vmem:[%s1 + $0xe0] sm:$0xf]
      %v267 = vld [vmem:[%s1 + $0xe4] sm:$0xf]
      %v268 = vld [vmem:[%s1 + $0xe8] sm:$0xf]
      %v269 = vld [vmem:[%s1 + $0xec] sm:$0xf]
      %v270 = vld [vmem:[%s1 + $0xf0] sm:$0xf]
      %v271 = vld [vmem:[%s1 + $0xf4] sm:$0xf]
      %v272 = vld [vmem:[%s1 + $0xf8] sm:$0xf]
      %v273 = vld [vmem:[%s1 + $0xfc] sm:$0xf]
      %v274 = vld [vmem:[%s2] sm:$0x1]
      %v276 = vlaneseq
      %v277 = vshrl.u32 %v276, 7
      %v278 = vsub.s32 0, %v277
      %v279 = vrot.slane %v274, %v278
      %v313 = vunpack.c.l.b16 %v178
      %v314 = vunpack.c.h.b16 %v178
      %v315 = vunpack.c.l.b16 %v179
      %v316 = vunpack.c.h.b16 %v179
      %v317 = vunpack.c.l.b16 %v180
      %v318 = vunpack.c.h.b16 %v180
      %v319 = vunpack.c.l.b16 %v181
      %v320 = vunpack.c.h.b16 %v181
      %v321 = vunpack.c.l.b16 %v182
      %v322 = vunpack.c.h.b16 %v182
      %v323 = vunpack.c.l.b16 %v183
      %v324 = vunpack.c.h.b16 %v183
      %v325 = vunpack.c.l.b16 %v184
      %v326 = vunpack.c.h.b16 %v184
      %v327 = vunpack.c.l.b16 %v185
      %v328 = vunpack.c.h.b16 %v185
      %v329 = vunpack.c.l.b16 %v186
      %v330 = vunpack.c.h.b16 %v186
      %v331 = vunpack.c.l.b16 %v187
      %v332 = vunpack.c.h.b16 %v187
      %v333 = vunpack.c.l.b16 %v188
      %v334 = vunpack.c.h.b16 %v188
      %v335 = vunpack.c.l.b16 %v189
      %v336 = vunpack.c.h.b16 %v189
      %v337 = vunpack.c.l.b16 %v190
      %v338 = vunpack.c.h.b16 %v190
      %v339 = vunpack.c.l.b16 %v191
      %v340 = vunpack.c.h.b16 %v191
      %v341 = vunpack.c.l.b16 %v192
      %v342 = vunpack.c.h.b16 %v192
      %v343 = vunpack.c.l.b16 %v193
      %v344 = vunpack.c.h.b16 %v193
      %v345 = vunpack.c.l.b16 %v194
      %v346 = vunpack.c.h.b16 %v194
      %v347 = vunpack.c.l.b16 %v195
      %v348 = vunpack.c.h.b16 %v195
      %v349 = vunpack.c.l.b16 %v196
      %v350 = vunpack.c.h.b16 %v196
      %v351 = vunpack.c.l.b16 %v197
      %v352 = vunpack.c.h.b16 %v197
      %v353 = vunpack.c.l.b16 %v198
      %v354 = vunpack.c.h.b16 %v198
      %v355 = vunpack.c.l.b16 %v199
      %v356 = vunpack.c.h.b16 %v199
      %v357 = vunpack.c.l.b16 %v200
      %v358 = vunpack.c.h.b16 %v200
      %v359 = vunpack.c.l.b16 %v201
      %v360 = vunpack.c.h.b16 %v201
      %v361 = vunpack.c.l.b16 %v202
      %v362 = vunpack.c.h.b16 %v202
      %v363 = vunpack.c.l.b16 %v203
      %v364 = vunpack.c.h.b16 %v203
      %v365 = vunpack.c.l.b16 %v204
      %v366 = vunpack.c.h.b16 %v204
      %v367 = vunpack.c.l.b16 %v205
      %v368 = vunpack.c.h.b16 %v205
      %v369 = vunpack.c.l.b16 %v206
      %v370 = vunpack.c.h.b16 %v206
      %v371 = vunpack.c.l.b16 %v207
      %v372 = vunpack.c.h.b16 %v207
      %v373 = vunpack.c.l.b16 %v208
      %v374 = vunpack.c.h.b16 %v208
      %v375 = vunpack.c.l.b16 %v209
      %v376 = vunpack.c.h.b16 %v209
      %v377 = vpack.c.b16 %v317, %v313
      %v378 = vpack.c.b16 %v318, %v314
      %v379 = vpack.c.b16 %v319, %v315
      %v380 = vpack.c.b16 %v320, %v316
      %v381 = vpack.c.b16 %v325, %v321
      %v382 = vpack.c.b16 %v326, %v322
      %v383 = vpack.c.b16 %v327, %v323
      %v384 = vpack.c.b16 %v328, %v324
      %v385 = vpack.c.b16 %v333, %v329
      %v386 = vpack.c.b16 %v334, %v330
      %v387 = vpack.c.b16 %v335, %v331
      %v388 = vpack.c.b16 %v336, %v332
      %v389 = vpack.c.b16 %v341, %v337
      %v390 = vpack.c.b16 %v342, %v338
      %v391 = vpack.c.b16 %v343, %v339
      %v392 = vpack.c.b16 %v344, %v340
      %v393 = vpack.c.b16 %v349, %v345
      %v394 = vpack.c.b16 %v350, %v346
      %v395 = vpack.c.b16 %v351, %v347
      %v396 = vpack.c.b16 %v352, %v348
      %v397 = vpack.c.b16 %v357, %v353
      %v398 = vpack.c.b16 %v358, %v354
      %v399 = vpack.c.b16 %v359, %v355
      %v400 = vpack.c.b16 %v360, %v356
      %v401 = vpack.c.b16 %v365, %v361
      %v402 = vpack.c.b16 %v366, %v362
      %v403 = vpack.c.b16 %v367, %v363
      %v404 = vpack.c.b16 %v368, %v364
      %v405 = vpack.c.b16 %v373, %v369
      %v406 = vpack.c.b16 %v374, %v370
      %v407 = vpack.c.b16 %v375, %v371
      %v408 = vpack.c.b16 %v376, %v372
      %v505 = vunpack.c.l.b16 %v210
      %v506 = vunpack.c.l.b16 %v211
      %v507 = vunpack.c.l.b16 %v212
      %v508 = vunpack.c.l.b16 %v213
      %v509 = vunpack.c.l.b16 %v214
      %v510 = vunpack.c.l.b16 %v215
      %v511 = vunpack.c.l.b16 %v216
      %v512 = vunpack.c.l.b16 %v217
      %v513 = vunpack.c.l.b16 %v218
      %v514 = vunpack.c.l.b16 %v219
      %v515 = vunpack.c.l.b16 %v220
      %v516 = vunpack.c.l.b16 %v221
      %v517 = vunpack.c.l.b16 %v222
      %v518 = vunpack.c.l.b16 %v223
      %v519 = vunpack.c.l.b16 %v224
      %v520 = vunpack.c.l.b16 %v225
      %v521 = vunpack.c.l.b16 %v226
      %v522 = vunpack.c.l.b16 %v227
      %v523 = vunpack.c.l.b16 %v228
      %v524 = vunpack.c.l.b16 %v229
      %v525 = vunpack.c.l.b16 %v230
      %v526 = vunpack.c.l.b16 %v231
      %v527 = vunpack.c.l.b16 %v232
      %v528 = vunpack.c.l.b16 %v233
      %v529 = vunpack.c.l.b16 %v234
      %v530 = vunpack.c.l.b16 %v235
      %v531 = vunpack.c.l.b16 %v236
      %v532 = vunpack.c.l.b16 %v237
      %v533 = vunpack.c.l.b16 %v238
      %v534 = vunpack.c.l.b16 %v239
      %v535 = vunpack.c.l.b16 %v240
      %v536 = vunpack.c.l.b16 %v241
      %v537 = vunpack.c.l.b16 %v242
      %v538 = vunpack.c.l.b16 %v243
      %v539 = vunpack.c.l.b16 %v244
      %v540 = vunpack.c.l.b16 %v245
      %v541 = vunpack.c.l.b16 %v246
      %v542 = vunpack.c.l.b16 %v247
      %v543 = vunpack.c.l.b16 %v248
      %v544 = vunpack.c.l.b16 %v249
      %v545 = vunpack.c.l.b16 %v250
      %v546 = vunpack.c.l.b16 %v251
      %v547 = vunpack.c.l.b16 %v252
      %v548 = vunpack.c.l.b16 %v253
      %v549 = vunpack.c.l.b16 %v254
      %v550 = vunpack.c.l.b16 %v255
      %v551 = vunpack.c.l.b16 %v256
      %v552 = vunpack.c.l.b16 %v257
      %v553 = vunpack.c.l.b16 %v258
      %v554 = vunpack.c.l.b16 %v259
      %v555 = vunpack.c.l.b16 %v260
      %v556 = vunpack.c.l.b16 %v261
      %v557 = vunpack.c.l.b16 %v262
      %v558 = vunpack.c.l.b16 %v263
      %v559 = vunpack.c.l.b16 %v264
      %v560 = vunpack.c.l.b16 %v265
      %v561 = vunpack.c.l.b16 %v266
      %v562 = vunpack.c.l.b16 %v267
      %v563 = vunpack.c.l.b16 %v268
      %v564 = vunpack.c.l.b16 %v269
      %v565 = vunpack.c.l.b16 %v270
      %v566 = vunpack.c.l.b16 %v271
      %v567 = vunpack.c.l.b16 %v272
      %v568 = vunpack.c.l.b16 %v273
      %v569 = vpack.c.b16 %v506, %v505
      %v570 = vpack.c.b16 %v508, %v507
      %v571 = vpack.c.b16 %v510, %v509
      %v572 = vpack.c.b16 %v512, %v511
      %v573 = vpack.c.b16 %v514, %v513
      %v574 = vpack.c.b16 %v516, %v515
      %v575 = vpack.c.b16 %v518, %v517
      %v576 = vpack.c.b16 %v520, %v519
      %v577 = vpack.c.b16 %v522, %v521
      %v578 = vpack.c.b16 %v524, %v523
      %v579 = vpack.c.b16 %v526, %v525
      %v580 = vpack.c.b16 %v528, %v527
      %v581 = vpack.c.b16 %v530, %v529
      %v582 = vpack.c.b16 %v532, %v531
      %v583 = vpack.c.b16 %v534, %v533
      %v584 = vpack.c.b16 %v536, %v535
      %v585 = vpack.c.b16 %v538, %v537
      %v586 = vpack.c.b16 %v540, %v539
      %v587 = vpack.c.b16 %v542, %v541
      %v588 = vpack.c.b16 %v544, %v543
      %v589 = vpack.c.b16 %v546, %v545
      %v590 = vpack.c.b16 %v548, %v547
      %v591 = vpack.c.b16 %v550, %v549
      %v592 = vpack.c.b16 %v552, %v551
      %v593 = vpack.c.b16 %v554, %v553
      %v594 = vpack.c.b16 %v556, %v555
      %v595 = vpack.c.b16 %v558, %v557
      %v596 = vpack.c.b16 %v560, %v559
      %v597 = vpack.c.b16 %v562, %v561
      %v598 = vpack.c.b16 %v564, %v563
      %v599 = vpack.c.b16 %v566, %v565
      %v600 = vpack.c.b16 %v568, %v567
      %633 = vmatprep.subr.bf16.mxu0 0
      %634 = vmatpush1.bf16.msra.mxu0 %v569
      %635 = vmatprep.subr.bf16.mxu0 0
      %636 = vmatpush1.bf16.msra.mxu0 %v570
      %637 = vmatprep.subr.bf16.mxu0 0
      %638 = vmatpush1.bf16.msra.mxu0 %v571
      %639 = vmatprep.subr.bf16.mxu0 0
      %640 = vmatpush1.bf16.msra.mxu0 %v572
      %641 = vmatprep.subr.bf16.mxu0 0
      %642 = vmatpush1.bf16.msra.mxu0 %v573
      %643 = vmatprep.subr.bf16.mxu0 0
      %644 = vmatpush1.bf16.msra.mxu0 %v574
      %645 = vmatprep.subr.bf16.mxu0 0
      %646 = vmatpush1.bf16.msra.mxu0 %v575
      %647 = vmatprep.subr.bf16.mxu0 0
      %648 = vmatpush1.bf16.msra.mxu0 %v576
      %649 = vmatprep.subr.bf16.mxu0 0
      %650 = vmatpush1.bf16.msra.mxu0 %v577
      %651 = vmatprep.subr.bf16.mxu0 0
      %652 = vmatpush1.bf16.msra.mxu0 %v578
      %653 = vmatprep.subr.bf16.mxu0 0
      %654 = vmatpush1.bf16.msra.mxu0 %v579
      %655 = vmatprep.subr.bf16.mxu0 0
      %656 = vmatpush1.bf16.msra.mxu0 %v580
      %657 = vmatprep.subr.bf16.mxu0 0
      %658 = vmatpush1.bf16.msra.mxu0 %v581
      %659 = vmatprep.subr.bf16.mxu0 0
      %660 = vmatpush1.bf16.msra.mxu0 %v582
      %661 = vmatprep.subr.bf16.mxu0 0
      %662 = vmatpush1.bf16.msra.mxu0 %v583
      %663 = vmatprep.subr.bf16.mxu0 0
      %664 = vmatpush1.bf16.msra.mxu0 %v584
      %665 = vmatprep.mubr.bf16.mxu0 %v378
      %666 = vmatmul.mubr.bf16.gmra.mrb[0].mxu0 %v377
      %v667 = vpop.f32.mrb[0].mxu0
      %v668 = vadd.f32 %v279, %v667
      %v669 = vpop.f32.mrb[0].mxu0
      %v670 = vpop.f32.mrb[0].mxu0
      %v671 = vadd.f32 %v279, %v670
      %v672 = vpop.f32.mrb[0].mxu0
      %673 = vmatprep.mubr.bf16.mxu0 %v382
      %674 = vmatmul.mubr.bf16.gmra.mrb[0].mxu0 %v381
      %v675 = vpop.f32.mrb[0].mxu0
      %v676 = vadd.f32 %v279, %v675
      %v677 = vpop.f32.mrb[0].mxu0
      %v678 = vpop.f32.mrb[0].mxu0
      %v679 = vadd.f32 %v279, %v678
      %v680 = vpop.f32.mrb[0].mxu0
      %681 = vmatprep.mubr.bf16.mxu0 %v386
      %682 = vmatmul.mubr.bf16.gmra.mrb[0].mxu0 %v385
      %v683 = vpop.f32.mrb[0].mxu0
      %v684 = vadd.f32 %v279, %v683
      %v685 = vpop.f32.mrb[0].mxu0
      %v686 = vpop.f32.mrb[0].mxu0
      %v687 = vadd.f32 %v279, %v686
      %v688 = vpop.f32.mrb[0].mxu0
      %689 = vmatprep.mubr.bf16.mxu0 %v390
      %690 = vmatmul.mubr.bf16.gmra.mrb[0].mxu0 %v389
      %v691 = vpop.f32.mrb[0].mxu0
      %v692 = vadd.f32 %v279, %v691
      %v693 = vpop.f32.mrb[0].mxu0
      %v694 = vpop.f32.mrb[0].mxu0
      %v695 = vadd.f32 %v279, %v694
      %v696 = vpop.f32.mrb[0].mxu0
      %697 = vmatprep.mubr.bf16.mxu0 %v394
      %698 = vmatmul.mubr.bf16.gmra.mrb[0].mxu0 %v393
      %v699 = vpop.f32.mrb[0].mxu0
      %v700 = vadd.f32 %v279, %v699
      %v701 = vpop.f32.mrb[0].mxu0
      %v702 = vpop.f32.mrb[0].mxu0
      %v703 = vadd.f32 %v279, %v702
      %v704 = vpop.f32.mrb[0].mxu0
      %705 = vmatprep.mubr.bf16.mxu0 %v398
      %706 = vmatmul.mubr.bf16.gmra.mrb[0].mxu0 %v397
      %v707 = vpop.f32.mrb[0].mxu0
      %v708 = vadd.f32 %v279, %v707
      %v709 = vpop.f32.mrb[0].mxu0
      %v710 = vpop.f32.mrb[0].mxu0
      %v711 = vadd.f32 %v279, %v710
      %v712 = vpop.f32.mrb[0].mxu0
      %713 = vmatprep.mubr.bf16.mxu0 %v402
      %714 = vmatmul.mubr.bf16.gmra.mrb[0].mxu0 %v401
      %v715 = vpop.f32.mrb[0].mxu0
      %v716 = vadd.f32 %v279, %v715
      %v717 = vpop.f32.mrb[0].mxu0
      %v718 = vpop.f32.mrb[0].mxu0
      %v719 = vadd.f32 %v279, %v718
      %v720 = vpop.f32.mrb[0].mxu0
      %721 = vmatprep.mubr.bf16.mxu0 %v406
      %722 = vmatmul.mubr.bf16.gmra.mrb[0].mxu0 %v405
      %v723 = vpop.f32.mrb[0].mxu0
      %v724 = vadd.f32 %v279, %v723
      %v725 = vpop.f32.mrb[0].mxu0
      %v726 = vpop.f32.mrb[0].mxu0
      %v727 = vadd.f32 %v279, %v726
      %v728 = vpop.f32.mrb[0].mxu0
      %729 = vdwg.mxu0
      %730 = vmatprep.subr.bf16.mxu0 0
      %731 = vmatpush1.bf16.msra.mxu0 %v585
      %732 = vmatprep.subr.bf16.mxu0 0
      %733 = vmatpush1.bf16.msra.mxu0 %v586
      %734 = vmatprep.subr.bf16.mxu0 0
      %735 = vmatpush1.bf16.msra.mxu0 %v587
      %736 = vmatprep.subr.bf16.mxu0 0
      %737 = vmatpush1.bf16.msra.mxu0 %v588
      %738 = vmatprep.subr.bf16.mxu0 0
      %739 = vmatpush1.bf16.msra.mxu0 %v589
      %740 = vmatprep.subr.bf16.mxu0 0
      %741 = vmatpush1.bf16.msra.mxu0 %v590
      %742 = vmatprep.subr.bf16.mxu0 0
      %743 = vmatpush1.bf16.msra.mxu0 %v591
      %744 = vmatprep.subr.bf16.mxu0 0
      %745 = vmatpush1.bf16.msra.mxu0 %v592
      %746 = vmatprep.subr.bf16.mxu0 0
      %747 = vmatpush1.bf16.msra.mxu0 %v593
      %748 = vmatprep.subr.bf16.mxu0 0
      %749 = vmatpush1.bf16.msra.mxu0 %v594
      %750 = vmatprep.subr.bf16.mxu0 0
      %751 = vmatpush1.bf16.msra.mxu0 %v595
      %752 = vmatprep.subr.bf16.mxu0 0
      %753 = vmatpush1.bf16.msra.mxu0 %v596
      %754 = vmatprep.subr.bf16.mxu0 0
      %755 = vmatpush1.bf16.msra.mxu0 %v597
      %756 = vmatprep.subr.bf16.mxu0 0
      %757 = vmatpush1.bf16.msra.mxu0 %v598
      %758 = vmatprep.subr.bf16.mxu0 0
      %759 = vmatpush1.bf16.msra.mxu0 %v599
      %760 = vmatprep.subr.bf16.mxu0 0
      %761 = vmatpush1.bf16.msra.mxu0 %v600
      %762 = vmatprep.mubr.bf16.mxu0 %v380
      %763 = vmatmul.mubr.bf16.gmra.mrb[0].mxu0 %v379
      %v764 = vpop.f32.mrb[0].mxu0
      %v765 = vadd.f32 %v668, %v764
      %v766 = vpop.f32.mrb[0].mxu0
      %v767 = vpop.f32.mrb[0].mxu0
      %v768 = vadd.f32 %v671, %v767
      %v769 = vpop.f32.mrb[0].mxu0
      %770 = vmatprep.mubr.bf16.mxu0 %v384
      %771 = vmatmul.mubr.bf16.gmra.mrb[0].mxu0 %v383
      %v772 = vpop.f32.mrb[0].mxu0
      %v773 = vadd.f32 %v676, %v772
      %v774 = vpop.f32.mrb[0].mxu0
      %v775 = vpop.f32.mrb[0].mxu0
      %v776 = vadd.f32 %v679, %v775
      %v777 = vpop.f32.mrb[0].mxu0
      %778 = vmatprep.mubr.bf16.mxu0 %v388
      %779 = vmatmul.mubr.bf16.gmra.mrb[0].mxu0 %v387
      %v780 = vpop.f32.mrb[0].mxu0
      %v781 = vadd.f32 %v684, %v780
      %v782 = vpop.f32.mrb[0].mxu0
      %v783 = vpop.f32.mrb[0].mxu0
      %v784 = vadd.f32 %v687, %v783
      %v785 = vpop.f32.mrb[0].mxu0
      %786 = vmatprep.mubr.bf16.mxu0 %v392
      %787 = vmatmul.mubr.bf16.gmra.mrb[0].mxu0 %v391
      %v788 = vpop.f32.mrb[0].mxu0
      %v789 = vadd.f32 %v692, %v788
      %v790 = vpop.f32.mrb[0].mxu0
      %v791 = vpop.f32.mrb[0].mxu0
      %v792 = vadd.f32 %v695, %v791
      %v793 = vpop.f32.mrb[0].mxu0
      %794 = vmatprep.mubr.bf16.mxu0 %v396
      %795 = vmatmul.mubr.bf16.gmra.mrb[0].mxu0 %v395
      %v796 = vpop.f32.mrb[0].mxu0
      %v797 = vadd.f32 %v700, %v796
      %v798 = vpop.f32.mrb[0].mxu0
      %v799 = vpop.f32.mrb[0].mxu0
      %v800 = vadd.f32 %v703, %v799
      %v801 = vpop.f32.mrb[0].mxu0
      %802 = vmatprep.mubr.bf16.mxu0 %v400
      %803 = vmatmul.mubr.bf16.gmra.mrb[0].mxu0 %v399
      %v804 = vpop.f32.mrb[0].mxu0
      %v805 = vadd.f32 %v708, %v804
      %v806 = vpop.f32.mrb[0].mxu0
      %v807 = vpop.f32.mrb[0].mxu0
      %v808 = vadd.f32 %v711, %v807
      %v809 = vpop.f32.mrb[0].mxu0
      %810 = vmatprep.mubr.bf16.mxu0 %v404
      %811 = vmatmul.mubr.bf16.gmra.mrb[0].mxu0 %v403
      %v812 = vpop.f32.mrb[0].mxu0
      %v813 = vadd.f32 %v716, %v812
      %v814 = vpop.f32.mrb[0].mxu0
      %v815 = vpop.f32.mrb[0].mxu0
      %v816 = vadd.f32 %v719, %v815
      %v817 = vpop.f32.mrb[0].mxu0
      %818 = vmatprep.mubr.bf16.mxu0 %v408
      %819 = vmatmul.mubr.bf16.gmra.mrb[0].mxu0 %v407
      %v820 = vpop.f32.mrb[0].mxu0
      %v821 = vadd.f32 %v724, %v820
      %v822 = vpop.f32.mrb[0].mxu0
      %v823 = vpop.f32.mrb[0].mxu0
      %v824 = vadd.f32 %v727, %v823
      %v825 = vpop.f32.mrb[0].mxu0
      %826 = vdwg.mxu0
      %v827 = vmax.f32 %v765, 0.0
      %v828 = vmax.f32 %v768, 0.0
      %v829 = vmax.f32 %v773, 0.0
      %v830 = vmax.f32 %v776, 0.0
      %v831 = vmax.f32 %v781, 0.0
      %v832 = vmax.f32 %v784, 0.0
      %v833 = vmax.f32 %v789, 0.0
      %v834 = vmax.f32 %v792, 0.0
      %v835 = vmax.f32 %v797, 0.0
      %v836 = vmax.f32 %v800, 0.0
      %v837 = vmax.f32 %v805, 0.0
      %v838 = vmax.f32 %v808, 0.0
      %v839 = vmax.f32 %v813, 0.0
      %v840 = vmax.f32 %v816, 0.0
      %v841 = vmax.f32 %v821, 0.0
      %v842 = vmax.f32 %v824, 0.0
      %v843 = vpack.c.bf16 %v828, %v827
      %v844 = vpack.c.bf16 %v830, %v829
      %v845 = vpack.c.bf16 %v832, %v831
      %v846 = vpack.c.bf16 %v834, %v833
      %v847 = vpack.c.bf16 %v836, %v835
      %v848 = vpack.c.bf16 %v838, %v837
      %v849 = vpack.c.bf16 %v840, %v839
      %v850 = vpack.c.bf16 %v842, %v841
      %v859 = vunpack.c.l.b16 %v843
      %v860 = vunpack.c.h.b16 %v843
      %v861 = vunpack.c.l.b16 %v844
      %v862 = vunpack.c.h.b16 %v844
      %v863 = vunpack.c.l.b16 %v845
      %v864 = vunpack.c.h.b16 %v845
      %v865 = vunpack.c.l.b16 %v846
      %v866 = vunpack.c.h.b16 %v846
      %v867 = vunpack.c.l.b16 %v847
      %v868 = vunpack.c.h.b16 %v847
      %v869 = vunpack.c.l.b16 %v848
      %v870 = vunpack.c.h.b16 %v848
      %v871 = vunpack.c.l.b16 %v849
      %v872 = vunpack.c.h.b16 %v849
      %v873 = vunpack.c.l.b16 %v850
      %v874 = vunpack.c.h.b16 %v850
      %v875 = vpack.c.b16 %v859, %v859
      %v876 = vpack.c.b16 %v860, %v860
      %v877 = vpack.c.b16 %v861, %v861
      %v878 = vpack.c.b16 %v862, %v862
      %v879 = vpack.c.b16 %v863, %v863
      %v880 = vpack.c.b16 %v864, %v864
      %v881 = vpack.c.b16 %v865, %v865
      %v882 = vpack.c.b16 %v866, %v866
      %v883 = vpack.c.b16 %v867, %v867
      %v884 = vpack.c.b16 %v868, %v868
      %v885 = vpack.c.b16 %v869, %v869
      %v886 = vpack.c.b16 %v870, %v870
      %v887 = vpack.c.b16 %v871, %v871
      %v888 = vpack.c.b16 %v872, %v872
      %v889 = vpack.c.b16 %v873, %v873
      %v890 = vpack.c.b16 %v874, %v874
      %vm907 = vcmask 519168
      %908 = vst.msk [vmem:[%s175] sm:$0xf] %vm907, %v875
      %909 = vst.msk [vmem:[%s175 + $0x4] sm:$0xf] %vm907, %v876
      %910 = vst.msk [vmem:[%s175 + $0x8] sm:$0xf] %vm907, %v877
      %911 = vst.msk [vmem:[%s175 + $0xc] sm:$0xf] %vm907, %v878
      %912 = vst.msk [vmem:[%s175 + $0x10] sm:$0xf] %vm907, %v879
      %913 = vst.msk [vmem:[%s175 + $0x14] sm:$0xf] %vm907, %v880
      %914 = vst.msk [vmem:[%s175 + $0x18] sm:$0xf] %vm907, %v881
      %915 = vst.msk [vmem:[%s175 + $0x1c] sm:$0xf] %vm907, %v882
      %916 = vst.msk [vmem:[%s175 + $0x20] sm:$0xf] %vm907, %v883
      %917 = vst.msk [vmem:[%s175 + $0x24] sm:$0xf] %vm907, %v884
      %918 = vst.msk [vmem:[%s175 + $0x28] sm:$0xf] %vm907, %v885
      %919 = vst.msk [vmem:[%s175 + $0x2c] sm:$0xf] %vm907, %v886
      %920 = vst.msk [vmem:[%s175 + $0x30] sm:$0xf] %vm907, %v887
      %921 = vst.msk [vmem:[%s175 + $0x34] sm:$0xf] %vm907, %v888
      %922 = vst.msk [vmem:[%s175 + $0x38] sm:$0xf] %vm907, %v889
      %923 = vst.msk [vmem:[%s175 + $0x3c] sm:$0xf] %vm907, %v890
      %s924 = smul.u32 16, %s14
      %p925 = scmp.lt.s32.totalorder %s924, 31
      %s926 = scalar_select %p925, %s924, 31
      %s927 = smul.addr %s926, 4
      %s928 = scalar_lea.vmem %s3, %s927
      // Predicated region
      $region33: #{value_forward.5} parent=31 // pred_check
        %p929 = pneg %p100
      $region34: #{value_forward.5} parent=31 // pred_check_branch
        %931 = sbr.rel (%p929) target = $region36
      $region35: #{value_forward.5} parent=31 // pred_region
        %s932 = smul.u32 16, %s14
      $region36: #{value_forward.5} parent=31 // pred_fallthru
        _
    $region32: #{value_forward.5} parent=5 // pred_fallthru
      _
    %p933 = scmp.le.s32.totalorder 2, %s9
    // Predicated region
    $region37: #{value_forward.5} parent=5 // pred_check
      %p934 = pneg %p933
    $region38: #{value_forward.5} parent=5 // pred_check_branch
      %936 = sbr.rel (%p934) target = $region40
    $region39: #{value_forward.5} parent=5 // pred_region
      %s937 = ssub.s32 %s9, 2
      // Predicated region
      $region41: #{value_forward.5} parent=39 // pred_check
        %p938 = pneg %p106
      $region42: #{value_forward.5} parent=39 // pred_check_branch
        %940 = sbr.rel (%p938) target = $region44
      $region43: #{value_forward.5} parent=39 // pred_region
        %s941 = smul.u32 16, %s15
        %p942 = scmp.lt.s32.totalorder %s941, 31
        %s943 = scalar_select %p942, %s941, 31
        %s944 = smul.addr %s943, 4
        %s945 = scalar_lea.vmem %s3, %s944
      $region44: #{value_forward.5} parent=39 // pred_fallthru
        _
    $region40: #{value_forward.5} parent=5 // pred_fallthru
      _
  $region6: #{value_forward.5} parent=0 // loop_footer
    %s13 = sadd.s32 1, %s9
  $region7: #{value_forward.5} parent=0 // loop_footer_branch
    %8 = sbr.rel target = $region3
  $region8: #{value_forward.5} parent=0 // loop_exit
    _

// kernel: value_forward.6
$region0: #{value_forward.6}
  #allocation0 [shape = 'u32[]', space=smem, size = 0x4, offset = 0x4, fixed_abs, tag = 'smem constant byte address 0x4 - core index']
  #allocation1 [shape = 'u32[144,128]{1,0:T(1,128)}', space=vmem, size = 0x12000, scoped, tag = 'internal scratch']
  %s0 = inlined_call_operand.vmem [shape: bf16[256,576], index: 0, kind: input, shape index: {}]
  %s1 = inlined_call_operand.vmem [shape: bf16[576,64], index: 1, kind: input, shape index: {}]
  %s2 = inlined_call_operand.vmem [shape: f32[1,64], index: 2, kind: input, shape index: {}]
  %s3 = inlined_call_operand.vmem [shape: bf16[256,64], index: 3, kind: output, shape index: {}]
  %s4 = sld [smem:[#allocation0]]
  $region45: #{value_forward.6} parent=0
    _
  %s6 = ssub.s32 1, %s4
  %s7 = scalar_select 0, %s6, %s4
  loop: start=0, step=1, limit=4
  $region2: #{value_forward.6} parent=0 // loop_pre_header
    _
  $region3: #{value_forward.6} parent=0 // loop_header
    %s9 = sphi 0, %s13
    %p10 = scmp.ge.s32.totalorder %s9, 4
    %s19 = sphi 0, %s21
    %s22 = sphi 0, %s19
    %s23 = sphi 0, %s22
    %s39 = sphi 0, %s23
    %s43 = sphi 0, %s43
    %s45 = sphi 0, %s43
    %s46 = sphi 0, %s45
    %s60 = sphi 0, %s46
    %s64 = sphi 0, %s64
    %s66 = sphi 0, %s64
    %s67 = sphi 0, %s66
    %s81 = sphi 0, %s67
    %s87 = sphi 0, %s89
    %s90 = sphi 0, %s87
    %s91 = sphi 0, %s90
    %s107 = sphi 0, %s91
  $region4: #{value_forward.6} parent=0 // loop_header_branch
    %12 = sbr.rel (%p10) target = $region8
  $region5: #{value_forward.6} parent=0 // loop_body
    %s14 = ssub.s32 %s9, 1
    %s15 = ssub.s32 %s9, 2
    %s16 = sadd.s32 %s9, 1
    %s17 = ssub.s32 %s9, %s16
    %p18 = scmp.eq.s32.totalorder %s17, 0
    %s20 = sadd.s32 %s19, 1
    %s21 = scalar_select %p18, %s19, %s20
    %p24 = pneg %p18
    %p25 = scmp.eq.s32.totalorder %s9, 1
    %p26 = por %p24, %p25
    %p27 = scmp.ne.s32.totalorder %s19, %s22
    %p28 = scmp.eq.s32.totalorder %s9, 0
    %p29 = por %p27, %p28
    %p30 = scmp.ne.s32.totalorder %s19, %s22
    %p31 = scmp.eq.s32.totalorder %s14, 1
    %p32 = por %p30, %p31
    %p33 = scmp.ne.s32.totalorder %s22, %s23
    %p34 = scmp.eq.s32.totalorder %s14, 0
    %p35 = por %p33, %p34
    %p36 = scmp.ne.s32.totalorder %s22, %s23
    %p37 = scmp.eq.s32.totalorder %s15, 1
    %p38 = por %p36, %p37
    %p40 = scmp.ne.s32.totalorder %s23, %s39
    %p41 = scmp.eq.s32.totalorder %s15, 0
    %p42 = por %p40, %p41
    %s44 = sadd.s32 %s43, 1
    %p47 = scmp.eq.s32.totalorder %s9, 1
    %p48 = scmp.ne.s32.totalorder %s43, %s45
    %p49 = scmp.eq.s32.totalorder %s9, 0
    %p50 = por %p48, %p49
    %p51 = scmp.ne.s32.totalorder %s43, %s45
    %p52 = scmp.eq.s32.totalorder %s14, 1
    %p53 = por %p51, %p52
    %p54 = scmp.ne.s32.totalorder %s45, %s46
    %p55 = scmp.eq.s32.totalorder %s14, 0
    %p56 = por %p54, %p55
    %p57 = scmp.ne.s32.totalorder %s45, %s46
    %p58 = scmp.eq.s32.totalorder %s15, 1
    %p59 = por %p57, %p58
    %p61 = scmp.ne.s32.totalorder %s46, %s60
    %p62 = scmp.eq.s32.totalorder %s15, 0
    %p63 = por %p61, %p62
    %s65 = sadd.s32 %s64, 1
    %p68 = scmp.eq.s32.totalorder %s9, 1
    %p69 = scmp.ne.s32.totalorder %s64, %s66
    %p70 = scmp.eq.s32.totalorder %s9, 0
    %p71 = por %p69, %p70
    %p72 = scmp.ne.s32.totalorder %s64, %s66
    %p73 = scmp.eq.s32.totalorder %s14, 1
    %p74 = por %p72, %p73
    %p75 = scmp.ne.s32.totalorder %s66, %s67
    %p76 = scmp.eq.s32.totalorder %s14, 0
    %p77 = por %p75, %p76
    %p78 = scmp.ne.s32.totalorder %s66, %s67
    %p79 = scmp.eq.s32.totalorder %s15, 1
    %p80 = por %p78, %p79
    %p82 = scmp.ne.s32.totalorder %s67, %s81
    %p83 = scmp.eq.s32.totalorder %s15, 0
    %p84 = por %p82, %p83
    %s85 = ssub.s32 %s9, %s16
    %p86 = scmp.eq.s32.totalorder %s85, 0
    %s88 = sadd.s32 %s87, 1
    %s89 = scalar_select %p86, %s87, %s88
    %p92 = pneg %p86
    %p93 = scmp.eq.s32.totalorder %s9, 1
    %p94 = por %p92, %p93
    %p95 = scmp.ne.s32.totalorder %s87, %s90
    %p96 = scmp.eq.s32.totalorder %s9, 0
    %p97 = por %p95, %p96
    %p98 = scmp.ne.s32.totalorder %s87, %s90
    %p99 = scmp.eq.s32.totalorder %s14, 1
    %p100 = por %p98, %p99
    %p101 = scmp.ne.s32.totalorder %s90, %s91
    %p102 = scmp.eq.s32.totalorder %s14, 0
    %p103 = por %p101, %p102
    %p104 = scmp.ne.s32.totalorder %s90, %s91
    %p105 = scmp.eq.s32.totalorder %s15, 1
    %p106 = por %p104, %p105
    %p108 = scmp.ne.s32.totalorder %s91, %s107
    %p109 = scmp.eq.s32.totalorder %s15, 0
    %p110 = por %p108, %p109
    %p111 = scmp.le.s32.totalorder 1, %s9
    %p112 = scmp.lt.s32.totalorder %s9, 3
    %p113 = pnand %p111, %p112
    %p114 = pneg %p113
    // Predicated region
    $region9: #{value_forward.6} parent=5 // pred_check
      _
    $region10: #{value_forward.6} parent=5 // pred_check_branch
      %116 = sbr.rel (%p113) target = $region12
    $region11: #{value_forward.6} parent=5 // pred_region
      %s117 = ssub.s32 %s9, 1
      // Predicated region
      $region13: #{value_forward.6} parent=11 // pred_check
        %p118 = pneg %p56
      $region14: #{value_forward.6} parent=11 // pred_check_branch
        %120 = sbr.rel (%p118) target = $region16
      $region15: #{value_forward.6} parent=11 // pred_region
        _
      $region16: #{value_forward.6} parent=11 // pred_fallthru
        _
      // Predicated region
      $region17: #{value_forward.6} parent=11 // pred_check
        %p121 = pneg %p77
      $region18: #{value_forward.6} parent=11 // pred_check_branch
        %123 = sbr.rel (%p121) target = $region20
      $region19: #{value_forward.6} parent=11 // pred_region
        _
      $region20: #{value_forward.6} parent=11 // pred_fallthru
        _
    $region12: #{value_forward.6} parent=5 // pred_fallthru
      _
    %p124 = scmp.lt.s32.totalorder %s9, 2
    // Predicated region
    $region21: #{value_forward.6} parent=5 // pred_check
      %p125 = pneg %p124
    $region22: #{value_forward.6} parent=5 // pred_check_branch
      %127 = sbr.rel (%p125) target = $region24
    $region23: #{value_forward.6} parent=5 // pred_region
      // Predicated region
      $region25: #{value_forward.6} parent=23 // pred_check
        %p128 = pneg %p29
      $region26: #{value_forward.6} parent=23 // pred_check_branch
        %130 = sbr.rel (%p128) target = $region28
      $region27: #{value_forward.6} parent=23 // pred_region
        %s131 = smul.u32 16, %s9
        %p132 = scmp.lt.s32.totalorder %s131, 31
        %s133 = scalar_select %p132, %s131, 31
        %s134 = smul.addr %s133, 5
        %s135 = smul.addr %s134, 4
        %s136 = scalar_lea.vmem %s0, %s135
        %s137 = smul.u32 16, %s9
      $region28: #{value_forward.6} parent=23 // pred_fallthru
        _
    $region24: #{value_forward.6} parent=5 // pred_fallthru
      _
    %p138 = scmp.le.s32.totalorder 1, %s9
    %p139 = scmp.lt.s32.totalorder %s9, 3
    %p140 = pnand %p138, %p139
    %p141 = pneg %p140
    // Predicated region
    $region29: #{value_forward.6} parent=5 // pred_check
      _
    $region30: #{value_forward.6} parent=5 // pred_check_branch
      %143 = sbr.rel (%p140) target = $region32
    $region31: #{value_forward.6} parent=5 // pred_region
      %s144 = ssub.s32 %s9, 1
      %s145 = smul.u32 16, %s14
      %p146 = scmp.lt.s32.totalorder %s145, 31
      %s147 = scalar_select %p146, %s145, 31
      %s148 = smul.addr %s147, 5
      %s149 = smul.addr %s148, 4
      %s150 = scalar_lea.vmem %s0, %s149
      %p151 = pneg %p35
      %p152 = pneg %p32
      %p153 = pneg %p56
      %p154 = pneg %p53
      %p155 = pneg %p77
      %p156 = pneg %p74
      %p157 = pneg %p103
      %p158 = pneg %p100
      %s159 = smul.u32 16, %s14
      %p160 = scmp.lt.s32.totalorder %s159, 31
      %s161 = scalar_select %p160, %s159, 31
      %s162 = smul.addr %s161, 4
      %s163 = scalar_lea.vmem %s3, %s162
      %s164 = smul.u32 16, %s14
      %p165 = scmp.lt.s32.totalorder %s164, 31
      %s166 = scalar_select %p165, %s164, 31
      %s167 = smul.addr %s166, 5
      %s168 = smul.addr %s167, 4
      %s169 = scalar_lea.vmem %s0, %s168
      %s170 = smul.u32 16, %s14
      %s171 = smul.u32 16, %s14
      %p172 = scmp.lt.s32.totalorder %s171, 31
      %s173 = scalar_select %p172, %s171, 31
      %s174 = smul.addr %s173, 4
      %s175 = scalar_lea.vmem %s3, %s174
      %s176 = smul.u32 16, %s14
      %v178 = vld [vmem:[%s169] sm:$0xff]
      %v179 = vld [vmem:[%s169 + $0x8] sm:$0xff]
      %v180 = vld [vmem:[%s169 + $0x10] sm:$0xf]
      %v181 = vld [vmem:[%s169 + $0x14] sm:$0xff]
      %v182 = vld [vmem:[%s169 + $0x1c] sm:$0xff]
      %v183 = vld [vmem:[%s169 + $0x24] sm:$0xf]
      %v184 = vld [vmem:[%s169 + $0x28] sm:$0xff]
      %v185 = vld [vmem:[%s169 + $0x30] sm:$0xff]
      %v186 = vld [vmem:[%s169 + $0x38] sm:$0xf]
      %v187 = vld [vmem:[%s169 + $0x3c] sm:$0xff]
      %v188 = vld [vmem:[%s169 + $0x44] sm:$0xff]
      %v189 = vld [vmem:[%s169 + $0x4c] sm:$0xf]
      %v190 = vld [vmem:[%s169 + $0x50] sm:$0xff]
      %v191 = vld [vmem:[%s169 + $0x58] sm:$0xff]
      %v192 = vld [vmem:[%s169 + $0x60] sm:$0xf]
      %v193 = vld [vmem:[%s169 + $0x64] sm:$0xff]
      %v194 = vld [vmem:[%s169 + $0x6c] sm:$0xff]
      %v195 = vld [vmem:[%s169 + $0x74] sm:$0xf]
      %v196 = vld [vmem:[%s169 + $0x78] sm:$0xff]
      %v197 = vld [vmem:[%s169 + $0x80] sm:$0xff]
      %v198 = vld [vmem:[%s169 + $0x88] sm:$0xf]
      %v199 = vld [vmem:[%s169 + $0x8c] sm:$0xff]
      %v200 = vld [vmem:[%s169 + $0x94] sm:$0xff]
      %v201 = vld [vmem:[%s169 + $0x9c] sm:$0xf]
      %v202 = vld [vmem:[%s169 + $0xa0] sm:$0xff]
      %v203 = vld [vmem:[%s169 + $0xa8] sm:$0xff]
      %v204 = vld [vmem:[%s169 + $0xb0] sm:$0xf]
      %v205 = vld [vmem:[%s169 + $0xb4] sm:$0xff]
      %v206 = vld [vmem:[%s169 + $0xbc] sm:$0xff]
      %v207 = vld [vmem:[%s169 + $0xc4] sm:$0xf]
      %v208 = vld [vmem:[%s169 + $0xc8] sm:$0xff]
      %v209 = vld [vmem:[%s169 + $0xd0] sm:$0xff]
      %v210 = vld [vmem:[%s169 + $0xd8] sm:$0xf]
      %v211 = vld [vmem:[%s169 + $0xdc] sm:$0xff]
      %v212 = vld [vmem:[%s169 + $0xe4] sm:$0xff]
      %v213 = vld [vmem:[%s169 + $0xec] sm:$0xf]
      %v214 = vld [vmem:[%s169 + $0xf0] sm:$0xff]
      %v215 = vld [vmem:[%s169 + $0xf8] sm:$0xff]
      %v216 = vld [vmem:[%s169 + $0x100] sm:$0xf]
      %v217 = vld [vmem:[%s169 + $0x104] sm:$0xff]
      %v218 = vld [vmem:[%s169 + $0x10c] sm:$0xff]
      %v219 = vld [vmem:[%s169 + $0x114] sm:$0xf]
      %v220 = vld [vmem:[%s169 + $0x118] sm:$0xff]
      %v221 = vld [vmem:[%s169 + $0x120] sm:$0xff]
      %v222 = vld [vmem:[%s169 + $0x128] sm:$0xf]
      %v223 = vld [vmem:[%s169 + $0x12c] sm:$0xff]
      %v224 = vld [vmem:[%s169 + $0x134] sm:$0xff]
      %v225 = vld [vmem:[%s169 + $0x13c] sm:$0xf]
      %v226 = vld [vmem:[%s1] sm:$0xf]
      %v227 = vld [vmem:[%s1 + $0x4] sm:$0xf]
      %v228 = vld [vmem:[%s1 + $0x8] sm:$0xf]
      %v229 = vld [vmem:[%s1 + $0xc] sm:$0xf]
      %v230 = vld [vmem:[%s1 + $0x10] sm:$0xf]
      %v231 = vld [vmem:[%s1 + $0x14] sm:$0xf]
      %v232 = vld [vmem:[%s1 + $0x18] sm:$0xf]
      %v233 = vld [vmem:[%s1 + $0x1c] sm:$0xf]
      %v234 = vld [vmem:[%s1 + $0x20] sm:$0xf]
      %v235 = vld [vmem:[%s1 + $0x24] sm:$0xf]
      %v236 = vld [vmem:[%s1 + $0x28] sm:$0xf]
      %v237 = vld [vmem:[%s1 + $0x2c] sm:$0xf]
      %v238 = vld [vmem:[%s1 + $0x30] sm:$0xf]
      %v239 = vld [vmem:[%s1 + $0x34] sm:$0xf]
      %v240 = vld [vmem:[%s1 + $0x38] sm:$0xf]
      %v241 = vld [vmem:[%s1 + $0x3c] sm:$0xf]
      %v242 = vld [vmem:[%s1 + $0x40] sm:$0xf]
      %v243 = vld [vmem:[%s1 + $0x44] sm:$0xf]
      %v244 = vld [vmem:[%s1 + $0x48] sm:$0xf]
      %v245 = vld [vmem:[%s1 + $0x4c] sm:$0xf]
      %v246 = vld [vmem:[%s1 + $0x50] sm:$0xf]
      %v247 = vld [vmem:[%s1 + $0x54] sm:$0xf]
      %v248 = vld [vmem:[%s1 + $0x58] sm:$0xf]
      %v249 = vld [vmem:[%s1 + $0x5c] sm:$0xf]
      %v250 = vld [vmem:[%s1 + $0x60] sm:$0xf]
      %v251 = vld [vmem:[%s1 + $0x64] sm:$0xf]
      %v252 = vld [vmem:[%s1 + $0x68] sm:$0xf]
      %v253 = vld [vmem:[%s1 + $0x6c] sm:$0xf]
      %v254 = vld [vmem:[%s1 + $0x70] sm:$0xf]
      %v255 = vld [vmem:[%s1 + $0x74] sm:$0xf]
      %v256 = vld [vmem:[%s1 + $0x78] sm:$0xf]
      %v257 = vld [vmem:[%s1 + $0x7c] sm:$0xf]
      %v258 = vld [vmem:[%s1 + $0x80] sm:$0xf]
      %v259 = vld [vmem:[%s1 + $0x84] sm:$0xf]
      %v260 = vld [vmem:[%s1 + $0x88] sm:$0xf]
      %v261 = vld [vmem:[%s1 + $0x8c] sm:$0xf]
      %v262 = vld [vmem:[%s1 + $0x90] sm:$0xf]
      %v263 = vld [vmem:[%s1 + $0x94] sm:$0xf]
      %v264 = vld [vmem:[%s1 + $0x98] sm:$0xf]
      %v265 = vld [vmem:[%s1 + $0x9c] sm:$0xf]
      %v266 = vld [vmem:[%s1 + $0xa0] sm:$0xf]
      %v267 = vld [vmem:[%s1 + $0xa4] sm:$0xf]
      %v268 = vld [vmem:[%s1 + $0xa8] sm:$0xf]
      %v269 = vld [vmem:[%s1 + $0xac] sm:$0xf]
      %v270 = vld [vmem:[%s1 + $0xb0] sm:$0xf]
      %v271 = vld [vmem:[%s1 + $0xb4] sm:$0xf]
      %v272 = vld [vmem:[%s1 + $0xb8] sm:$0xf]
      %v273 = vld [vmem:[%s1 + $0xbc] sm:$0xf]
      %v274 = vld [vmem:[%s1 + $0xc0] sm:$0xf]
      %v275 = vld [vmem:[%s1 + $0xc4] sm:$0xf]
      %v276 = vld [vmem:[%s1 + $0xc8] sm:$0xf]
      %v277 = vld [vmem:[%s1 + $0xcc] sm:$0xf]
      %v278 = vld [vmem:[%s1 + $0xd0] sm:$0xf]
      %v279 = vld [vmem:[%s1 + $0xd4] sm:$0xf]
      %v280 = vld [vmem:[%s1 + $0xd8] sm:$0xf]
      %v281 = vld [vmem:[%s1 + $0xdc] sm:$0xf]
      %v282 = vld [vmem:[%s1 + $0xe0] sm:$0xf]
      %v283 = vld [vmem:[%s1 + $0xe4] sm:$0xf]
      %v284 = vld [vmem:[%s1 + $0xe8] sm:$0xf]
      %v285 = vld [vmem:[%s1 + $0xec] sm:$0xf]
      %v286 = vld [vmem:[%s1 + $0xf0] sm:$0xf]
      %v287 = vld [vmem:[%s1 + $0xf4] sm:$0xf]
      %v288 = vld [vmem:[%s1 + $0xf8] sm:$0xf]
      %v289 = vld [vmem:[%s1 + $0xfc] sm:$0xf]
      %v290 = vld [vmem:[%s1 + $0x100] sm:$0xf]
      %v291 = vld [vmem:[%s1 + $0x104] sm:$0xf]
      %v292 = vld [vmem:[%s1 + $0x108] sm:$0xf]
      %v293 = vld [vmem:[%s1 + $0x10c] sm:$0xf]
      %v294 = vld [vmem:[%s1 + $0x110] sm:$0xf]
      %v295 = vld [vmem:[%s1 + $0x114] sm:$0xf]
      %v296 = vld [vmem:[%s1 + $0x118] sm:$0xf]
      %v297 = vld [vmem:[%s1 + $0x11c] sm:$0xf]
      %v298 = vld [vmem:[%s2] sm:$0x1]
      %v300 = vlaneseq
      %v301 = vshrl.u32 %v300, 7
      %v302 = vsub.s32 0, %v301
      %v303 = vrot.slane %v298, %v302
      %v353 = vunpack.c.l.b16 %v178
      %v354 = vunpack.c.h.b16 %v178
      %v355 = vunpack.c.l.b16 %v179
      %v356 = vunpack.c.h.b16 %v179
      %v357 = vunpack.c.l.b16 %v180
      %v358 = vunpack.c.l.b16 %v181
      %v359 = vunpack.c.h.b16 %v181
      %v360 = vunpack.c.l.b16 %v182
      %v361 = vunpack.c.h.b16 %v182
      %v362 = vunpack.c.l.b16 %v183
      %v363 = vunpack.c.l.b16 %v184
      %v364 = vunpack.c.h.b16 %v184
      %v365 = vunpack.c.l.b16 %v185
      %v366 = vunpack.c.h.b16 %v185
      %v367 = vunpack.c.l.b16 %v186
      %v368 = vunpack.c.l.b16 %v187
      %v369 = vunpack.c.h.b16 %v187
      %v370 = vunpack.c.l.b16 %v188
      %v371 = vunpack.c.h.b16 %v188
      %v372 = vunpack.c.l.b16 %v189
      %v373 = vunpack.c.l.b16 %v190
      %v374 = vunpack.c.h.b16 %v190
      %v375 = vunpack.c.l.b16 %v191
      %v376 = vunpack.c.h.b16 %v191
      %v377 = vunpack.c.l.b16 %v192
      %v378 = vunpack.c.l.b16 %v193
      %v379 = vunpack.c.h.b16 %v193
      %v380 = vunpack.c.l.b16 %v194
      %v381 = vunpack.c.h.b16 %v194
      %v382 = vunpack.c.l.b16 %v195
      %v383 = vunpack.c.l.b16 %v196
      %v384 = vunpack.c.h.b16 %v196
      %v385 = vunpack.c.l.b16 %v197
      %v386 = vunpack.c.h.b16 %v197
      %v387 = vunpack.c.l.b16 %v198
      %v388 = vunpack.c.l.b16 %v199
      %v389 = vunpack.c.h.b16 %v199
      %v390 = vunpack.c.l.b16 %v200
      %v391 = vunpack.c.h.b16 %v200
      %v392 = vunpack.c.l.b16 %v201
      %v393 = vunpack.c.l.b16 %v202
      %v394 = vunpack.c.h.b16 %v202
      %v395 = vunpack.c.l.b16 %v203
      %v396 = vunpack.c.h.b16 %v203
      %v397 = vunpack.c.l.b16 %v204
      %v398 = vunpack.c.l.b16 %v205
      %v399 = vunpack.c.h.b16 %v205
      %v400 = vunpack.c.l.b16 %v206
      %v401 = vunpack.c.h.b16 %v206
      %v402 = vunpack.c.l.b16 %v207
      %v403 = vunpack.c.l.b16 %v208
      %v404 = vunpack.c.h.b16 %v208
      %v405 = vunpack.c.l.b16 %v209
      %v406 = vunpack.c.h.b16 %v209
      %v407 = vunpack.c.l.b16 %v210
      %v408 = vunpack.c.l.b16 %v211
      %v409 = vunpack.c.h.b16 %v211
      %v410 = vunpack.c.l.b16 %v212
      %v411 = vunpack.c.h.b16 %v212
      %v412 = vunpack.c.l.b16 %v213
      %v413 = vunpack.c.l.b16 %v214
      %v414 = vunpack.c.h.b16 %v214
      %v415 = vunpack.c.l.b16 %v215
      %v416 = vunpack.c.h.b16 %v215
      %v417 = vunpack.c.l.b16 %v216
      %v418 = vunpack.c.l.b16 %v217
      %v419 = vunpack.c.h.b16 %v217
      %v420 = vunpack.c.l.b16 %v218
      %v421 = vunpack.c.h.b16 %v218
      %v422 = vunpack.c.l.b16 %v219
      %v423 = vunpack.c.l.b16 %v220
      %v424 = vunpack.c.h.b16 %v220
      %v425 = vunpack.c.l.b16 %v221
      %v426 = vunpack.c.h.b16 %v221
      %v427 = vunpack.c.l.b16 %v222
      %v428 = vunpack.c.l.b16 %v223
      %v429 = vunpack.c.h.b16 %v223
      %v430 = vunpack.c.l.b16 %v224
      %v431 = vunpack.c.h.b16 %v224
      %v432 = vunpack.c.l.b16 %v225
      %v433 = vpack.c.b16 %v358, %v353
      %v434 = vpack.c.b16 %v359, %v354
      %v435 = vpack.c.b16 %v360, %v355
      %v436 = vpack.c.b16 %v361, %v356
      %v437 = vpack.c.b16 %v362, %v357
      %v438 = vpack.c.b16 %v368, %v363
      %v439 = vpack.c.b16 %v369, %v364
      %v440 = vpack.c.b16 %v370, %v365
      %v441 = vpack.c.b16 %v371, %v366
      %v442 = vpack.c.b16 %v372, %v367
      %v443 = vpack.c.b16 %v378, %v373
      %v444 = vpack.c.b16 %v379, %v374
      %v445 = vpack.c.b16 %v380, %v375
      %v446 = vpack.c.b16 %v381, %v376
      %v447 = vpack.c.b16 %v382, %v377
      %v448 = vpack.c.b16 %v388, %v383
      %v449 = vpack.c.b16 %v389, %v384
      %v450 = vpack.c.b16 %v390, %v385
      %v451 = vpack.c.b16 %v391, %v386
      %v452 = vpack.c.b16 %v392, %v387
      %v453 = vpack.c.b16 %v398, %v393
      %v454 = vpack.c.b16 %v399, %v394
      %v455 = vpack.c.b16 %v400, %v395
      %v456 = vpack.c.b16 %v401, %v396
      %v457 = vpack.c.b16 %v402, %v397
      %v458 = vpack.c.b16 %v408, %v403
      %v459 = vpack.c.b16 %v409, %v404
      %v460 = vpack.c.b16 %v410, %v405
      %v461 = vpack.c.b16 %v411, %v406
      %v462 = vpack.c.b16 %v412, %v407
      %v463 = vpack.c.b16 %v418, %v413
      %v464 = vpack.c.b16 %v419, %v414
      %v465 = vpack.c.b16 %v420, %v415
      %v466 = vpack.c.b16 %v421, %v416
      %v467 = vpack.c.b16 %v422, %v417
      %v468 = vpack.c.b16 %v428, %v423
      %v469 = vpack.c.b16 %v429, %v424
      %v470 = vpack.c.b16 %v430, %v425
      %v471 = vpack.c.b16 %v431, %v426
      %v472 = vpack.c.b16 %v432, %v427
      %v577 = vunpack.c.l.b16 %v226
      %v578 = vunpack.c.l.b16 %v227
      %v579 = vunpack.c.l.b16 %v228
      %v580 = vunpack.c.l.b16 %v229
      %v581 = vunpack.c.l.b16 %v230
      %v582 = vunpack.c.l.b16 %v231
      %v583 = vunpack.c.l.b16 %v232
      %v584 = vunpack.c.l.b16 %v233
      %v585 = vunpack.c.l.b16 %v234
      %v586 = vunpack.c.l.b16 %v235
      %v587 = vunpack.c.l.b16 %v236
      %v588 = vunpack.c.l.b16 %v237
      %v589 = vunpack.c.l.b16 %v238
      %v590 = vunpack.c.l.b16 %v239
      %v591 = vunpack.c.l.b16 %v240
      %v592 = vunpack.c.l.b16 %v241
      %v593 = vunpack.c.l.b16 %v242
      %v594 = vunpack.c.l.b16 %v243
      %v595 = vunpack.c.l.b16 %v244
      %v596 = vunpack.c.l.b16 %v245
      %v597 = vunpack.c.l.b16 %v246
      %v598 = vunpack.c.l.b16 %v247
      %v599 = vunpack.c.l.b16 %v248
      %v600 = vunpack.c.l.b16 %v249
      %v601 = vunpack.c.l.b16 %v250
      %v602 = vunpack.c.l.b16 %v251
      %v603 = vunpack.c.l.b16 %v252
      %v604 = vunpack.c.l.b16 %v253
      %v605 = vunpack.c.l.b16 %v254
      %v606 = vunpack.c.l.b16 %v255
      %v607 = vunpack.c.l.b16 %v256
      %v608 = vunpack.c.l.b16 %v257
      %v609 = vunpack.c.l.b16 %v258
      %v610 = vunpack.c.l.b16 %v259
      %v611 = vunpack.c.l.b16 %v260
      %v612 = vunpack.c.l.b16 %v261
      %v613 = vunpack.c.l.b16 %v262
      %v614 = vunpack.c.l.b16 %v263
      %v615 = vunpack.c.l.b16 %v264
      %v616 = vunpack.c.l.b16 %v265
      %v617 = vunpack.c.l.b16 %v266
      %v618 = vunpack.c.l.b16 %v267
      %v619 = vunpack.c.l.b16 %v268
      %v620 = vunpack.c.l.b16 %v269
      %v621 = vunpack.c.l.b16 %v270
      %v622 = vunpack.c.l.b16 %v271
      %v623 = vunpack.c.l.b16 %v272
      %v624 = vunpack.c.l.b16 %v273
      %v625 = vunpack.c.l.b16 %v274
      %v626 = vunpack.c.l.b16 %v275
      %v627 = vunpack.c.l.b16 %v276
      %v628 = vunpack.c.l.b16 %v277
      %v629 = vunpack.c.l.b16 %v278
      %v630 = vunpack.c.l.b16 %v279
      %v631 = vunpack.c.l.b16 %v280
      %v632 = vunpack.c.l.b16 %v281
      %v633 = vunpack.c.l.b16 %v282
      %v634 = vunpack.c.l.b16 %v283
      %v635 = vunpack.c.l.b16 %v284
      %v636 = vunpack.c.l.b16 %v285
      %v637 = vunpack.c.l.b16 %v286
      %v638 = vunpack.c.l.b16 %v287
      %v639 = vunpack.c.l.b16 %v288
      %v640 = vunpack.c.l.b16 %v289
      %v641 = vunpack.c.l.b16 %v290
      %v642 = vunpack.c.l.b16 %v291
      %v643 = vunpack.c.l.b16 %v292
      %v644 = vunpack.c.l.b16 %v293
      %v645 = vunpack.c.l.b16 %v294
      %v646 = vunpack.c.l.b16 %v295
      %v647 = vunpack.c.l.b16 %v296
      %v648 = vunpack.c.l.b16 %v297
      %v649 = vpack.c.b16 %v578, %v577
      %v650 = vpack.c.b16 %v580, %v579
      %v651 = vpack.c.b16 %v582, %v581
      %v652 = vpack.c.b16 %v584, %v583
      %v653 = vpack.c.b16 %v586, %v585
      %v654 = vpack.c.b16 %v588, %v587
      %v655 = vpack.c.b16 %v590, %v589
      %v656 = vpack.c.b16 %v592, %v591
      %v657 = vpack.c.b16 %v594, %v593
      %v658 = vpack.c.b16 %v596, %v595
      %v659 = vpack.c.b16 %v598, %v597
      %v660 = vpack.c.b16 %v600, %v599
      %v661 = vpack.c.b16 %v602, %v601
      %v662 = vpack.c.b16 %v604, %v603
      %v663 = vpack.c.b16 %v606, %v605
      %v664 = vpack.c.b16 %v608, %v607
      %v665 = vpack.c.b16 %v610, %v609
      %v666 = vpack.c.b16 %v612, %v611
      %v667 = vpack.c.b16 %v614, %v613
      %v668 = vpack.c.b16 %v616, %v615
      %v669 = vpack.c.b16 %v618, %v617
      %v670 = vpack.c.b16 %v620, %v619
      %v671 = vpack.c.b16 %v622, %v621
      %v672 = vpack.c.b16 %v624, %v623
      %v673 = vpack.c.b16 %v626, %v625
      %v674 = vpack.c.b16 %v628, %v627
      %v675 = vpack.c.b16 %v630, %v629
      %v676 = vpack.c.b16 %v632, %v631
      %v677 = vpack.c.b16 %v634, %v633
      %v678 = vpack.c.b16 %v636, %v635
      %v679 = vpack.c.b16 %v638, %v637
      %v680 = vpack.c.b16 %v640, %v639
      %v681 = vpack.c.b16 %v642, %v641
      %v682 = vpack.c.b16 %v644, %v643
      %v683 = vpack.c.b16 %v646, %v645
      %v684 = vpack.c.b16 %v648, %v647
      %vm721 = vcmask 523264
      %v723 = vsel %vm721, %v437, 0
      %v726 = vsel %vm721, %v442, 0
      %v729 = vsel %vm721, %v447, 0
      %v732 = vsel %vm721, %v452, 0
      %v735 = vsel %vm721, %v457, 0
      %v738 = vsel %vm721, %v462, 0
      %v741 = vsel %vm721, %v467, 0
      %v744 = vsel %vm721, %v472, 0
      %746 = vmatprep.subr.bf16.mxu0 0
      %747 = vmatpush1.bf16.msra.mxu0 %v649
      %748 = vmatprep.subr.bf16.mxu0 0
      %749 = vmatpush1.bf16.msra.mxu0 %v650
      %750 = vmatprep.subr.bf16.mxu0 0
      %751 = vmatpush1.bf16.msra.mxu0 %v651
      %752 = vmatprep.subr.bf16.mxu0 0
      %753 = vmatpush1.bf16.msra.mxu0 %v652
      %754 = vmatprep.subr.bf16.mxu0 0
      %755 = vmatpush1.bf16.msra.mxu0 %v653
      %756 = vmatprep.subr.bf16.mxu0 0
      %757 = vmatpush1.bf16.msra.mxu0 %v654
      %758 = vmatprep.subr.bf16.mxu0 0
      %759 = vmatpush1.bf16.msra.mxu0 %v655
      %760 = vmatprep.subr.bf16.mxu0 0
      %761 = vmatpush1.bf16.msra.mxu0 %v656
      %762 = vmatprep.subr.bf16.mxu0 0
      %763 = vmatpush1.bf16.msra.mxu0 %v657
      %764 = vmatprep.subr.bf16.mxu0 0
      %765 = vmatpush1.bf16.msra.mxu0 %v658
      %766 = vmatprep.subr.bf16.mxu0 0
      %767 = vmatpush1.bf16.msra.mxu0 %v659
      %768 = vmatprep.subr.bf16.mxu0 0
      %769 = vmatpush1.bf16.msra.mxu0 %v660
      %770 = vmatprep.subr.bf16.mxu0 0
      %771 = vmatpush1.bf16.msra.mxu0 %v661
      %772 = vmatprep.subr.bf16.mxu0 0
      %773 = vmatpush1.bf16.msra.mxu0 %v662
      %774 = vmatprep.subr.bf16.mxu0 0
      %775 = vmatpush1.bf16.msra.mxu0 %v663
      %776 = vmatprep.subr.bf16.mxu0 0
      %777 = vmatpush1.bf16.msra.mxu0 %v664
      %778 = vmatprep.mubr.bf16.mxu0 %v434
      %779 = vmatmul.mubr.bf16.gmra.mrb[0].mxu0 %v433
      %v780 = vpop.f32.mrb[0].mxu0
      %v781 = vadd.f32 %v303, %v780
      %v782 = vpop.f32.mrb[0].mxu0
      %v783 = vpop.f32.mrb[0].mxu0
      %v784 = vadd.f32 %v303, %v783
      %v785 = vpop.f32.mrb[0].mxu0
      %786 = vmatprep.mubr.bf16.mxu0 %v439
      %787 = vmatmul.mubr.bf16.gmra.mrb[0].mxu0 %v438
      %v788 = vpop.f32.mrb[0].mxu0
      %v789 = vadd.f32 %v303, %v788
      %v790 = vpop.f32.mrb[0].mxu0
      %v791 = vpop.f32.mrb[0].mxu0
      %v792 = vadd.f32 %v303, %v791
      %v793 = vpop.f32.mrb[0].mxu0
      %794 = vmatprep.mubr.bf16.mxu0 %v444
      %795 = vmatmul.mubr.bf16.gmra.mrb[0].mxu0 %v443
      %v796 = vpop.f32.mrb[0].mxu0
      %v797 = vadd.f32 %v303, %v796
      %v798 = vpop.f32.mrb[0].mxu0
      %v799 = vpop.f32.mrb[0].mxu0
      %v800 = vadd.f32 %v303, %v799
      %v801 = vpop.f32.mrb[0].mxu0
      %802 = vmatprep.mubr.bf16.mxu0 %v449
      %803 = vmatmul.mubr.bf16.gmra.mrb[0].mxu0 %v448
      %v804 = vpop.f32.mrb[0].mxu0
      %v805 = vadd.f32 %v303, %v804
      %v806 = vpop.f32.mrb[0].mxu0
      %v807 = vpop.f32.mrb[0].mxu0
      %v808 = vadd.f32 %v303, %v807
      %v809 = vpop.f32.mrb[0].mxu0
      %810 = vmatprep.mubr.bf16.mxu0 %v454
      %811 = vmatmul.mubr.bf16.gmra.mrb[0].mxu0 %v453
      %v812 = vpop.f32.mrb[0].mxu0
      %v813 = vadd.f32 %v303, %v812
      %v814 = vpop.f32.mrb[0].mxu0
      %v815 = vpop.f32.mrb[0].mxu0
      %v816 = vadd.f32 %v303, %v815
      %v817 = vpop.f32.mrb[0].mxu0
      %818 = vmatprep.mubr.bf16.mxu0 %v459
      %819 = vmatmul.mubr.bf16.gmra.mrb[0].mxu0 %v458
      %v820 = vpop.f32.mrb[0].mxu0
      %v821 = vadd.f32 %v303, %v820
      %v822 = vpop.f32.mrb[0].mxu0
      %v823 = vpop.f32.mrb[0].mxu0
      %v824 = vadd.f32 %v303, %v823
      %v825 = vpop.f32.mrb[0].mxu0
      %826 = vmatprep.mubr.bf16.mxu0 %v464
      %827 = vmatmul.mubr.bf16.gmra.mrb[0].mxu0 %v463
      %v828 = vpop.f32.mrb[0].mxu0
      %v829 = vadd.f32 %v303, %v828
      %v830 = vpop.f32.mrb[0].mxu0
      %v831 = vpop.f32.mrb[0].mxu0
      %v832 = vadd.f32 %v303, %v831
      %v833 = vpop.f32.mrb[0].mxu0
      %834 = vmatprep.mubr.bf16.mxu0 %v469
      %835 = vmatmul.mubr.bf16.gmra.mrb[0].mxu0 %v468
      %v836 = vpop.f32.mrb[0].mxu0
      %v837 = vadd.f32 %v303, %v836
      %v838 = vpop.f32.mrb[0].mxu0
      %v839 = vpop.f32.mrb[0].mxu0
      %v840 = vadd.f32 %v303, %v839
      %v841 = vpop.f32.mrb[0].mxu0
      %842 = vdwg.mxu0
      %843 = vmatprep.subr.bf16.mxu0 0
      %844 = vmatpush1.bf16.msra.mxu0 %v665
      %845 = vmatprep.subr.bf16.mxu0 0
      %846 = vmatpush1.bf16.msra.mxu0 %v666
      %847 = vmatprep.subr.bf16.mxu0 0
      %848 = vmatpush1.bf16.msra.mxu0 %v667
      %849 = vmatprep.subr.bf16.mxu0 0
      %850 = vmatpush1.bf16.msra.mxu0 %v668
      %851 = vmatprep.subr.bf16.mxu0 0
      %852 = vmatpush1.bf16.msra.mxu0 %v669
      %853 = vmatprep.subr.bf16.mxu0 0
      %854 = vmatpush1.bf16.msra.mxu0 %v670
      %855 = vmatprep.subr.bf16.mxu0 0
      %856 = vmatpush1.bf16.msra.mxu0 %v671
      %857 = vmatprep.subr.bf16.mxu0 0
      %858 = vmatpush1.bf16.msra.mxu0 %v672
      %859 = vmatprep.subr.bf16.mxu0 0
      %860 = vmatpush1.bf16.msra.mxu0 %v673
      %861 = vmatprep.subr.bf16.mxu0 0
      %862 = vmatpush1.bf16.msra.mxu0 %v674
      %863 = vmatprep.subr.bf16.mxu0 0
      %864 = vmatpush1.bf16.msra.mxu0 %v675
      %865 = vmatprep.subr.bf16.mxu0 0
      %866 = vmatpush1.bf16.msra.mxu0 %v676
      %867 = vmatprep.subr.bf16.mxu0 0
      %868 = vmatpush1.bf16.msra.mxu0 %v677
      %869 = vmatprep.subr.bf16.mxu0 0
      %870 = vmatpush1.bf16.msra.mxu0 %v678
      %871 = vmatprep.subr.bf16.mxu0 0
      %872 = vmatpush1.bf16.msra.mxu0 %v679
      %873 = vmatprep.subr.bf16.mxu0 0
      %874 = vmatpush1.bf16.msra.mxu0 %v680
      %875 = vmatprep.mubr.bf16.mxu0 %v436
      %876 = vmatmul.mubr.bf16.gmra.mrb[0].mxu0 %v435
      %v877 = vpop.f32.mrb[0].mxu0
      %v878 = vadd.f32 %v781, %v877
      %v879 = vpop.f32.mrb[0].mxu0
      %v880 = vpop.f32.mrb[0].mxu0
      %v881 = vadd.f32 %v784, %v880
      %v882 = vpop.f32.mrb[0].mxu0
      %883 = vmatprep.mubr.bf16.mxu0 %v441
      %884 = vmatmul.mubr.bf16.gmra.mrb[0].mxu0 %v440
      %v885 = vpop.f32.mrb[0].mxu0
      %v886 = vadd.f32 %v789, %v885
      %v887 = vpop.f32.mrb[0].mxu0
      %v888 = vpop.f32.mrb[0].mxu0
      %v889 = vadd.f32 %v792, %v888
      %v890 = vpop.f32.mrb[0].mxu0
      %891 = vmatprep.mubr.bf16.mxu0 %v446
      %892 = vmatmul.mubr.bf16.gmra.mrb[0].mxu0 %v445
      %v893 = vpop.f32.mrb[0].mxu0
      %v894 = vadd.f32 %v797, %v893
      %v895 = vpop.f32.mrb[0].mxu0
      %v896 = vpop.f32.mrb[0].mxu0
      %v897 = vadd.f32 %v800, %v896
      %v898 = vpop.f32.mrb[0].mxu0
      %899 = vmatprep.mubr.bf16.mxu0 %v451
      %900 = vmatmul.mubr.bf16.gmra.mrb[0].mxu0 %v450
      %v901 = vpop.f32.mrb[0].mxu0
      %v902 = vadd.f32 %v805, %v901
      %v903 = vpop.f32.mrb[0].mxu0
      %v904 = vpop.f32.mrb[0].mxu0
      %v905 = vadd.f32 %v808, %v904
      %v906 = vpop.f32.mrb[0].mxu0
      %907 = vmatprep.mubr.bf16.mxu0 %v456
      %908 = vmatmul.mubr.bf16.gmra.mrb[0].mxu0 %v455
      %v909 = vpop.f32.mrb[0].mxu0
      %v910 = vadd.f32 %v813, %v909
      %v911 = vpop.f32.mrb[0].mxu0
      %v912 = vpop.f32.mrb[0].mxu0
      %v913 = vadd.f32 %v816, %v912
      %v914 = vpop.f32.mrb[0].mxu0
      %915 = vmatprep.mubr.bf16.mxu0 %v461
      %916 = vmatmul.mubr.bf16.gmra.mrb[0].mxu0 %v460
      %v917 = vpop.f32.mrb[0].mxu0
      %v918 = vadd.f32 %v821, %v917
      %v919 = vpop.f32.mrb[0].mxu0
      %v920 = vpop.f32.mrb[0].mxu0
      %v921 = vadd.f32 %v824, %v920
      %v922 = vpop.f32.mrb[0].mxu0
      %923 = vmatprep.mubr.bf16.mxu0 %v466
      %924 = vmatmul.mubr.bf16.gmra.mrb[0].mxu0 %v465
      %v925 = vpop.f32.mrb[0].mxu0
      %v926 = vadd.f32 %v829, %v925
      %v927 = vpop.f32.mrb[0].mxu0
      %v928 = vpop.f32.mrb[0].mxu0
      %v929 = vadd.f32 %v832, %v928
      %v930 = vpop.f32.mrb[0].mxu0
      %931 = vmatprep.mubr.bf16.mxu0 %v471
      %932 = vmatmul.mubr.bf16.gmra.mrb[0].mxu0 %v470
      %v933 = vpop.f32.mrb[0].mxu0
      %v934 = vadd.f32 %v837, %v933
      %v935 = vpop.f32.mrb[0].mxu0
      %v936 = vpop.f32.mrb[0].mxu0
      %v937 = vadd.f32 %v840, %v936
      %v938 = vpop.f32.mrb[0].mxu0
      %939 = vdwg.mxu0
      %940 = vmatprep.subr.bf16.mxu0 0
      %941 = vmatpush1.bf16.msra.mxu0 %v681
      %942 = vmatprep.subr.bf16.mxu0 0
      %943 = vmatpush1.bf16.msra.mxu0 %v682
      %944 = vmatprep.subr.bf16.mxu0 0
      %945 = vmatpush1.bf16.msra.mxu0 %v683
      %946 = vmatprep.subr.bf16.mxu0 0
      %947 = vmatpush1.bf16.msra.mxu0 %v684
      %948 = vmatprep.subr.bf16.mxu0 0
      %949 = vmatpush1.bf16.msra.mxu0 0
      %950 = vmatprep.subr.bf16.mxu0 0
      %951 = vmatpush1.bf16.msra.mxu0 0
      %952 = vmatprep.subr.bf16.mxu0 0
      %953 = vmatpush1.bf16.msra.mxu0 0
      %954 = vmatprep.subr.bf16.mxu0 0
      %955 = vmatpush1.bf16.msra.mxu0 0
      %956 = vmatprep.subr.bf16.mxu0 0
      %957 = vmatpush1.bf16.msra.mxu0 0
      %958 = vmatprep.subr.bf16.mxu0 0
      %959 = vmatpush1.bf16.msra.mxu0 0
      %960 = vmatprep.subr.bf16.mxu0 0
      %961 = vmatpush1.bf16.msra.mxu0 0
      %962 = vmatprep.subr.bf16.mxu0 0
      %963 = vmatpush1.bf16.msra.mxu0 0
      %964 = vmatprep.subr.bf16.mxu0 0
      %965 = vmatpush1.bf16.msra.mxu0 0
      %966 = vmatprep.subr.bf16.mxu0 0
      %967 = vmatpush1.bf16.msra.mxu0 0
      %968 = vmatprep.subr.bf16.mxu0 0
      %969 = vmatpush1.bf16.msra.mxu0 0
      %970 = vmatprep.subr.bf16.mxu0 0
      %971 = vmatpush1.bf16.msra.mxu0 0
      %972 = vmatprep.mubr.bf16.mxu0 0
      %973 = vmatmul.mubr.bf16.gmra.mrb[0].mxu0 %v723
      %v974 = vpop.f32.mrb[0].mxu0
      %v975 = vadd.f32 %v878, %v974
      %v976 = vpop.f32.mrb[0].mxu0
      %v977 = vpop.f32.mrb[0].mxu0
      %v978 = vadd.f32 %v881, %v977
      %v979 = vpop.f32.mrb[0].mxu0
      %980 = vmatprep.mubr.bf16.mxu0 0
      %981 = vmatmul.mubr.bf16.gmra.mrb[0].mxu0 %v726
      %v982 = vpop.f32.mrb[0].mxu0
      %v983 = vadd.f32 %v886, %v982
      %v984 = vpop.f32.mrb[0].mxu0
      %v985 = vpop.f32.mrb[0].mxu0
      %v986 = vadd.f32 %v889, %v985
      %v987 = vpop.f32.mrb[0].mxu0
      %988 = vmatprep.mubr.bf16.mxu0 0
      %989 = vmatmul.mubr.bf16.gmra.mrb[0].mxu0 %v729
      %v990 = vpop.f32.mrb[0].mxu0
      %v991 = vadd.f32 %v894, %v990
      %v992 = vpop.f32.mrb[0].mxu0
      %v993 = vpop.f32.mrb[0].mxu0
      %v994 = vadd.f32 %v897, %v993
      %v995 = vpop.f32.mrb[0].mxu0
      %996 = vmatprep.mubr.bf16.mxu0 0
      %997 = vmatmul.mubr.bf16.gmra.mrb[0].mxu0 %v732
      %v998 = vpop.f32.mrb[0].mxu0
      %v999 = vadd.f32 %v902, %v998
      %v1000 = vpop.f32.mrb[0].mxu0
      %v1001 = vpop.f32.mrb[0].mxu0
      %v1002 = vadd.f32 %v905, %v1001
      %v1003 = vpop.f32.mrb[0].mxu0
      %1004 = vmatprep.mubr.bf16.mxu0 0
      %1005 = vmatmul.mubr.bf16.gmra.mrb[0].mxu0 %v735
      %v1006 = vpop.f32.mrb[0].mxu0
      %v1007 = vadd.f32 %v910, %v1006
      %v1008 = vpop.f32.mrb[0].mxu0
      %v1009 = vpop.f32.mrb[0].mxu0
      %v1010 = vadd.f32 %v913, %v1009
      %v1011 = vpop.f32.mrb[0].mxu0
      %1012 = vmatprep.mubr.bf16.mxu0 0
      %1013 = vmatmul.mubr.bf16.gmra.mrb[0].mxu0 %v738
      %v1014 = vpop.f32.mrb[0].mxu0
      %v1015 = vadd.f32 %v918, %v1014
      %v1016 = vpop.f32.mrb[0].mxu0
      %v1017 = vpop.f32.mrb[0].mxu0
      %v1018 = vadd.f32 %v921, %v1017
      %v1019 = vpop.f32.mrb[0].mxu0
      %1020 = vmatprep.mubr.bf16.mxu0 0
      %1021 = vmatmul.mubr.bf16.gmra.mrb[0].mxu0 %v741
      %v1022 = vpop.f32.mrb[0].mxu0
      %v1023 = vadd.f32 %v926, %v1022
      %v1024 = vpop.f32.mrb[0].mxu0
      %v1025 = vpop.f32.mrb[0].mxu0
      %v1026 = vadd.f32 %v929, %v1025
      %v1027 = vpop.f32.mrb[0].mxu0
      %1028 = vmatprep.mubr.bf16.mxu0 0
      %1029 = vmatmul.mubr.bf16.gmra.mrb[0].mxu0 %v744
      %v1030 = vpop.f32.mrb[0].mxu0
      %v1031 = vadd.f32 %v934, %v1030
      %v1032 = vpop.f32.mrb[0].mxu0
      %v1033 = vpop.f32.mrb[0].mxu0
      %v1034 = vadd.f32 %v937, %v1033
      %v1035 = vpop.f32.mrb[0].mxu0
      %1036 = vdwg.mxu0
      %v1037 = vmax.f32 %v975, 0.0
      %v1038 = vmax.f32 %v978, 0.0
      %v1039 = vmax.f32 %v983, 0.0
      %v1040 = vmax.f32 %v986, 0.0
      %v1041 = vmax.f32 %v991, 0.0
      %v1042 = vmax.f32 %v994, 0.0
      %v1043 = vmax.f32 %v999, 0.0
      %v1044 = vmax.f32 %v1002, 0.0
      %v1045 = vmax.f32 %v1007, 0.0
      %v1046 = vmax.f32 %v1010, 0.0
      %v1047 = vmax.f32 %v1015, 0.0
      %v1048 = vmax.f32 %v1018, 0.0
      %v1049 = vmax.f32 %v1023, 0.0
      %v1050 = vmax.f32 %v1026, 0.0
      %v1051 = vmax.f32 %v1031, 0.0
      %v1052 = vmax.f32 %v1034, 0.0
      %v1053 = vpack.c.bf16 %v1038, %v1037
      %v1054 = vpack.c.bf16 %v1040, %v1039
      %v1055 = vpack.c.bf16 %v1042, %v1041
      %v1056 = vpack.c.bf16 %v1044, %v1043
      %v1057 = vpack.c.bf16 %v1046, %v1045
      %v1058 = vpack.c.bf16 %v1048, %v1047
      %v1059 = vpack.c.bf16 %v1050, %v1049
      %v1060 = vpack.c.bf16 %v1052, %v1051
      %v1069 = vunpack.c.l.b16 %v1053
      %v1070 = vunpack.c.h.b16 %v1053
      %v1071 = vunpack.c.l.b16 %v1054
      %v1072 = vunpack.c.h.b16 %v1054
      %v1073 = vunpack.c.l.b16 %v1055
      %v1074 = vunpack.c.h.b16 %v1055
      %v1075 = vunpack.c.l.b16 %v1056
      %v1076 = vunpack.c.h.b16 %v1056
      %v1077 = vunpack.c.l.b16 %v1057
      %v1078 = vunpack.c.h.b16 %v1057
      %v1079 = vunpack.c.l.b16 %v1058
      %v1080 = vunpack.c.h.b16 %v1058
      %v1081 = vunpack.c.l.b16 %v1059
      %v1082 = vunpack.c.h.b16 %v1059
      %v1083 = vunpack.c.l.b16 %v1060
      %v1084 = vunpack.c.h.b16 %v1060
      %v1085 = vpack.c.b16 %v1069, %v1069
      %v1086 = vpack.c.b16 %v1070, %v1070
      %v1087 = vpack.c.b16 %v1071, %v1071
      %v1088 = vpack.c.b16 %v1072, %v1072
      %v1089 = vpack.c.b16 %v1073, %v1073
      %v1090 = vpack.c.b16 %v1074, %v1074
      %v1091 = vpack.c.b16 %v1075, %v1075
      %v1092 = vpack.c.b16 %v1076, %v1076
      %v1093 = vpack.c.b16 %v1077, %v1077
      %v1094 = vpack.c.b16 %v1078, %v1078
      %v1095 = vpack.c.b16 %v1079, %v1079
      %v1096 = vpack.c.b16 %v1080, %v1080
      %v1097 = vpack.c.b16 %v1081, %v1081
      %v1098 = vpack.c.b16 %v1082, %v1082
      %v1099 = vpack.c.b16 %v1083, %v1083
      %v1100 = vpack.c.b16 %v1084, %v1084
      %vm1117 = vcmask 519168
      %1118 = vst.msk [vmem:[%s175] sm:$0xf] %vm1117, %v1085
      %1119 = vst.msk [vmem:[%s175 + $0x4] sm:$0xf] %vm1117, %v1086
      %1120 = vst.msk [vmem:[%s175 + $0x8] sm:$0xf] %vm1117, %v1087
      %1121 = vst.msk [vmem:[%s175 + $0xc] sm:$0xf] %vm1117, %v1088
      %1122 = vst.msk [vmem:[%s175 + $0x10] sm:$0xf] %vm1117, %v1089
      %1123 = vst.msk [vmem:[%s175 + $0x14] sm:$0xf] %vm1117, %v1090
      %1124 = vst.msk [vmem:[%s175 + $0x18] sm:$0xf] %vm1117, %v1091
      %1125 = vst.msk [vmem:[%s175 + $0x1c] sm:$0xf] %vm1117, %v1092
      %1126 = vst.msk [vmem:[%s175 + $0x20] sm:$0xf] %vm1117, %v1093
      %1127 = vst.msk [vmem:[%s175 + $0x24] sm:$0xf] %vm1117, %v1094
      %1128 = vst.msk [vmem:[%s175 + $0x28] sm:$0xf] %vm1117, %v1095
      %1129 = vst.msk [vmem:[%s175 + $0x2c] sm:$0xf] %vm1117, %v1096
      %1130 = vst.msk [vmem:[%s175 + $0x30] sm:$0xf] %vm1117, %v1097
      %1131 = vst.msk [vmem:[%s175 + $0x34] sm:$0xf] %vm1117, %v1098
      %1132 = vst.msk [vmem:[%s175 + $0x38] sm:$0xf] %vm1117, %v1099
      %1133 = vst.msk [vmem:[%s175 + $0x3c] sm:$0xf] %vm1117, %v1100
      %s1134 = smul.u32 16, %s14
      %p1135 = scmp.lt.s32.totalorder %s1134, 31
      %s1136 = scalar_select %p1135, %s1134, 31
      %s1137 = smul.addr %s1136, 4
      %s1138 = scalar_lea.vmem %s3, %s1137
      // Predicated region
      $region33: #{value_forward.6} parent=31 // pred_check
        %p1139 = pneg %p100
      $region34: #{value_forward.6} parent=31 // pred_check_branch
        %1141 = sbr.rel (%p1139) target = $region36
      $region35: #{value_forward.6} parent=31 // pred_region
        %s1142 = smul.u32 16, %s14
      $region36: #{value_forward.6} parent=31 // pred_fallthru
        _
    $region32: #{value_forward.6} parent=5 // pred_fallthru
      _
    %p1143 = scmp.le.s32.totalorder 2, %s9
    // Predicated region
    $region37: #{value_forward.6} parent=5 // pred_check
      %p1144 = pneg %p1143
    $region38: #{value_forward.6} parent=5 // pred_check_branch
      %1146 = sbr.rel (%p1144) target = $region40
    $region39: #{value_forward.6} parent=5 // pred_region
      %s1147 = ssub.s32 %s9, 2
      // Predicated region
      $region41: #{value_forward.6} parent=39 // pred_check
        %p1148 = pneg %p106
      $region42: #{value_forward.6} parent=39 // pred_check_branch
        %1150 = sbr.rel (%p1148) target = $region44
      $region43: #{value_forward.6} parent=39 // pred_region
        %s1151 = smul.u32 16, %s15
        %p1152 = scmp.lt.s32.totalorder %s1151, 31
        %s1153 = scalar_select %p1152, %s1151, 31
        %s1154 = smul.addr %s1153, 4
        %s1155 = scalar_lea.vmem %s3, %s1154
      $region44: #{value_forward.6} parent=39 // pred_fallthru
        _
    $region40: #{value_forward.6} parent=5 // pred_fallthru
      _
  $region6: #{value_forward.6} parent=0 // loop_footer
    %s13 = sadd.s32 1, %s9
  $region7: #{value_forward.6} parent=0 // loop_footer_branch
    %8 = sbr.rel target = $region3
  $region8: #{value_forward.6} parent=0 // loop_exit
    _

// kernel: value_forward.7
$region0: #{value_forward.7}
  #allocation0 [shape = 'u32[]', space=smem, size = 0x4, offset = 0x4, fixed_abs, tag = 'smem constant byte address 0x4 - core index']
  #allocation1 [shape = 'u32[144,128]{1,0:T(1,128)}', space=vmem, size = 0x12000, scoped, tag = 'internal scratch']
  #allocation2 [shape = 'f32[16,512]{1,0:T(8,128)}', space=vmem, size = 0x8000, scoped, tag = 'scratch operand']
  %s0 = inlined_call_operand.vmem [shape: bf16[16,5120], index: 0, kind: input, shape index: {}]
  %s1 = inlined_call_operand.vmem [shape: bf16[5120,512], index: 1, kind: input, shape index: {}]
  %s2 = inlined_call_operand.vmem [shape: f32[1,512], index: 2, kind: input, shape index: {}]
  %s3 = inlined_call_operand.vmem [shape: bf16[16,128], index: 3, kind: input, shape index: {}]
  %s4 = inlined_call_operand.vmem [shape: bf16[128,192], index: 4, kind: input, shape index: {}]
  %s5 = inlined_call_operand.vmem [shape: f32[1,192], index: 5, kind: input, shape index: {}]
  %s6 = inlined_call_operand.vmem [shape: bf16[512,512], index: 6, kind: input, shape index: {}]
  %s7 = inlined_call_operand.vmem [shape: bf16[192,512], index: 7, kind: input, shape index: {}]
  %s8 = inlined_call_operand.vmem [shape: f32[1,512], index: 8, kind: input, shape index: {}]
  %s9 = inlined_call_operand.vmem [shape: bf16[512,128], index: 9, kind: input, shape index: {}]
  %s10 = inlined_call_operand.vmem [shape: f32[1,128], index: 10, kind: input, shape index: {}]
  %s11 = inlined_call_operand.vmem [shape: f32[16,128], index: 11, kind: output, shape index: {}]
  %s12 = sld [smem:[#allocation0]]
  $region111: #{value_forward.7} parent=0
    _
  %s14 = ssub.s32 1, %s12
  %s15 = scalar_select 0, %s14, %s12
  $region1: #{value_forward.7} parent=0
    #allocation3 [shape = 'u8[40960]{0}', space=vmem, size = 0xa000, scoped, tag = 'input window, operand 0']
    loop: start=0, step=1, limit=10
    $region2: #{value_forward.7} parent=1 // loop_pre_header
      _
    $region3: #{value_forward.7} parent=1 // loop_header
      %s17 = sphi 0, %s21
      %p18 = scmp.ge.s32.totalorder %s17, 10
      %s27 = sphi 0, %s29
      %s30 = sphi 0, %s27
      %s31 = sphi 0, %s30
      %s47 = sphi 0, %s31
      %s53 = sphi 0, %s55
      %s56 = sphi 0, %s53
      %s57 = sphi 0, %s56
      %s73 = sphi 0, %s57
      %s77 = sphi 0, %s77
      %s79 = sphi 0, %s77
      %s80 = sphi 0, %s79
      %s94 = sphi 0, %s80
      %s98 = sphi 0, %s98
      %s100 = sphi 0, %s98
      %s101 = sphi 0, %s100
      %s115 = sphi 0, %s101
      %s119 = sphi 0, %s119
      %s121 = sphi 0, %s119
      %s122 = sphi 0, %s121
      %s136 = sphi 0, %s122
      %s140 = sphi 0, %s140
      %s142 = sphi 0, %s140
      %s143 = sphi 0, %s142
      %s157 = sphi 0, %s143
      %s161 = sphi 0, %s161
      %s163 = sphi 0, %s161
      %s164 = sphi 0, %s163
      %s178 = sphi 0, %s164
      %s182 = sphi 0, %s182
      %s184 = sphi 0, %s182
      %s185 = sphi 0, %s184
      %s199 = sphi 0, %s185
      %s203 = sphi 0, %s203
      %s205 = sphi 0, %s203
      %s206 = sphi 0, %s205
      %s220 = sphi 0, %s206
      %s224 = sphi 0, %s224
      %s226 = sphi 0, %s224
      %s227 = sphi 0, %s226
      %s241 = sphi 0, %s227
      %s245 = sphi 0, %s245
      %s247 = sphi 0, %s245
      %s248 = sphi 0, %s247
      %s262 = sphi 0, %s248
      %s266 = sphi 0, %s266
      %s268 = sphi 0, %s266
      %s269 = sphi 0, %s268
      %s283 = sphi 0, %s269
    $region4: #{value_forward.7} parent=1 // loop_header_branch
      %20 = sbr.rel (%p18) target = $region8
    $region5: #{value_forward.7} parent=1 // loop_body
      %s22 = ssub.s32 %s17, 1
      %s23 = ssub.s32 %s17, 2
      %s24 = sadd.s32 %s17, 1
      %s25 = ssub.s32 %s17, %s24
      %p26 = scmp.eq.s32.totalorder %s25, 0
      %s28 = sadd.s32 %s27, 1
      %s29 = scalar_select %p26, %s27, %s28
      %p32 = pneg %p26
      %p33 = scmp.eq.s32.totalorder %s17, 7
      %p34 = por %p32, %p33
      %p35 = scmp.ne.s32.totalorder %s27, %s30
      %p36 = scmp.eq.s32.totalorder %s17, 0
      %p37 = por %p35, %p36
      %p38 = scmp.ne.s32.totalorder %s27, %s30
      %p39 = scmp.eq.s32.totalorder %s22, 7
      %p40 = por %p38, %p39
      %p41 = scmp.ne.s32.totalorder %s30, %s31
      %p42 = scmp.eq.s32.totalorder %s22, 0
      %p43 = por %p41, %p42
      %p44 = scmp.ne.s32.totalorder %s30, %s31
      %p45 = scmp.eq.s32.totalorder %s23, 7
      %p46 = por %p44, %p45
      %p48 = scmp.ne.s32.totalorder %s31, %s47
      %p49 = scmp.eq.s32.totalorder %s23, 0
      %p50 = por %p48, %p49
      %s51 = ssub.s32 %s17, %s24
      %p52 = scmp.eq.s32.totalorder %s51, 0
      %s54 = sadd.s32 %s53, 1
      %s55 = scalar_select %p52, %s53, %s54
      %p58 = pneg %p52
      %p59 = scmp.eq.s32.totalorder %s17, 7
      %p60 = por %p58, %p59
      %p61 = scmp.ne.s32.totalorder %s53, %s56
      %p62 = scmp.eq.s32.totalorder %s17, 0
      %p63 = por %p61, %p62
      %p64 = scmp.ne.s32.totalorder %s53, %s56
      %p65 = scmp.eq.s32.totalorder %s22, 7
      %p66 = por %p64, %p65
      %p67 = scmp.ne.s32.totalorder %s56, %s57
      %p68 = scmp.eq.s32.totalorder %s22, 0
      %p69 = por %p67, %p68
      %p70 = scmp.ne.s32.totalorder %s56, %s57
      %p71 = scmp.eq.s32.totalorder %s23, 7
      %p72 = por %p70, %p71
      %p74 = scmp.ne.s32.totalorder %s57, %s73
      %p75 = scmp.eq.s32.totalorder %s23, 0
      %p76 = por %p74, %p75
      %s78 = sadd.s32 %s77, 1
      %p81 = scmp.eq.s32.totalorder %s17, 7
      %p82 = scmp.ne.s32.totalorder %s77, %s79
      %p83 = scmp.eq.s32.totalorder %s17, 0
      %p84 = por %p82, %p83
      %p85 = scmp.ne.s32.totalorder %s77, %s79
      %p86 = scmp.eq.s32.totalorder %s22, 7
      %p87 = por %p85, %p86
      %p88 = scmp.ne.s32.totalorder %s79, %s80
      %p89 = scmp.eq.s32.totalorder %s22, 0
      %p90 = por %p88, %p89
      %p91 = scmp.ne.s32.totalorder %s79, %s80
      %p92 = scmp.eq.s32.totalorder %s23, 7
      %p93 = por %p91, %p92
      %p95 = scmp.ne.s32.totalorder %s80, %s94
      %p96 = scmp.eq.s32.totalorder %s23, 0
      %p97 = por %p95, %p96
      %s99 = sadd.s32 %s98, 1
      %p102 = scmp.eq.s32.totalorder %s17, 7
      %p103 = scmp.ne.s32.totalorder %s98, %s100
      %p104 = scmp.eq.s32.totalorder %s17, 0
      %p105 = por %p103, %p104
      %p106 = scmp.ne.s32.totalorder %s98, %s100
      %p107 = scmp.eq.s32.totalorder %s22, 7
      %p108 = por %p106, %p107
      %p109 = scmp.ne.s32.totalorder %s100, %s101
      %p110 = scmp.eq.s32.totalorder %s22, 0
      %p111 = por %p109, %p110
      %p112 = scmp.ne.s32.totalorder %s100, %s101
      %p113 = scmp.eq.s32.totalorder %s23, 7
      %p114 = por %p112, %p113
      %p116 = scmp.ne.s32.totalorder %s101, %s115
      %p117 = scmp.eq.s32.totalorder %s23, 0
      %p118 = por %p116, %p117
      %s120 = sadd.s32 %s119, 1
      %p123 = scmp.eq.s32.totalorder %s17, 7
      %p124 = scmp.ne.s32.totalorder %s119, %s121
      %p125 = scmp.eq.s32.totalorder %s17, 0
      %p126 = por %p124, %p125
      %p127 = scmp.ne.s32.totalorder %s119, %s121
      %p128 = scmp.eq.s32.totalorder %s22, 7
      %p129 = por %p127, %p128
      %p130 = scmp.ne.s32.totalorder %s121, %s122
      %p131 = scmp.eq.s32.totalorder %s22, 0
      %p132 = por %p130, %p131
      %p133 = scmp.ne.s32.totalorder %s121, %s122
      %p134 = scmp.eq.s32.totalorder %s23, 7
      %p135 = por %p133, %p134
      %p137 = scmp.ne.s32.totalorder %s122, %s136
      %p138 = scmp.eq.s32.totalorder %s23, 0
      %p139 = por %p137, %p138
      %s141 = sadd.s32 %s140, 1
      %p144 = scmp.eq.s32.totalorder %s17, 7
      %p145 = scmp.ne.s32.totalorder %s140, %s142
      %p146 = scmp.eq.s32.totalorder %s17, 0
      %p147 = por %p145, %p146
      %p148 = scmp.ne.s32.totalorder %s140, %s142
      %p149 = scmp.eq.s32.totalorder %s22, 7
      %p150 = por %p148, %p149
      %p151 = scmp.ne.s32.totalorder %s142, %s143
      %p152 = scmp.eq.s32.totalorder %s22, 0
      %p153 = por %p151, %p152
      %p154 = scmp.ne.s32.totalorder %s142, %s143
      %p155 = scmp.eq.s32.totalorder %s23, 7
      %p156 = por %p154, %p155
      %p158 = scmp.ne.s32.totalorder %s143, %s157
      %p159 = scmp.eq.s32.totalorder %s23, 0
      %p160 = por %p158, %p159
      %s162 = sadd.s32 %s161, 1
      %p165 = scmp.eq.s32.totalorder %s17, 7
      %p166 = scmp.ne.s32.totalorder %s161, %s163
      %p167 = scmp.eq.s32.totalorder %s17, 0
      %p168 = por %p166, %p167
      %p169 = scmp.ne.s32.totalorder %s161, %s163
      %p170 = scmp.eq.s32.totalorder %s22, 7
      %p171 = por %p169, %p170
      %p172 = scmp.ne.s32.totalorder %s163, %s164
      %p173 = scmp.eq.s32.totalorder %s22, 0
      %p174 = por %p172, %p173
      %p175 = scmp.ne.s32.totalorder %s163, %s164
      %p176 = scmp.eq.s32.totalorder %s23, 7
      %p177 = por %p175, %p176
      %p179 = scmp.ne.s32.totalorder %s164, %s178
      %p180 = scmp.eq.s32.totalorder %s23, 0
      %p181 = por %p179, %p180
      %s183 = sadd.s32 %s182, 1
      %p186 = scmp.eq.s32.totalorder %s17, 7
      %p187 = scmp.ne.s32.totalorder %s182, %s184
      %p188 = scmp.eq.s32.totalorder %s17, 0
      %p189 = por %p187, %p188
      %p190 = scmp.ne.s32.totalorder %s182, %s184
      %p191 = scmp.eq.s32.totalorder %s22, 7
      %p192 = por %p190, %p191
      %p193 = scmp.ne.s32.totalorder %s184, %s185
      %p194 = scmp.eq.s32.totalorder %s22, 0
      %p195 = por %p193, %p194
      %p196 = scmp.ne.s32.totalorder %s184, %s185
      %p197 = scmp.eq.s32.totalorder %s23, 7
      %p198 = por %p196, %p197
      %p200 = scmp.ne.s32.totalorder %s185, %s199
      %p201 = scmp.eq.s32.totalorder %s23, 0
      %p202 = por %p200, %p201
      %s204 = sadd.s32 %s203, 1
      %p207 = scmp.eq.s32.totalorder %s17, 7
      %p208 = scmp.ne.s32.totalorder %s203, %s205
      %p209 = scmp.eq.s32.totalorder %s17, 0
      %p210 = por %p208, %p209
      %p211 = scmp.ne.s32.totalorder %s203, %s205
      %p212 = scmp.eq.s32.totalorder %s22, 7
      %p213 = por %p211, %p212
      %p214 = scmp.ne.s32.totalorder %s205, %s206
      %p215 = scmp.eq.s32.totalorder %s22, 0
      %p216 = por %p214, %p215
      %p217 = scmp.ne.s32.totalorder %s205, %s206
      %p218 = scmp.eq.s32.totalorder %s23, 7
      %p219 = por %p217, %p218
      %p221 = scmp.ne.s32.totalorder %s206, %s220
      %p222 = scmp.eq.s32.totalorder %s23, 0
      %p223 = por %p221, %p222
      %s225 = sadd.s32 %s224, 1
      %p228 = scmp.eq.s32.totalorder %s17, 7
      %p229 = scmp.ne.s32.totalorder %s224, %s226
      %p230 = scmp.eq.s32.totalorder %s17, 0
      %p231 = por %p229, %p230
      %p232 = scmp.ne.s32.totalorder %s224, %s226
      %p233 = scmp.eq.s32.totalorder %s22, 7
      %p234 = por %p232, %p233
      %p235 = scmp.ne.s32.totalorder %s226, %s227
      %p236 = scmp.eq.s32.totalorder %s22, 0
      %p237 = por %p235, %p236
      %p238 = scmp.ne.s32.totalorder %s226, %s227
      %p239 = scmp.eq.s32.totalorder %s23, 7
      %p240 = por %p238, %p239
      %p242 = scmp.ne.s32.totalorder %s227, %s241
      %p243 = scmp.eq.s32.totalorder %s23, 0
      %p244 = por %p242, %p243
      %s246 = sadd.s32 %s245, 1
      %p249 = scmp.eq.s32.totalorder %s17, 7
      %p250 = scmp.ne.s32.totalorder %s245, %s247
      %p251 = scmp.eq.s32.totalorder %s17, 0
      %p252 = por %p250, %p251
      %p253 = scmp.ne.s32.totalorder %s245, %s247
      %p254 = scmp.eq.s32.totalorder %s22, 7
      %p255 = por %p253, %p254
      %p256 = scmp.ne.s32.totalorder %s247, %s248
      %p257 = scmp.eq.s32.totalorder %s22, 0
      %p258 = por %p256, %p257
      %p259 = scmp.ne.s32.totalorder %s247, %s248
      %p260 = scmp.eq.s32.totalorder %s23, 7
      %p261 = por %p259, %p260
      %p263 = scmp.ne.s32.totalorder %s248, %s262
      %p264 = scmp.eq.s32.totalorder %s23, 0
      %p265 = por %p263, %p264
      %s267 = sadd.s32 %s266, 1
      %p270 = scmp.eq.s32.totalorder %s17, 7
      %p271 = scmp.ne.s32.totalorder %s266, %s268
      %p272 = scmp.eq.s32.totalorder %s17, 0
      %p273 = por %p271, %p272
      %p274 = scmp.ne.s32.totalorder %s266, %s268
      %p275 = scmp.eq.s32.totalorder %s22, 7
      %p276 = por %p274, %p275
      %p277 = scmp.ne.s32.totalorder %s268, %s269
      %p278 = scmp.eq.s32.totalorder %s22, 0
      %p279 = por %p277, %p278
      %p280 = scmp.ne.s32.totalorder %s268, %s269
      %p281 = scmp.eq.s32.totalorder %s23, 7
      %p282 = por %p280, %p281
      %p284 = scmp.ne.s32.totalorder %s269, %s283
      %p285 = scmp.eq.s32.totalorder %s23, 0
      %p286 = por %p284, %p285
      %p287 = scmp.le.s32.totalorder 1, %s17
      %p288 = scmp.lt.s32.totalorder %s17, 9
      %p289 = pnand %p287, %p288
      %p290 = pneg %p289
      // Predicated region
      $region9: #{value_forward.7} parent=5 // pred_check
        _
      $region10: #{value_forward.7} parent=5 // pred_check_branch
        %292 = sbr.rel (%p289) target = $region12
      $region11: #{value_forward.7} parent=5 // pred_region
        %s293 = ssub.s32 %s17, 1
        // Predicated region
        $region13: #{value_forward.7} parent=11 // pred_check
          %p294 = pneg %p90
        $region14: #{value_forward.7} parent=11 // pred_check_branch
          %296 = sbr.rel (%p294) target = $region16
        $region15: #{value_forward.7} parent=11 // pred_region
          _
        $region16: #{value_forward.7} parent=11 // pred_fallthru
          _
        // Predicated region
        $region17: #{value_forward.7} parent=11 // pred_check
          %p297 = pneg %p111
        $region18: #{value_forward.7} parent=11 // pred_check_branch
          %299 = sbr.rel (%p297) target = $region20
        $region19: #{value_forward.7} parent=11 // pred_region
          _
        $region20: #{value_forward.7} parent=11 // pred_fallthru
          _
        // Predicated region
        $region21: #{value_forward.7} parent=11 // pred_check
          %p300 = pneg %p132
        $region22: #{value_forward.7} parent=11 // pred_check_branch
          %302 = sbr.rel (%p300) target = $region24
        $region23: #{value_forward.7} parent=11 // pred_region
          _
        $region24: #{value_forward.7} parent=11 // pred_fallthru
          _
        // Predicated region
        $region25: #{value_forward.7} parent=11 // pred_check
          %p303 = pneg %p153
        $region26: #{value_forward.7} parent=11 // pred_check_branch
          %305 = sbr.rel (%p303) target = $region28
        $region27: #{value_forward.7} parent=11 // pred_region
          _
        $region28: #{value_forward.7} parent=11 // pred_fallthru
          _
        // Predicated region
        $region29: #{value_forward.7} parent=11 // pred_check
          %p306 = pneg %p174
        $region30: #{value_forward.7} parent=11 // pred_check_branch
          %308 = sbr.rel (%p306) target = $region32
        $region31: #{value_forward.7} parent=11 // pred_region
          _
        $region32: #{value_forward.7} parent=11 // pred_fallthru
          _
        // Predicated region
        $region33: #{value_forward.7} parent=11 // pred_check
          %p309 = pneg %p195
        $region34: #{value_forward.7} parent=11 // pred_check_branch
          %311 = sbr.rel (%p309) target = $region36
        $region35: #{value_forward.7} parent=11 // pred_region
          _
        $region36: #{value_forward.7} parent=11 // pred_fallthru
          _
        // Predicated region
        $region37: #{value_forward.7} parent=11 // pred_check
          %p312 = pneg %p216
        $region38: #{value_forward.7} parent=11 // pred_check_branch
          %314 = sbr.rel (%p312) target = $region40
        $region39: #{value_forward.7} parent=11 // pred_region
          _
        $region40: #{value_forward.7} parent=11 // pred_fallthru
          _
        // Predicated region
        $region41: #{value_forward.7} parent=11 // pred_check
          %p315 = pneg %p237
        $region42: #{value_forward.7} parent=11 // pred_check_branch
          %317 = sbr.rel (%p315) target = $region44
        $region43: #{value_forward.7} parent=11 // pred_region
          _
        $region44: #{value_forward.7} parent=11 // pred_fallthru
          _
        // Predicated region
        $region45: #{value_forward.7} parent=11 // pred_check
          %p318 = pneg %p258
        $region46: #{value_forward.7} parent=11 // pred_check_branch
          %320 = sbr.rel (%p318) target = $region48
        $region47: #{value_forward.7} parent=11 // pred_region
          _
        $region48: #{value_forward.7} parent=11 // pred_fallthru
          _
      $region12: #{value_forward.7} parent=5 // pred_fallthru
        _
      %p321 = scmp.lt.s32.totalorder %s17, 8
      // Predicated region
      $region49: #{value_forward.7} parent=5 // pred_check
        %p322 = pneg %p321
      $region50: #{value_forward.7} parent=5 // pred_check_branch
        %324 = sbr.rel (%p322) target = $region52
      $region51: #{value_forward.7} parent=5 // pred_region
        // Predicated region
        $region53: #{value_forward.7} parent=51 // pred_check
          %p325 = pneg %p37
        $region54: #{value_forward.7} parent=51 // pred_check_branch
          %327 = sbr.rel (%p325) target = $region56
        $region55: #{value_forward.7} parent=51 // pred_region
          %s328 = sand.u32 %s27, 1
          %s329 = sand.u32 %s27, 1
          %s330 = smul.addr %s329, 40
          %s331 = scalar_lea.vmem [#allocation3], %s330
          %s332 = smul.u32 5, %s17
          %s333 = smul.addr %s332, 4
          %s334 = scalar_lea.vmem %s0, %s333
          // Predicated region
          $region57: #{value_forward.7} parent=55 // pred_check
            _
          $region58: #{value_forward.7} parent=55 // pred_check_branch
            %336 = sbr.rel (0) target = $region60
          $region59: #{value_forward.7} parent=55 // pred_region
            // Predicated region
            $region61: #{value_forward.7} parent=59 // pred_check
              _
            $region62: #{value_forward.7} parent=59 // pred_check_branch
              %338 = sbr.rel (0) target = $region64
            $region63: #{value_forward.7} parent=59 // pred_region
              %s339 = scalar_lea.vmem %s334, 16
              %s340 = scalar_lea.vmem %s331, 16 [#allocation3]
              loop: start=0, step=1, limit=1
              $region65: #{value_forward.7} parent=63 // loop_pre_header
                _
              $region66: #{value_forward.7} parent=63 // loop_header
                %s342 = sphi 0, %s346
                %p343 = scmp.ge.s32.totalorder %s342, 1
                %s347 = sphi %s334, %s334
                %s348 = sphi %s331, %s331
              $region67: #{value_forward.7} parent=63 // loop_header_branch
                %345 = sbr.rel (%p343) target = $region71
              $region68: #{value_forward.7} parent=63 // loop_body
                %v349 = vld [vmem:[%s347] sm:$0xff]
                %350 = vst [vmem:[%s348] sm:$0xff] %v349
                %v351 = vld [vmem:[%s347 + $0x8] sm:$0xff]
                %352 = vst [vmem:[%s348 + $0x8] sm:$0xff] %v351
                %v353 = vld [vmem:[%s347 + $0xa0] sm:$0xff]
                %354 = vst [vmem:[%s348 + $0x14] sm:$0xff] %v353
                %v355 = vld [vmem:[%s347 + $0xa8] sm:$0xff]
                %356 = vst [vmem:[%s348 + $0x1c] sm:$0xff] %v355
              $region69: #{value_forward.7} parent=63 // loop_footer
                %s346 = sadd.s32 1, %s342
              $region70: #{value_forward.7} parent=63 // loop_footer_branch
                %341 = sbr.rel target = $region66
              $region71: #{value_forward.7} parent=63 // loop_exit
                _
              loop: start=0, step=1, limit=1
              $region72: #{value_forward.7} parent=63 // loop_pre_header
                _
              $region73: #{value_forward.7} parent=63 // loop_header
                %s359 = sphi 0, %s363
                %p360 = scmp.ge.s32.totalorder %s359, 1
                %s364 = sphi %s339, %s339
                %s365 = sphi %s340, %s340
              $region74: #{value_forward.7} parent=63 // loop_header_branch
                %362 = sbr.rel (%p360) target = $region78
              $region75: #{value_forward.7} parent=63 // loop_body
                %v366 = vld [vmem:[%s364] sm:$0xf]
                %367 = vst [vmem:[%s365] sm:$0xf] %v366
                %v368 = vld [vmem:[%s364 + $0xa0] sm:$0xf]
                %369 = vst [vmem:[%s365 + $0x14] sm:$0xf] %v368
              $region76: #{value_forward.7} parent=63 // loop_footer
                %s363 = sadd.s32 1, %s359
              $region77: #{value_forward.7} parent=63 // loop_footer_branch
                %358 = sbr.rel target = $region73
              $region78: #{value_forward.7} parent=63 // loop_exit
                _
            $region64: #{value_forward.7} parent=59 // pred_fallthru
              _
          $region60: #{value_forward.7} parent=55 // pred_fallthru
            _
          %370 = vnop
        $region56: #{value_forward.7} parent=51 // pred_fallthru
          _
        // Predicated region
        $region79: #{value_forward.7} parent=51 // pred_check
          %p371 = pneg %p63
        $region80: #{value_forward.7} parent=51 // pred_check_branch
          %373 = sbr.rel (%p371) target = $region82
        $region81: #{value_forward.7} parent=51 // pred_region
          %s374 = smul.u32 80, %s17
          %p375 = scmp.lt.s32.totalorder %s374, 639
          %s376 = scalar_select %p375, %s374, 639
          %s377 = smul.addr %s376, 4
          %s378 = smul.addr %s377, 4
          %s379 = scalar_lea.vmem %s1, %s378
          %s380 = smul.u32 80, %s17
        $region82: #{value_forward.7} parent=51 // pred_fallthru
          _
      $region52: #{value_forward.7} parent=5 // pred_fallthru
        _
      %p381 = scmp.le.s32.totalorder 1, %s17
      %p382 = scmp.lt.s32.totalorder %s17, 9
      %p383 = pnand %p381, %p382
      %p384 = pneg %p383
      // Predicated region
      $region83: #{value_forward.7} parent=5 // pred_check
        _
      $region84: #{value_forward.7} parent=5 // pred_check_branch
        %386 = sbr.rel (%p383) target = $region86
      $region85: #{value_forward.7} parent=5 // pred_region
        %s387 = ssub.s32 %s17, 1
        %s388 = sand.u32 %s30, 1
        %s389 = sand.u32 %s30, 1
        %s390 = smul.addr %s389, 40
        %s391 = scalar_lea.vmem [#allocation3], %s390
        // Predicated region
        $region87: #{value_forward.7} parent=85 // pred_check
          %p392 = pneg %p43
        $region88: #{value_forward.7} parent=85 // pred_check_branch
          %394 = sbr.rel (%p392) target = $region90
        $region89: #{value_forward.7} parent=85 // pred_region
          _
        $region90: #{value_forward.7} parent=85 // pred_fallthru
          _
        %s395 = sand.u32 %s30, 1
        %s396 = sand.u32 %s30, 1
        %s397 = smul.addr %s396, 40
        %s398 = scalar_lea.vmem [#allocation3], %s397
        %p399 = pneg %p43
        %p400 = pneg %p40
        %s401 = smul.u32 80, %s22
        %p402 = scmp.lt.s32.totalorder %s401, 639
        %s403 = scalar_select %p402, %s401, 639
        %s404 = smul.addr %s403, 4
        %s405 = smul.addr %s404, 4
        %s406 = scalar_lea.vmem %s1, %s405
        %p407 = pneg %p69
        %p408 = pneg %p66
        %p409 = pneg %p90
        %p410 = pneg %p87
        %p411 = pneg %p111
        %p412 = pneg %p108
        %p413 = pneg %p132
        %p414 = pneg %p129
        %p415 = pneg %p153
        %p416 = pneg %p150
        %p417 = pneg %p174
        %p418 = pneg %p171
        %p419 = pneg %p195
        %p420 = pneg %p192
        %p421 = pneg %p216
        %p422 = pneg %p213
        %p423 = pneg %p237
        %p424 = pneg %p234
        %p425 = pneg %p258
        %p426 = pneg %p255
        %p427 = pneg %p279
        %p428 = pneg %p276
        %s429 = smul.u32 5, %s22
        %s430 = smul.u32 80, %s22
        %p431 = scmp.lt.s32.totalorder %s430, 639
        %s432 = scalar_select %p431, %s430, 639
        %s433 = smul.addr %s432, 4
        %s434 = smul.addr %s433, 4
        %s435 = scalar_lea.vmem %s1, %s434
        %s436 = smul.u32 80, %s22
        %p438 = scmp.eq.s32.totalorder %s22, 0
        // Predicated region
        $region91: #{value_forward.7} parent=85 // pred_check
          %p439 = pneg %p438
        $region92: #{value_forward.7} parent=85 // pred_check_branch
          %441 = sbr.rel (%p439) target = $region94
        $region93: #{value_forward.7} parent=85 // pred_region
          %442 = vst [vmem:[#allocation2] sm:$0xff] 0.0
          %443 = vst [vmem:[#allocation2 + $0x8] sm:$0xff] 0.0
          %444 = vst [vmem:[#allocation2 + $0x10] sm:$0xff] 0.0
          %445 = vst [vmem:[#allocation2 + $0x18] sm:$0xff] 0.0
          %446 = vst [vmem:[#allocation2 + $0x20] sm:$0xff] 0.0
          %447 = vst [vmem:[#allocation2 + $0x28] sm:$0xff] 0.0
          %448 = vst [vmem:[#allocation2 + $0x30] sm:$0xff] 0.0
          %449 = vst [vmem:[#allocation2 + $0x38] sm:$0xff] 0.0
        $region94: #{value_forward.7} parent=85 // pred_fallthru
          _
        %v450 = vld [vmem:[#allocation2] sm:$0xff]
        %v451 = vld [vmem:[#allocation2 + $0x8] sm:$0xff]
        %v452 = vld [vmem:[#allocation2 + $0x10] sm:$0xff]
        %v453 = vld [vmem:[#allocation2 + $0x18] sm:$0xff]
        %v454 = vld [vmem:[#allocation2 + $0x20] sm:$0xff]
        %v455 = vld [vmem:[#allocation2 + $0x28] sm:$0xff]
        %v456 = vld [vmem:[#allocation2 + $0x30] sm:$0xff]
        %v457 = vld [vmem:[#allocation2 + $0x38] sm:$0xff]
        %v458 = vld [vmem:[%s391] sm:$0xff]
        %v459 = vld [vmem:[%s391 + $0x8] sm:$0xff]
        %v460 = vld [vmem:[%s391 + $0x10] sm:$0xf]
        %v461 = vld [vmem:[%s391 + $0x14] sm:$0xff]
        %v462 = vld [vmem:[%s391 + $0x1c] sm:$0xff]
        %v463 = vld [vmem:[%s391 + $0x24] sm:$0xf]
        %v464 = vld [vmem:[%s435] sm:$0xff]
        %v465 = vld [vmem:[%s435 + $0x8] sm:$0xff]
        %v466 = vld [vmem:[%s435 + $0x10] sm:$0xff]
        %v467 = vld [vmem:[%s435 + $0x18] sm:$0xff]
        %v468 = vld [vmem:[%s435 + $0x20] sm:$0xff]
        %v469 = vld [vmem:[%s435 + $0x28] sm:$0xff]
        %v470 = vld [vmem:[%s435 + $0x30] sm:$0xff]
        %v471 = vld [vmem:[%s435 + $0x38] sm:$0xff]
        %v472 = vld [vmem:[%s435 + $0x40] sm:$0xff]
        %v473 = vld [vmem:[%s435 + $0x48] sm:$0xff]
        %v474 = vld [vmem:[%s435 + $0x50] sm:$0xff]
        %v475 = vld [vmem:[%s435 + $0x58] sm:$0xff]
        %v476 = vld [vmem:[%s435 + $0x60] sm:$0xff]
        %v477 = vld [vmem:[%s435 + $0x68] sm:$0xff]
        %v478 = vld [vmem:[%s435 + $0x70] sm:$0xff]
        %v479 = vld [vmem:[%s435 + $0x78] sm:$0xff]
        %v480 = vld [vmem:[%s435 + $0x80] sm:$0xff]
        %v481 = vld [vmem:[%s435 + $0x88] sm:$0xff]
        %v482 = vld [vmem:[%s435 + $0x90] sm:$0xff]
        %v483 = vld [vmem:[%s435 + $0x98] sm:$0xff]
        %v484 = vld [vmem:[%s435 + $0xa0] sm:$0xff]
        %v485 = vld [vmem:[%s435 + $0xa8] sm:$0xff]
        %v486 = vld [vmem:[%s435 + $0xb0] sm:$0xff]
        %v487 = vld [vmem:[%s435 + $0xb8] sm:$0xff]
        %v488 = vld [vmem:[%s435 + $0xc0] sm:$0xff]
        %v489 = vld [vmem:[%s435 + $0xc8] sm:$0xff]
        %v490 = vld [vmem:[%s435 + $0xd0] sm:$0xff]
        %v491 = vld [vmem:[%s435 + $0xd8] sm:$0xff]
        %v492 = vld [vmem:[%s435 + $0xe0] sm:$0xff]
        %v493 = vld [vmem:[%s435 + $0xe8] sm:$0xff]
        %v494 = vld [vmem:[%s435 + $0xf0] sm:$0xff]
        %v495 = vld [vmem:[%s435 + $0xf8] sm:$0xff]
        %v496 = vld [vmem:[%s435 + $0x100] sm:$0xff]
        %v497 = vld [vmem:[%s435 + $0x108] sm:$0xff]
        %v498 = vld [vmem:[%s435 + $0x110] sm:$0xff]
        %v499 = vld [vmem:[%s435 + $0x118] sm:$0xff]
        %v500 = vld [vmem:[%s435 + $0x120] sm:$0xff]
        %v501 = vld [vmem:[%s435 + $0x128] sm:$0xff]
        %v502 = vld [vmem:[%s435 + $0x130] sm:$0xff]
        %v503 = vld [vmem:[%s435 + $0x138] sm:$0xff]
        %v504 = vld [vmem:[%s435 + $0x140] sm:$0xff]
        %v505 = vld [vmem:[%s435 + $0x148] sm:$0xff]
        %v506 = vld [vmem:[%s435 + $0x150] sm:$0xff]
        %v507 = vld [vmem:[%s435 + $0x158] sm:$0xff]
        %v508 = vld [vmem:[%s435 + $0x160] sm:$0xff]
        %v509 = vld [vmem:[%s435 + $0x168] sm:$0xff]
        %v510 = vld [vmem:[%s435 + $0x170] sm:$0xff]
        %v511 = vld [vmem:[%s435 + $0x178] sm:$0xff]
        %v512 = vld [vmem:[%s435 + $0x180] sm:$0xff]
        %v513 = vld [vmem:[%s435 + $0x188] sm:$0xff]
        %v514 = vld [vmem:[%s435 + $0x190] sm:$0xff]
        %v515 = vld [vmem:[%s435 + $0x198] sm:$0xff]
        %v516 = vld [vmem:[%s435 + $0x1a0] sm:$0xff]
        %v517 = vld [vmem:[%s435 + $0x1a8] sm:$0xff]
        %v518 = vld [vmem:[%s435 + $0x1b0] sm:$0xff]
        %v519 = vld [vmem:[%s435 + $0x1b8] sm:$0xff]
        %v520 = vld [vmem:[%s435 + $0x1c0] sm:$0xff]
        %v521 = vld [vmem:[%s435 + $0x1c8] sm:$0xff]
        %v522 = vld [vmem:[%s435 + $0x1d0] sm:$0xff]
        %v523 = vld [vmem:[%s435 + $0x1d8] sm:$0xff]
        %v524 = vld [vmem:[%s435 + $0x1e0] sm:$0xff]
        %v525 = vld [vmem:[%s435 + $0x1e8] sm:$0xff]
        %v526 = vld [vmem:[%s435 + $0x1f0] sm:$0xff]
        %v527 = vld [vmem:[%s435 + $0x1f8] sm:$0xff]
        %v528 = vld [vmem:[%s435 + $0x200] sm:$0xff]
        %v529 = vld [vmem:[%s435 + $0x208] sm:$0xff]
        %v530 = vld [vmem:[%s435 + $0x210] sm:$0xff]
        %v531 = vld [vmem:[%s435 + $0x218] sm:$0xff]
        %v532 = vld [vmem:[%s435 + $0x220] sm:$0xff]
        %v533 = vld [vmem:[%s435 + $0x228] sm:$0xff]
        %v534 = vld [vmem:[%s435 + $0x230] sm:$0xff]
        %v535 = vld [vmem:[%s435 + $0x238] sm:$0xff]
        %v536 = vld [vmem:[%s435 + $0x240] sm:$0xff]
        %v537 = vld [vmem:[%s435 + $0x248] sm:$0xff]
        %v538 = vld [vmem:[%s435 + $0x250] sm:$0xff]
        %v539 = vld [vmem:[%s435 + $0x258] sm:$0xff]
        %v540 = vld [vmem:[%s435 + $0x260] sm:$0xff]
        %v541 = vld [vmem:[%s435 + $0x268] sm:$0xff]
        %v542 = vld [vmem:[%s435 + $0x270] sm:$0xff]
        %v543 = vld [vmem:[%s435 + $0x278] sm:$0xff]
        %v544 = vld [vmem:[%s435 + $0x280] sm:$0xff]
        %v545 = vld [vmem:[%s435 + $0x288] sm:$0xff]
        %v546 = vld [vmem:[%s435 + $0x290] sm:$0xff]
        %v547 = vld [vmem:[%s435 + $0x298] sm:$0xff]
        %v548 = vld [vmem:[%s435 + $0x2a0] sm:$0xff]
        %v549 = vld [vmem:[%s435 + $0x2a8] sm:$0xff]
        %v550 = vld [vmem:[%s435 + $0x2b0] sm:$0xff]
        %v551 = vld [vmem:[%s435 + $0x2b8] sm:$0xff]
        %v552 = vld [vmem:[%s435 + $0x2c0] sm:$0xff]
        %v553 = vld [vmem:[%s435 + $0x2c8] sm:$0xff]
        %v554 = vld [vmem:[%s435 + $0x2d0] sm:$0xff]
        %v555 = vld [vmem:[%s435 + $0x2d8] sm:$0xff]
        %v556 = vld [vmem:[%s435 + $0x2e0] sm:$0xff]
        %v557 = vld [vmem:[%s435 + $0x2e8] sm:$0xff]
        %v558 = vld [vmem:[%s435 + $0x2f0] sm:$0xff]
        %v559 = vld [vmem:[%s435 + $0x2f8] sm:$0xff]
        %v560 = vld [vmem:[%s435 + $0x300] sm:$0xff]
        %v561 = vld [vmem:[%s435 + $0x308] sm:$0xff]
        %v562 = vld [vmem:[%s435 + $0x310] sm:$0xff]
        %v563 = vld [vmem:[%s435 + $0x318] sm:$0xff]
        %v564 = vld [vmem:[%s435 + $0x320] sm:$0xff]
        %v565 = vld [vmem:[%s435 + $0x328] sm:$0xff]
        %v566 = vld [vmem:[%s435 + $0x330] sm:$0xff]
        %v567 = vld [vmem:[%s435 + $0x338] sm:$0xff]
        %v568 = vld [vmem:[%s435 + $0x340] sm:$0xff]
        %v569 = vld [vmem:[%s435 + $0x348] sm:$0xff]
        %v570 = vld [vmem:[%s435 + $0x350] sm:$0xff]
        %v571 = vld [vmem:[%s435 + $0x358] sm:$0xff]
        %v572 = vld [vmem:[%s435 + $0x360] sm:$0xff]
        %v573 = vld [vmem:[%s435 + $0x368] sm:$0xff]
        %v574 = vld [vmem:[%s435 + $0x370] sm:$0xff]
        %v575 = vld [vmem:[%s435 + $0x378] sm:$0xff]
        %v576 = vld [vmem:[%s435 + $0x380] sm:$0xff]
        %v577 = vld [vmem:[%s435 + $0x388] sm:$0xff]
        %v578 = vld [vmem:[%s435 + $0x390] sm:$0xff]
        %v579 = vld [vmem:[%s435 + $0x398] sm:$0xff]
        %v580 = vld [vmem:[%s435 + $0x3a0] sm:$0xff]
        %v581 = vld [vmem:[%s435 + $0x3a8] sm:$0xff]
        %v582 = vld [vmem:[%s435 + $0x3b0] sm:$0xff]
        %v583 = vld [vmem:[%s435 + $0x3b8] sm:$0xff]
        %v584 = vld [vmem:[%s435 + $0x3c0] sm:$0xff]
        %v585 = vld [vmem:[%s435 + $0x3c8] sm:$0xff]
        %v586 = vld [vmem:[%s435 + $0x3d0] sm:$0xff]
        %v587 = vld [vmem:[%s435 + $0x3d8] sm:$0xff]
        %v588 = vld [vmem:[%s435 + $0x3e0] sm:$0xff]
        %v589 = vld [vmem:[%s435 + $0x3e8] sm:$0xff]
        %v590 = vld [vmem:[%s435 + $0x3f0] sm:$0xff]
        %v591 = vld [vmem:[%s435 + $0x3f8] sm:$0xff]
        %v592 = vld [vmem:[%s435 + $0x400] sm:$0xff]
        %v593 = vld [vmem:[%s435 + $0x408] sm:$0xff]
        %v594 = vld [vmem:[%s435 + $0x410] sm:$0xff]
        %v595 = vld [vmem:[%s435 + $0x418] sm:$0xff]
        %v596 = vld [vmem:[%s435 + $0x420] sm:$0xff]
        %v597 = vld [vmem:[%s435 + $0x428] sm:$0xff]
        %v598 = vld [vmem:[%s435 + $0x430] sm:$0xff]
        %v599 = vld [vmem:[%s435 + $0x438] sm:$0xff]
        %v600 = vld [vmem:[%s435 + $0x440] sm:$0xff]
        %v601 = vld [vmem:[%s435 + $0x448] sm:$0xff]
        %v602 = vld [vmem:[%s435 + $0x450] sm:$0xff]
        %v603 = vld [vmem:[%s435 + $0x458] sm:$0xff]
        %v604 = vld [vmem:[%s435 + $0x460] sm:$0xff]
        %v605 = vld [vmem:[%s435 + $0x468] sm:$0xff]
        %v606 = vld [vmem:[%s435 + $0x470] sm:$0xff]
        %v607 = vld [vmem:[%s435 + $0x478] sm:$0xff]
        %v608 = vld [vmem:[%s435 + $0x480] sm:$0xff]
        %v609 = vld [vmem:[%s435 + $0x488] sm:$0xff]
        %v610 = vld [vmem:[%s435 + $0x490] sm:$0xff]
        %v611 = vld [vmem:[%s435 + $0x498] sm:$0xff]
        %v612 = vld [vmem:[%s435 + $0x4a0] sm:$0xff]
        %v613 = vld [vmem:[%s435 + $0x4a8] sm:$0xff]
        %v614 = vld [vmem:[%s435 + $0x4b0] sm:$0xff]
        %v615 = vld [vmem:[%s435 + $0x4b8] sm:$0xff]
        %v616 = vld [vmem:[%s435 + $0x4c0] sm:$0xff]
        %v617 = vld [vmem:[%s435 + $0x4c8] sm:$0xff]
        %v618 = vld [vmem:[%s435 + $0x4d0] sm:$0xff]
        %v619 = vld [vmem:[%s435 + $0x4d8] sm:$0xff]
        %v620 = vld [vmem:[%s435 + $0x4e0] sm:$0xff]
        %v621 = vld [vmem:[%s435 + $0x4e8] sm:$0xff]
        %v622 = vld [vmem:[%s435 + $0x4f0] sm:$0xff]
        %v623 = vld [vmem:[%s435 + $0x4f8] sm:$0xff]
        %v630 = vunpack.c.l.b16 %v458
        %v631 = vunpack.c.h.b16 %v458
        %v632 = vunpack.c.l.b16 %v459
        %v633 = vunpack.c.h.b16 %v459
        %v634 = vunpack.c.l.b16 %v460
        %v635 = vunpack.c.l.b16 %v461
        %v636 = vunpack.c.h.b16 %v461
        %v637 = vunpack.c.l.b16 %v462
        %v638 = vunpack.c.h.b16 %v462
        %v639 = vunpack.c.l.b16 %v463
        %v640 = vpack.c.b16 %v635, %v630
        %v641 = vpack.c.b16 %v636, %v631
        %v642 = vpack.c.b16 %v637, %v632
        %v643 = vpack.c.b16 %v638, %v633
        %v644 = vpack.c.b16 %v639, %v634
        %v810 = vunpack.c.l.b16 %v464
        %v811 = vunpack.c.h.b16 %v464
        %v812 = vunpack.c.l.b16 %v465
        %v813 = vunpack.c.h.b16 %v465
        %v814 = vunpack.c.l.b16 %v466
        %v815 = vunpack.c.h.b16 %v466
        %v816 = vunpack.c.l.b16 %v467
        %v817 = vunpack.c.h.b16 %v467
        %v818 = vunpack.c.l.b16 %v468
        %v819 = vunpack.c.h.b16 %v468
        %v820 = vunpack.c.l.b16 %v469
        %v821 = vunpack.c.h.b16 %v469
        %v822 = vunpack.c.l.b16 %v470
        %v823 = vunpack.c.h.b16 %v470
        %v824 = vunpack.c.l.b16 %v471
        %v825 = vunpack.c.h.b16 %v471
        %v826 = vunpack.c.l.b16 %v472
        %v827 = vunpack.c.h.b16 %v472
        %v828 = vunpack.c.l.b16 %v473
        %v829 = vunpack.c.h.b16 %v473
        %v830 = vunpack.c.l.b16 %v474
        %v831 = vunpack.c.h.b16 %v474
        %v832 = vunpack.c.l.b16 %v475
        %v833 = vunpack.c.h.b16 %v475
        %v834 = vunpack.c.l.b16 %v476
        %v835 = vunpack.c.h.b16 %v476
        %v836 = vunpack.c.l.b16 %v477
        %v837 = vunpack.c.h.b16 %v477
        %v838 = vunpack.c.l.b16 %v478
        %v839 = vunpack.c.h.b16 %v478
        %v840 = vunpack.c.l.b16 %v479
        %v841 = vunpack.c.h.b16 %v479
        %v842 = vunpack.c.l.b16 %v480
        %v843 = vunpack.c.h.b16 %v480
        %v844 = vunpack.c.l.b16 %v481
        %v845 = vunpack.c.h.b16 %v481
        %v846 = vunpack.c.l.b16 %v482
        %v847 = vunpack.c.h.b16 %v482
        %v848 = vunpack.c.l.b16 %v483
        %v849 = vunpack.c.h.b16 %v483
        %v850 = vunpack.c.l.b16 %v484
        %v851 = vunpack.c.h.b16 %v484
        %v852 = vunpack.c.l.b16 %v485
        %v853 = vunpack.c.h.b16 %v485
        %v854 = vunpack.c.l.b16 %v486
        %v855 = vunpack.c.h.b16 %v486
        %v856 = vunpack.c.l.b16 %v487
        %v857 = vunpack.c.h.b16 %v487
        %v858 = vunpack.c.l.b16 %v488
        %v859 = vunpack.c.h.b16 %v488
        %v860 = vunpack.c.l.b16 %v489
        %v861 = vunpack.c.h.b16 %v489
        %v862 = vunpack.c.l.b16 %v490
        %v863 = vunpack.c.h.b16 %v490
        %v864 = vunpack.c.l.b16 %v491
        %v865 = vunpack.c.h.b16 %v491
        %v866 = vunpack.c.l.b16 %v492
        %v867 = vunpack.c.h.b16 %v492
        %v868 = vunpack.c.l.b16 %v493
        %v869 = vunpack.c.h.b16 %v493
        %v870 = vunpack.c.l.b16 %v494
        %v871 = vunpack.c.h.b16 %v494
        %v872 = vunpack.c.l.b16 %v495
        %v873 = vunpack.c.h.b16 %v495
        %v874 = vunpack.c.l.b16 %v496
        %v875 = vunpack.c.h.b16 %v496
        %v876 = vunpack.c.l.b16 %v497
        %v877 = vunpack.c.h.b16 %v497
        %v878 = vunpack.c.l.b16 %v498
        %v879 = vunpack.c.h.b16 %v498
        %v880 = vunpack.c.l.b16 %v499
        %v881 = vunpack.c.h.b16 %v499
        %v882 = vunpack.c.l.b16 %v500
        %v883 = vunpack.c.h.b16 %v500
        %v884 = vunpack.c.l.b16 %v501
        %v885 = vunpack.c.h.b16 %v501
        %v886 = vunpack.c.l.b16 %v502
        %v887 = vunpack.c.h.b16 %v502
        %v888 = vunpack.c.l.b16 %v503
        %v889 = vunpack.c.h.b16 %v503
        %v890 = vunpack.c.l.b16 %v504
        %v891 = vunpack.c.h.b16 %v504
        %v892 = vunpack.c.l.b16 %v505
        %v893 = vunpack.c.h.b16 %v505
        %v894 = vunpack.c.l.b16 %v506
        %v895 = vunpack.c.h.b16 %v506
        %v896 = vunpack.c.l.b16 %v507
        %v897 = vunpack.c.h.b16 %v507
        %v898 = vunpack.c.l.b16 %v508
        %v899 = vunpack.c.h.b16 %v508
        %v900 = vunpack.c.l.b16 %v509
        %v901 = vunpack.c.h.b16 %v509
        %v902 = vunpack.c.l.b16 %v510
        %v903 = vunpack.c.h.b16 %v510
        %v904 = vunpack.c.l.b16 %v511
        %v905 = vunpack.c.h.b16 %v511
        %v906 = vunpack.c.l.b16 %v512
        %v907 = vunpack.c.h.b16 %v512
        %v908 = vunpack.c.l.b16 %v513
        %v909 = vunpack.c.h.b16 %v513
        %v910 = vunpack.c.l.b16 %v514
        %v911 = vunpack.c.h.b16 %v514
        %v912 = vunpack.c.l.b16 %v515
        %v913 = vunpack.c.h.b16 %v515
        %v914 = vunpack.c.l.b16 %v516
        %v915 = vunpack.c.h.b16 %v516
        %v916 = vunpack.c.l.b16 %v517
        %v917 = vunpack.c.h.b16 %v517
        %v918 = vunpack.c.l.b16 %v518
        %v919 = vunpack.c.h.b16 %v518
        %v920 = vunpack.c.l.b16 %v519
        %v921 = vunpack.c.h.b16 %v519
        %v922 = vunpack.c.l.b16 %v520
        %v923 = vunpack.c.h.b16 %v520
        %v924 = vunpack.c.l.b16 %v521
        %v925 = vunpack.c.h.b16 %v521
        %v926 = vunpack.c.l.b16 %v522
        %v927 = vunpack.c.h.b16 %v522
        %v928 = vunpack.c.l.b16 %v523
        %v929 = vunpack.c.h.b16 %v523
        %v930 = vunpack.c.l.b16 %v524
        %v931 = vunpack.c.h.b16 %v524
        %v932 = vunpack.c.l.b16 %v525
        %v933 = vunpack.c.h.b16 %v525
        %v934 = vunpack.c.l.b16 %v526
        %v935 = vunpack.c.h.b16 %v526
        %v936 = vunpack.c.l.b16 %v527
        %v937 = vunpack.c.h.b16 %v527
        %v938 = vunpack.c.l.b16 %v528
        %v939 = vunpack.c.h.b16 %v528
        %v940 = vunpack.c.l.b16 %v529
        %v941 = vunpack.c.h.b16 %v529
        %v942 = vunpack.c.l.b16 %v530
        %v943 = vunpack.c.h.b16 %v530
        %v944 = vunpack.c.l.b16 %v531
        %v945 = vunpack.c.h.b16 %v531
        %v946 = vunpack.c.l.b16 %v532
        %v947 = vunpack.c.h.b16 %v532
        %v948 = vunpack.c.l.b16 %v533
        %v949 = vunpack.c.h.b16 %v533
        %v950 = vunpack.c.l.b16 %v534
        %v951 = vunpack.c.h.b16 %v534
        %v952 = vunpack.c.l.b16 %v535
        %v953 = vunpack.c.h.b16 %v535
        %v954 = vunpack.c.l.b16 %v536
        %v955 = vunpack.c.h.b16 %v536
        %v956 = vunpack.c.l.b16 %v537
        %v957 = vunpack.c.h.b16 %v537
        %v958 = vunpack.c.l.b16 %v538
        %v959 = vunpack.c.h.b16 %v538
        %v960 = vunpack.c.l.b16 %v539
        %v961 = vunpack.c.h.b16 %v539
        %v962 = vunpack.c.l.b16 %v540
        %v963 = vunpack.c.h.b16 %v540
        %v964 = vunpack.c.l.b16 %v541
        %v965 = vunpack.c.h.b16 %v541
        %v966 = vunpack.c.l.b16 %v542
        %v967 = vunpack.c.h.b16 %v542
        %v968 = vunpack.c.l.b16 %v543
        %v969 = vunpack.c.h.b16 %v543
        %v970 = vunpack.c.l.b16 %v544
        %v971 = vunpack.c.h.b16 %v544
        %v972 = vunpack.c.l.b16 %v545
        %v973 = vunpack.c.h.b16 %v545
        %v974 = vunpack.c.l.b16 %v546
        %v975 = vunpack.c.h.b16 %v546
        %v976 = vunpack.c.l.b16 %v547
        %v977 = vunpack.c.h.b16 %v547
        %v978 = vunpack.c.l.b16 %v548
        %v979 = vunpack.c.h.b16 %v548
        %v980 = vunpack.c.l.b16 %v549
        %v981 = vunpack.c.h.b16 %v549
        %v982 = vunpack.c.l.b16 %v550
        %v983 = vunpack.c.h.b16 %v550
        %v984 = vunpack.c.l.b16 %v551
        %v985 = vunpack.c.h.b16 %v551
        %v986 = vunpack.c.l.b16 %v552
        %v987 = vunpack.c.h.b16 %v552
        %v988 = vunpack.c.l.b16 %v553
        %v989 = vunpack.c.h.b16 %v553
        %v990 = vunpack.c.l.b16 %v554
        %v991 = vunpack.c.h.b16 %v554
        %v992 = vunpack.c.l.b16 %v555
        %v993 = vunpack.c.h.b16 %v555
        %v994 = vunpack.c.l.b16 %v556
        %v995 = vunpack.c.h.b16 %v556
        %v996 = vunpack.c.l.b16 %v557
        %v997 = vunpack.c.h.b16 %v557
        %v998 = vunpack.c.l.b16 %v558
        %v999 = vunpack.c.h.b16 %v558
        %v1000 = vunpack.c.l.b16 %v559
        %v1001 = vunpack.c.h.b16 %v559
        %v1002 = vunpack.c.l.b16 %v560
        %v1003 = vunpack.c.h.b16 %v560
        %v1004 = vunpack.c.l.b16 %v561
        %v1005 = vunpack.c.h.b16 %v561
        %v1006 = vunpack.c.l.b16 %v562
        %v1007 = vunpack.c.h.b16 %v562
        %v1008 = vunpack.c.l.b16 %v563
        %v1009 = vunpack.c.h.b16 %v563
        %v1010 = vunpack.c.l.b16 %v564
        %v1011 = vunpack.c.h.b16 %v564
        %v1012 = vunpack.c.l.b16 %v565
        %v1013 = vunpack.c.h.b16 %v565
        %v1014 = vunpack.c.l.b16 %v566
        %v1015 = vunpack.c.h.b16 %v566
        %v1016 = vunpack.c.l.b16 %v567
        %v1017 = vunpack.c.h.b16 %v567
        %v1018 = vunpack.c.l.b16 %v568
        %v1019 = vunpack.c.h.b16 %v568
        %v1020 = vunpack.c.l.b16 %v569
        %v1021 = vunpack.c.h.b16 %v569
        %v1022 = vunpack.c.l.b16 %v570
        %v1023 = vunpack.c.h.b16 %v570
        %v1024 = vunpack.c.l.b16 %v571
        %v1025 = vunpack.c.h.b16 %v571
        %v1026 = vunpack.c.l.b16 %v572
        %v1027 = vunpack.c.h.b16 %v572
        %v1028 = vunpack.c.l.b16 %v573
        %v1029 = vunpack.c.h.b16 %v573
        %v1030 = vunpack.c.l.b16 %v574
        %v1031 = vunpack.c.h.b16 %v574
        %v1032 = vunpack.c.l.b16 %v575
        %v1033 = vunpack.c.h.b16 %v575
        %v1034 = vunpack.c.l.b16 %v576
        %v1035 = vunpack.c.h.b16 %v576
        %v1036 = vunpack.c.l.b16 %v577
        %v1037 = vunpack.c.h.b16 %v577
        %v1038 = vunpack.c.l.b16 %v578
        %v1039 = vunpack.c.h.b16 %v578
        %v1040 = vunpack.c.l.b16 %v579
        %v1041 = vunpack.c.h.b16 %v579
        %v1042 = vunpack.c.l.b16 %v580
        %v1043 = vunpack.c.h.b16 %v580
        %v1044 = vunpack.c.l.b16 %v581
        %v1045 = vunpack.c.h.b16 %v581
        %v1046 = vunpack.c.l.b16 %v582
        %v1047 = vunpack.c.h.b16 %v582
        %v1048 = vunpack.c.l.b16 %v583
        %v1049 = vunpack.c.h.b16 %v583
        %v1050 = vunpack.c.l.b16 %v584
        %v1051 = vunpack.c.h.b16 %v584
        %v1052 = vunpack.c.l.b16 %v585
        %v1053 = vunpack.c.h.b16 %v585
        %v1054 = vunpack.c.l.b16 %v586
        %v1055 = vunpack.c.h.b16 %v586
        %v1056 = vunpack.c.l.b16 %v587
        %v1057 = vunpack.c.h.b16 %v587
        %v1058 = vunpack.c.l.b16 %v588
        %v1059 = vunpack.c.h.b16 %v588
        %v1060 = vunpack.c.l.b16 %v589
        %v1061 = vunpack.c.h.b16 %v589
        %v1062 = vunpack.c.l.b16 %v590
        %v1063 = vunpack.c.h.b16 %v590
        %v1064 = vunpack.c.l.b16 %v591
        %v1065 = vunpack.c.h.b16 %v591
        %v1066 = vunpack.c.l.b16 %v592
        %v1067 = vunpack.c.h.b16 %v592
        %v1068 = vunpack.c.l.b16 %v593
        %v1069 = vunpack.c.h.b16 %v593
        %v1070 = vunpack.c.l.b16 %v594
        %v1071 = vunpack.c.h.b16 %v594
        %v1072 = vunpack.c.l.b16 %v595
        %v1073 = vunpack.c.h.b16 %v595
        %v1074 = vunpack.c.l.b16 %v596
        %v1075 = vunpack.c.h.b16 %v596
        %v1076 = vunpack.c.l.b16 %v597
        %v1077 = vunpack.c.h.b16 %v597
        %v1078 = vunpack.c.l.b16 %v598
        %v1079 = vunpack.c.h.b16 %v598
        %v1080 = vunpack.c.l.b16 %v599
        %v1081 = vunpack.c.h.b16 %v599
        %v1082 = vunpack.c.l.b16 %v600
        %v1083 = vunpack.c.h.b16 %v600
        %v1084 = vunpack.c.l.b16 %v601
        %v1085 = vunpack.c.h.b16 %v601
        %v1086 = vunpack.c.l.b16 %v602
        %v1087 = vunpack.c.h.b16 %v602
        %v1088 = vunpack.c.l.b16 %v603
        %v1089 = vunpack.c.h.b16 %v603
        %v1090 = vunpack.c.l.b16 %v604
        %v1091 = vunpack.c.h.b16 %v604
        %v1092 = vunpack.c.l.b16 %v605
        %v1093 = vunpack.c.h.b16 %v605
        %v1094 = vunpack.c.l.b16 %v606
        %v1095 = vunpack.c.h.b16 %v606
        %v1096 = vunpack.c.l.b16 %v607
        %v1097 = vunpack.c.h.b16 %v607
        %v1098 = vunpack.c.l.b16 %v608
        %v1099 = vunpack.c.h.b16 %v608
        %v1100 = vunpack.c.l.b16 %v609
        %v1101 = vunpack.c.h.b16 %v609
        %v1102 = vunpack.c.l.b16 %v610
        %v1103 = vunpack.c.h.b16 %v610
        %v1104 = vunpack.c.l.b16 %v611
        %v1105 = vunpack.c.h.b16 %v611
        %v1106 = vunpack.c.l.b16 %v612
        %v1107 = vunpack.c.h.b16 %v612
        %v1108 = vunpack.c.l.b16 %v613
        %v1109 = vunpack.c.h.b16 %v613
        %v1110 = vunpack.c.l.b16 %v614
        %v1111 = vunpack.c.h.b16 %v614
        %v1112 = vunpack.c.l.b16 %v615
        %v1113 = vunpack.c.h.b16 %v615
        %v1114 = vunpack.c.l.b16 %v616
        %v1115 = vunpack.c.h.b16 %v616
        %v1116 = vunpack.c.l.b16 %v617
        %v1117 = vunpack.c.h.b16 %v617
        %v1118 = vunpack.c.l.b16 %v618
        %v1119 = vunpack.c.h.b16 %v618
        %v1120 = vunpack.c.l.b16 %v619
        %v1121 = vunpack.c.h.b16 %v619
        %v1122 = vunpack.c.l.b16 %v620
        %v1123 = vunpack.c.h.b16 %v620
        %v1124 = vunpack.c.l.b16 %v621
        %v1125 = vunpack.c.h.b16 %v621
        %v1126 = vunpack.c.l.b16 %v622
        %v1127 = vunpack.c.h.b16 %v622
        %v1128 = vunpack.c.l.b16 %v623
        %v1129 = vunpack.c.h.b16 %v623
        %v1130 = vpack.c.b16 %v814, %v810
        %v1131 = vpack.c.b16 %v815, %v811
        %v1132 = vpack.c.b16 %v816, %v812
        %v1133 = vpack.c.b16 %v817, %v813
        %v1134 = vpack.c.b16 %v822, %v818
        %v1135 = vpack.c.b16 %v823, %v819
        %v1136 = vpack.c.b16 %v824, %v820
        %v1137 = vpack.c.b16 %v825, %v821
        %v1138 = vpack.c.b16 %v830, %v826
        %v1139 = vpack.c.b16 %v831, %v827
        %v1140 = vpack.c.b16 %v832, %v828
        %v1141 = vpack.c.b16 %v833, %v829
        %v1142 = vpack.c.b16 %v838, %v834
        %v1143 = vpack.c.b16 %v839, %v835
        %v1144 = vpack.c.b16 %v840, %v836
        %v1145 = vpack.c.b16 %v841, %v837
        %v1146 = vpack.c.b16 %v846, %v842
        %v1147 = vpack.c.b16 %v847, %v843
        %v1148 = vpack.c.b16 %v848, %v844
        %v1149 = vpack.c.b16 %v849, %v845
        %v1150 = vpack.c.b16 %v854, %v850
        %v1151 = vpack.c.b16 %v855, %v851
        %v1152 = vpack.c.b16 %v856, %v852
        %v1153 = vpack.c.b16 %v857, %v853
        %v1154 = vpack.c.b16 %v862, %v858
        %v1155 = vpack.c.b16 %v863, %v859
        %v1156 = vpack.c.b16 %v864, %v860
        %v1157 = vpack.c.b16 %v865, %v861
        %v1158 = vpack.c.b16 %v870, %v866
        %v1159 = vpack.c.b16 %v871, %v867
        %v1160 = vpack.c.b16 %v872, %v868
        %v1161 = vpack.c.b16 %v873, %v869
        %v1162 = vpack.c.b16 %v878, %v874
        %v1163 = vpack.c.b16 %v879, %v875
        %v1164 = vpack.c.b16 %v880, %v876
        %v1165 = vpack.c.b16 %v881, %v877
        %v1166 = vpack.c.b16 %v886, %v882
        %v1167 = vpack.c.b16 %v887, %v883
        %v1168 = vpack.c.b16 %v888, %v884
        %v1169 = vpack.c.b16 %v889, %v885
        %v1170 = vpack.c.b16 %v894, %v890
        %v1171 = vpack.c.b16 %v895, %v891
        %v1172 = vpack.c.b16 %v896, %v892
        %v1173 = vpack.c.b16 %v897, %v893
        %v1174 = vpack.c.b16 %v902, %v898
        %v1175 = vpack.c.b16 %v903, %v899
        %v1176 = vpack.c.b16 %v904, %v900
        %v1177 = vpack.c.b16 %v905, %v901
        %v1178 = vpack.c.b16 %v910, %v906
        %v1179 = vpack.c.b16 %v911, %v907
        %v1180 = vpack.c.b16 %v912, %v908
        %v1181 = vpack.c.b16 %v913, %v909
        %v1182 = vpack.c.b16 %v918, %v914
        %v1183 = vpack.c.b16 %v919, %v915
        %v1184 = vpack.c.b16 %v920, %v916
        %v1185 = vpack.c.b16 %v921, %v917
        %v1186 = vpack.c.b16 %v926, %v922
        %v1187 = vpack.c.b16 %v927, %v923
        %v1188 = vpack.c.b16 %v928, %v924
        %v1189 = vpack.c.b16 %v929, %v925
        %v1190 = vpack.c.b16 %v934, %v930
        %v1191 = vpack.c.b16 %v935, %v931
        %v1192 = vpack.c.b16 %v936, %v932
        %v1193 = vpack.c.b16 %v937, %v933
        %v1194 = vpack.c.b16 %v942, %v938
        %v1195 = vpack.c.b16 %v943, %v939
        %v1196 = vpack.c.b16 %v944, %v940
        %v1197 = vpack.c.b16 %v945, %v941
        %v1198 = vpack.c.b16 %v950, %v946
        %v1199 = vpack.c.b16 %v951, %v947
        %v1200 = vpack.c.b16 %v952, %v948
        %v1201 = vpack.c.b16 %v953, %v949
        %v1202 = vpack.c.b16 %v958, %v954
        %v1203 = vpack.c.b16 %v959, %v955
        %v1204 = vpack.c.b16 %v960, %v956
        %v1205 = vpack.c.b16 %v961, %v957
        %v1206 = vpack.c.b16 %v966, %v962
        %v1207 = vpack.c.b16 %v967, %v963
        %v1208 = vpack.c.b16 %v968, %v964
        %v1209 = vpack.c.b16 %v969, %v965
        %v1210 = vpack.c.b16 %v974, %v970
        %v1211 = vpack.c.b16 %v975, %v971
        %v1212 = vpack.c.b16 %v976, %v972
        %v1213 = vpack.c.b16 %v977, %v973
        %v1214 = vpack.c.b16 %v982, %v978
        %v1215 = vpack.c.b16 %v983, %v979
        %v1216 = vpack.c.b16 %v984, %v980
        %v1217 = vpack.c.b16 %v985, %v981
        %v1218 = vpack.c.b16 %v990, %v986
        %v1219 = vpack.c.b16 %v991, %v987
        %v1220 = vpack.c.b16 %v992, %v988
        %v1221 = vpack.c.b16 %v993, %v989
        %v1222 = vpack.c.b16 %v998, %v994
        %v1223 = vpack.c.b16 %v999, %v995
        %v1224 = vpack.c.b16 %v1000, %v996
        %v1225 = vpack.c.b16 %v1001, %v997
        %v1226 = vpack.c.b16 %v1006, %v1002
        %v1227 = vpack.c.b16 %v1007, %v1003
        %v1228 = vpack.c.b16 %v1008, %v1004
        %v1229 = vpack.c.b16 %v1009, %v1005
        %v1230 = vpack.c.b16 %v1014, %v1010
        %v1231 = vpack.c.b16 %v1015, %v1011
        %v1232 = vpack.c.b16 %v1016, %v1012
        %v1233 = vpack.c.b16 %v1017, %v1013
        %v1234 = vpack.c.b16 %v1022, %v1018
        %v1235 = vpack.c.b16 %v1023, %v1019
        %v1236 = vpack.c.b16 %v1024, %v1020
        %v1237 = vpack.c.b16 %v1025, %v1021
        %v1238 = vpack.c.b16 %v1030, %v1026
        %v1239 = vpack.c.b16 %v1031, %v1027
        %v1240 = vpack.c.b16 %v1032, %v1028
        %v1241 = vpack.c.b16 %v1033, %v1029
        %v1242 = vpack.c.b16 %v1038, %v1034
        %v1243 = vpack.c.b16 %v1039, %v1035
        %v1244 = vpack.c.b16 %v1040, %v1036
        %v1245 = vpack.c.b16 %v1041, %v1037
        %v1246 = vpack.c.b16 %v1046, %v1042
        %v1247 = vpack.c.b16 %v1047, %v1043
        %v1248 = vpack.c.b16 %v1048, %v1044
        %v1249 = vpack.c.b16 %v1049, %v1045
        %v1250 = vpack.c.b16 %v1054, %v1050
        %v1251 = vpack.c.b16 %v1055, %v1051
        %v1252 = vpack.c.b16 %v1056, %v1052
        %v1253 = vpack.c.b16 %v1057, %v1053
        %v1254 = vpack.c.b16 %v1062, %v1058
        %v1255 = vpack.c.b16 %v1063, %v1059
        %v1256 = vpack.c.b16 %v1064, %v1060
        %v1257 = vpack.c.b16 %v1065, %v1061
        %v1258 = vpack.c.b16 %v1070, %v1066
        %v1259 = vpack.c.b16 %v1071, %v1067
        %v1260 = vpack.c.b16 %v1072, %v1068
        %v1261 = vpack.c.b16 %v1073, %v1069
        %v1262 = vpack.c.b16 %v1078, %v1074
        %v1263 = vpack.c.b16 %v1079, %v1075
        %v1264 = vpack.c.b16 %v1080, %v1076
        %v1265 = vpack.c.b16 %v1081, %v1077
        %v1266 = vpack.c.b16 %v1086, %v1082
        %v1267 = vpack.c.b16 %v1087, %v1083
        %v1268 = vpack.c.b16 %v1088, %v1084
        %v1269 = vpack.c.b16 %v1089, %v1085
        %v1270 = vpack.c.b16 %v1094, %v1090
        %v1271 = vpack.c.b16 %v1095, %v1091
        %v1272 = vpack.c.b16 %v1096, %v1092
        %v1273 = vpack.c.b16 %v1097, %v1093
        %v1274 = vpack.c.b16 %v1102, %v1098
        %v1275 = vpack.c.b16 %v1103, %v1099
        %v1276 = vpack.c.b16 %v1104, %v1100
        %v1277 = vpack.c.b16 %v1105, %v1101
        %v1278 = vpack.c.b16 %v1110, %v1106
        %v1279 = vpack.c.b16 %v1111, %v1107
        %v1280 = vpack.c.b16 %v1112, %v1108
        %v1281 = vpack.c.b16 %v1113, %v1109
        %v1282 = vpack.c.b16 %v1118, %v1114
        %v1283 = vpack.c.b16 %v1119, %v1115
        %v1284 = vpack.c.b16 %v1120, %v1116
        %v1285 = vpack.c.b16 %v1121, %v1117
        %v1286 = vpack.c.b16 %v1126, %v1122
        %v1287 = vpack.c.b16 %v1127, %v1123
        %v1288 = vpack.c.b16 %v1128, %v1124
        %v1289 = vpack.c.b16 %v1129, %v1125
        %1450 = vmatprep.subr.bf16.mxu0 %v1131
        %1451 = vmatpush1.bf16.msra.mxu0 %v1130
        %1452 = vmatprep.subr.bf16.mxu0 %v1135
        %1453 = vmatpush1.bf16.msra.mxu0 %v1134
        %1454 = vmatprep.subr.bf16.mxu0 %v1139
        %1455 = vmatpush1.bf16.msra.mxu0 %v1138
        %1456 = vmatprep.subr.bf16.mxu0 %v1143
        %1457 = vmatpush1.bf16.msra.mxu0 %v1142
        %1458 = vmatprep.subr.bf16.mxu0 %v1147
        %1459 = vmatpush1.bf16.msra.mxu0 %v1146
        %1460 = vmatprep.subr.bf16.mxu0 %v1151
        %1461 = vmatpush1.bf16.msra.mxu0 %v1150
        %1462 = vmatprep.subr.bf16.mxu0 %v1155
        %1463 = vmatpush1.bf16.msra.mxu0 %v1154
        %1464 = vmatprep.subr.bf16.mxu0 %v1159
        %1465 = vmatpush1.bf16.msra.mxu0 %v1158
        %1466 = vmatprep.subr.bf16.mxu0 %v1163
        %1467 = vmatpush1.bf16.msra.mxu0 %v1162
        %1468 = vmatprep.subr.bf16.mxu0 %v1167
        %1469 = vmatpush1.bf16.msra.mxu0 %v1166
        %1470 = vmatprep.subr.bf16.mxu0 %v1171
        %1471 = vmatpush1.bf16.msra.mxu0 %v1170
        %1472 = vmatprep.subr.bf16.mxu0 %v1175
        %1473 = vmatpush1.bf16.msra.mxu0 %v1174
        %1474 = vmatprep.subr.bf16.mxu0 %v1179
        %1475 = vmatpush1.bf16.msra.mxu0 %v1178
        %1476 = vmatprep.subr.bf16.mxu0 %v1183
        %1477 = vmatpush1.bf16.msra.mxu0 %v1182
        %1478 = vmatprep.subr.bf16.mxu0 %v1187
        %1479 = vmatpush1.bf16.msra.mxu0 %v1186
        %1480 = vmatprep.subr.bf16.mxu0 %v1191
        %1481 = vmatpush1.bf16.msra.mxu0 %v1190
        %1482 = vmatprep.mubr.bf16.mxu0 %v641
        %1483 = vmatmul.mubr.bf16.gmra.mrb[0].mxu0 %v640
        %v1484 = vpop.f32.mrb[0].mxu0
        %v1485 = vadd.f32 0.0, %v1484
        %v1486 = vpop.f32.mrb[0].mxu0
        %v1487 = vadd.f32 0.0, %v1486
        %v1488 = vpop.f32.mrb[0].mxu0
        %v1489 = vadd.f32 0.0, %v1488
        %v1490 = vpop.f32.mrb[0].mxu0
        %v1491 = vadd.f32 0.0, %v1490
        %1492 = vdwg.mxu0
        %1493 = vmatprep.subr.bf16.mxu0 %v1195
        %1494 = vmatpush1.bf16.msra.mxu0 %v1194
        %1495 = vmatprep.subr.bf16.mxu0 %v1199
        %1496 = vmatpush1.bf16.msra.mxu0 %v1198
        %1497 = vmatprep.subr.bf16.mxu0 %v1203
        %1498 = vmatpush1.bf16.msra.mxu0 %v1202
        %1499 = vmatprep.subr.bf16.mxu0 %v1207
        %1500 = vmatpush1.bf16.msra.mxu0 %v1206
        %1501 = vmatprep.subr.bf16.mxu0 %v1211
        %1502 = vmatpush1.bf16.msra.mxu0 %v1210
        %1503 = vmatprep.subr.bf16.mxu0 %v1215
        %1504 = vmatpush1.bf16.msra.mxu0 %v1214
        %1505 = vmatprep.subr.bf16.mxu0 %v1219
        %1506 = vmatpush1.bf16.msra.mxu0 %v1218
        %1507 = vmatprep.subr.bf16.mxu0 %v1223
        %1508 = vmatpush1.bf16.msra.mxu0 %v1222
        %1509 = vmatprep.subr.bf16.mxu0 %v1227
        %1510 = vmatpush1.bf16.msra.mxu0 %v1226
        %1511 = vmatprep.subr.bf16.mxu0 %v1231
        %1512 = vmatpush1.bf16.msra.mxu0 %v1230
        %1513 = vmatprep.subr.bf16.mxu0 %v1235
        %1514 = vmatpush1.bf16.msra.mxu0 %v1234
        %1515 = vmatprep.subr.bf16.mxu0 %v1239
        %1516 = vmatpush1.bf16.msra.mxu0 %v1238
        %1517 = vmatprep.subr.bf16.mxu0 %v1243
        %1518 = vmatpush1.bf16.msra.mxu0 %v1242
        %1519 = vmatprep.subr.bf16.mxu0 %v1247
        %1520 = vmatpush1.bf16.msra.mxu0 %v1246
        %1521 = vmatprep.subr.bf16.mxu0 %v1251
        %1522 = vmatpush1.bf16.msra.mxu0 %v1250
        %1523 = vmatprep.subr.bf16.mxu0 %v1255
        %1524 = vmatpush1.bf16.msra.mxu0 %v1254
        %1525 = vmatprep.mubr.bf16.mxu0 %v643
        %1526 = vmatmul.mubr.bf16.gmra.mrb[0].mxu0 %v642
        %v1527 = vpop.f32.mrb[0].mxu0
        %v1528 = vadd.f32 %v1485, %v1527
        %v1529 = vpop.f32.mrb[0].mxu0
        %v1530 = vadd.f32 %v1487, %v1529
        %v1531 = vpop.f32.mrb[0].mxu0
        %v1532 = vadd.f32 %v1489, %v1531
        %v1533 = vpop.f32.mrb[0].mxu0
        %v1534 = vadd.f32 %v1491, %v1533
        %1535 = vdwg.mxu0
        %1536 = vmatprep.subr.bf16.mxu0 %v1259
        %1537 = vmatpush1.bf16.msra.mxu0 %v1258
        %1538 = vmatprep.subr.bf16.mxu0 %v1263
        %1539 = vmatpush1.bf16.msra.mxu0 %v1262
        %1540 = vmatprep.subr.bf16.mxu0 %v1267
        %1541 = vmatpush1.bf16.msra.mxu0 %v1266
        %1542 = vmatprep.subr.bf16.mxu0 %v1271
        %1543 = vmatpush1.bf16.msra.mxu0 %v1270
        %1544 = vmatprep.subr.bf16.mxu0 %v1275
        %1545 = vmatpush1.bf16.msra.mxu0 %v1274
        %1546 = vmatprep.subr.bf16.mxu0 %v1279
        %1547 = vmatpush1.bf16.msra.mxu0 %v1278
        %1548 = vmatprep.subr.bf16.mxu0 %v1283
        %1549 = vmatpush1.bf16.msra.mxu0 %v1282
        %1550 = vmatprep.subr.bf16.mxu0 %v1287
        %1551 = vmatpush1.bf16.msra.mxu0 %v1286
        %1552 = vmatprep.subr.bf16.mxu0 0
        %1553 = vmatpush1.bf16.msra.mxu0 0
        %1554 = vmatprep.subr.bf16.mxu0 0
        %1555 = vmatpush1.bf16.msra.mxu0 0
        %1556 = vmatprep.subr.bf16.mxu0 0
        %1557 = vmatpush1.bf16.msra.mxu0 0
        %1558 = vmatprep.subr.bf16.mxu0 0
        %1559 = vmatpush1.bf16.msra.mxu0 0
        %1560 = vmatprep.subr.bf16.mxu0 0
        %1561 = vmatpush1.bf16.msra.mxu0 0
        %1562 = vmatprep.subr.bf16.mxu0 0
        %1563 = vmatpush1.bf16.msra.mxu0 0
        %1564 = vmatprep.subr.bf16.mxu0 0
        %1565 = vmatpush1.bf16.msra.mxu0 0
        %1566 = vmatprep.subr.bf16.mxu0 0
        %1567 = vmatpush1.bf16.msra.mxu0 0
        %1568 = vmatprep.mubr.bf16.mxu0 0
        %1569 = vmatmul.mubr.bf16.gmra.mrb[0].mxu0 %v644
        %v1570 = vpop.f32.mrb[0].mxu0
        %v1571 = vadd.f32 %v1528, %v1570
        %v1572 = vpop.f32.mrb[0].mxu0
        %v1573 = vadd.f32 %v1530, %v1572
        %v1574 = vpop.f32.mrb[0].mxu0
        %v1575 = vadd.f32 %v1532, %v1574
        %v1576 = vpop.f32.mrb[0].mxu0
        %v1577 = vadd.f32 %v1534, %v1576
        %1578 = vdwg.mxu0
        %1579 = vmatprep.subr.bf16.mxu0 %v1133
        %1580 = vmatpush1.bf16.msra.mxu0 %v1132
        %1581 = vmatprep.subr.bf16.mxu0 %v1137
        %1582 = vmatpush1.bf16.msra.mxu0 %v1136
        %1583 = vmatprep.subr.bf16.mxu0 %v1141
        %1584 = vmatpush1.bf16.msra.mxu0 %v1140
        %1585 = vmatprep.subr.bf16.mxu0 %v1145
        %1586 = vmatpush1.bf16.msra.mxu0 %v1144
        %1587 = vmatprep.subr.bf16.mxu0 %v1149
        %1588 = vmatpush1.bf16.msra.mxu0 %v1148
        %1589 = vmatprep.subr.bf16.mxu0 %v1153
        %1590 = vmatpush1.bf16.msra.mxu0 %v1152
        %1591 = vmatprep.subr.bf16.mxu0 %v1157
        %1592 = vmatpush1.bf16.msra.mxu0 %v1156
        %1593 = vmatprep.subr.bf16.mxu0 %v1161
        %1594 = vmatpush1.bf16.msra.mxu0 %v1160
        %1595 = vmatprep.subr.bf16.mxu0 %v1165
        %1596 = vmatpush1.bf16.msra.mxu0 %v1164
        %1597 = vmatprep.subr.bf16.mxu0 %v1169
        %1598 = vmatpush1.bf16.msra.mxu0 %v1168
        %1599 = vmatprep.subr.bf16.mxu0 %v1173
        %1600 = vmatpush1.bf16.msra.mxu0 %v1172
        %1601 = vmatprep.subr.bf16.mxu0 %v1177
        %1602 = vmatpush1.bf16.msra.mxu0 %v1176
        %1603 = vmatprep.subr.bf16.mxu0 %v1181
        %1604 = vmatpush1.bf16.msra.mxu0 %v1180
        %1605 = vmatprep.subr.bf16.mxu0 %v1185
        %1606 = vmatpush1.bf16.msra.mxu0 %v1184
        %1607 = vmatprep.subr.bf16.mxu0 %v1189
        %1608 = vmatpush1.bf16.msra.mxu0 %v1188
        %1609 = vmatprep.subr.bf16.mxu0 %v1193
        %1610 = vmatpush1.bf16.msra.mxu0 %v1192
        %1611 = vmatprep.mubr.bf16.mxu0 %v641
        %1612 = vmatmul.mubr.bf16.gmra.mrb[0].mxu0 %v640
        %v1613 = vpop.f32.mrb[0].mxu0
        %v1614 = vadd.f32 0.0, %v1613
        %v1615 = vpop.f32.mrb[0].mxu0
        %v1616 = vadd.f32 0.0, %v1615
        %v1617 = vpop.f32.mrb[0].mxu0
        %v1618 = vadd.f32 0.0, %v1617
        %v1619 = vpop.f32.mrb[0].mxu0
        %v1620 = vadd.f32 0.0, %v1619
        %1621 = vdwg.mxu0
        %1622 = vmatprep.subr.bf16.mxu0 %v1197
        %1623 = vmatpush1.bf16.msra.mxu0 %v1196
        %1624 = vmatprep.subr.bf16.mxu0 %v1201
        %1625 = vmatpush1.bf16.msra.mxu0 %v1200
        %1626 = vmatprep.subr.bf16.mxu0 %v1205
        %1627 = vmatpush1.bf16.msra.mxu0 %v1204
        %1628 = vmatprep.subr.bf16.mxu0 %v1209
        %1629 = vmatpush1.bf16.msra.mxu0 %v1208
        %1630 = vmatprep.subr.bf16.mxu0 %v1213
        %1631 = vmatpush1.bf16.msra.mxu0 %v1212
        %1632 = vmatprep.subr.bf16.mxu0 %v1217
        %1633 = vmatpush1.bf16.msra.mxu0 %v1216
        %1634 = vmatprep.subr.bf16.mxu0 %v1221
        %1635 = vmatpush1.bf16.msra.mxu0 %v1220
        %1636 = vmatprep.subr.bf16.mxu0 %v1225
        %1637 = vmatpush1.bf16.msra.mxu0 %v1224
        %1638 = vmatprep.subr.bf16.mxu0 %v1229
        %1639 = vmatpush1.bf16.msra.mxu0 %v1228
        %1640 = vmatprep.subr.bf16.mxu0 %v1233
        %1641 = vmatpush1.bf16.msra.mxu0 %v1232
        %1642 = vmatprep.subr.bf16.mxu0 %v1237
        %1643 = vmatpush1.bf16.msra.mxu0 %v1236
        %1644 = vmatprep.subr.bf16.mxu0 %v1241
        %1645 = vmatpush1.bf16.msra.mxu0 %v1240
        %1646 = vmatprep.subr.bf16.mxu0 %v1245
        %1647 = vmatpush1.bf16.msra.mxu0 %v1244
        %1648 = vmatprep.subr.bf16.mxu0 %v1249
        %1649 = vmatpush1.bf16.msra.mxu0 %v1248
        %1650 = vmatprep.subr.bf16.mxu0 %v1253
        %1651 = vmatpush1.bf16.msra.mxu0 %v1252
        %1652 = vmatprep.subr.bf16.mxu0 %v1257
        %1653 = vmatpush1.bf16.msra.mxu0 %v1256
        %1654 = vmatprep.mubr.bf16.mxu0 %v643
        %1655 = vmatmul.mubr.bf16.gmra.mrb[0].mxu0 %v642
        %v1656 = vpop.f32.mrb[0].mxu0
        %v1657 = vadd.f32 %v1614, %v1656
        %v1658 = vpop.f32.mrb[0].mxu0
        %v1659 = vadd.f32 %v1616, %v1658
        %v1660 = vpop.f32.mrb[0].mxu0
        %v1661 = vadd.f32 %v1618, %v1660
        %v1662 = vpop.f32.mrb[0].mxu0
        %v1663 = vadd.f32 %v1620, %v1662
        %1664 = vdwg.mxu0
        %1665 = vmatprep.subr.bf16.mxu0 %v1261
        %1666 = vmatpush1.bf16.msra.mxu0 %v1260
        %1667 = vmatprep.subr.bf16.mxu0 %v1265
        %1668 = vmatpush1.bf16.msra.mxu0 %v1264
        %1669 = vmatprep.subr.bf16.mxu0 %v1269
        %1670 = vmatpush1.bf16.msra.mxu0 %v1268
        %1671 = vmatprep.subr.bf16.mxu0 %v1273
        %1672 = vmatpush1.bf16.msra.mxu0 %v1272
        %1673 = vmatprep.subr.bf16.mxu0 %v1277
        %1674 = vmatpush1.bf16.msra.mxu0 %v1276
        %1675 = vmatprep.subr.bf16.mxu0 %v1281
        %1676 = vmatpush1.bf16.msra.mxu0 %v1280
        %1677 = vmatprep.subr.bf16.mxu0 %v1285
        %1678 = vmatpush1.bf16.msra.mxu0 %v1284
        %1679 = vmatprep.subr.bf16.mxu0 %v1289
        %1680 = vmatpush1.bf16.msra.mxu0 %v1288
        %1681 = vmatprep.subr.bf16.mxu0 0
        %1682 = vmatpush1.bf16.msra.mxu0 0
        %1683 = vmatprep.subr.bf16.mxu0 0
        %1684 = vmatpush1.bf16.msra.mxu0 0
        %1685 = vmatprep.subr.bf16.mxu0 0
        %1686 = vmatpush1.bf16.msra.mxu0 0
        %1687 = vmatprep.subr.bf16.mxu0 0
        %1688 = vmatpush1.bf16.msra.mxu0 0
        %1689 = vmatprep.subr.bf16.mxu0 0
        %1690 = vmatpush1.bf16.msra.mxu0 0
        %1691 = vmatprep.subr.bf16.mxu0 0
        %1692 = vmatpush1.bf16.msra.mxu0 0
        %1693 = vmatprep.subr.bf16.mxu0 0
        %1694 = vmatpush1.bf16.msra.mxu0 0
        %1695 = vmatprep.subr.bf16.mxu0 0
        %1696 = vmatpush1.bf16.msra.mxu0 0
        %1697 = vmatprep.mubr.bf16.mxu0 0
        %1698 = vmatmul.mubr.bf16.gmra.mrb[0].mxu0 %v644
        %v1699 = vpop.f32.mrb[0].mxu0
        %v1700 = vadd.f32 %v1657, %v1699
        %v1701 = vpop.f32.mrb[0].mxu0
        %v1702 = vadd.f32 %v1659, %v1701
        %v1703 = vpop.f32.mrb[0].mxu0
        %v1704 = vadd.f32 %v1661, %v1703
        %v1705 = vpop.f32.mrb[0].mxu0
        %v1706 = vadd.f32 %v1663, %v1705
        %1707 = vdwg.mxu0
        %v1708 = vadd.f32 %v450, %v1571
        %v1709 = vadd.f32 %v451, %v1573
        %v1710 = vadd.f32 %v452, %v1700
        %v1711 = vadd.f32 %v453, %v1702
        %v1712 = vadd.f32 %v454, %v1575
        %v1713 = vadd.f32 %v455, %v1577
        %v1714 = vadd.f32 %v456, %v1704
        %v1715 = vadd.f32 %v457, %v1706
        %1716 = vst [vmem:[#allocation2] sm:$0xff] %v1708
        %1717 = vst [vmem:[#allocation2 + $0x8] sm:$0xff] %v1709
        %1718 = vst [vmem:[#allocation2 + $0x10] sm:$0xff] %v1710
        %1719 = vst [vmem:[#allocation2 + $0x18] sm:$0xff] %v1711
        %1720 = vst [vmem:[#allocation2 + $0x20] sm:$0xff] %v1712
        %1721 = vst [vmem:[#allocation2 + $0x28] sm:$0xff] %v1713
        %1722 = vst [vmem:[#allocation2 + $0x30] sm:$0xff] %v1714
        %1723 = vst [vmem:[#allocation2 + $0x38] sm:$0xff] %v1715
        %p1724 = scmp.eq.s32.totalorder %s22, 7
        // Predicated region
        $region95: #{value_forward.7} parent=85 // pred_check
          %p1725 = pneg %p1724
        $region96: #{value_forward.7} parent=85 // pred_check_branch
          %1727 = sbr.rel (%p1725) target = $region98
        $region97: #{value_forward.7} parent=85 // pred_region
          %v1728 = vld [vmem:[#allocation2] sm:$0xff]
          %v1729 = vld [vmem:[#allocation2 + $0x8] sm:$0xff]
          %v1730 = vld [vmem:[#allocation2 + $0x10] sm:$0xff]
          %v1731 = vld [vmem:[#allocation2 + $0x18] sm:$0xff]
          %v1732 = vld [vmem:[#allocation2 + $0x20] sm:$0xff]
          %v1733 = vld [vmem:[#allocation2 + $0x28] sm:$0xff]
          %v1734 = vld [vmem:[#allocation2 + $0x30] sm:$0xff]
          %v1735 = vld [vmem:[#allocation2 + $0x38] sm:$0xff]
          %v1736 = vld [vmem:[%s2] sm:$0xf]
          %v1738 = vlaneseq
          %v1739 = vshrl.u32 %v1738, 7
          %v1740 = vsub.s32 0, %v1739
          %v1741 = vrot.slane %v1736, %v1740
          %v1742 = vlaneseq
          %v1743 = vshrl.u32 %v1742, 7
          %v1744 = vsub.s32 1, %v1743
          %v1745 = vrot.slane %v1736, %v1744
          %v1746 = vlaneseq
          %v1747 = vshrl.u32 %v1746, 7
          %v1748 = vsub.s32 2, %v1747
          %v1749 = vrot.slane %v1736, %v1748
          %v1750 = vlaneseq
          %v1751 = vshrl.u32 %v1750, 7
          %v1752 = vsub.s32 3, %v1751
          %v1753 = vrot.slane %v1736, %v1752
          %v1758 = vadd.f32 %v1728, %v1741
          %v1759 = vadd.f32 %v1729, %v1745
          %v1760 = vadd.f32 %v1730, %v1749
          %v1761 = vadd.f32 %v1731, %v1753
          %v1762 = vadd.f32 %v1732, %v1741
          %v1763 = vadd.f32 %v1733, %v1745
          %v1764 = vadd.f32 %v1734, %v1749
          %v1765 = vadd.f32 %v1735, %v1753
          %v1766 = vmax.f32 %v1758, 0.0
          %v1767 = vmax.f32 %v1759, 0.0
          %v1768 = vmax.f32 %v1760, 0.0
          %v1769 = vmax.f32 %v1761, 0.0
          %v1770 = vmax.f32 %v1762, 0.0
          %v1771 = vmax.f32 %v1763, 0.0
          %v1772 = vmax.f32 %v1764, 0.0
          %v1773 = vmax.f32 %v1765, 0.0
          %v1774 = vld [vmem:[%s3] sm:$0xf]
          %v1775 = vld [vmem:[%s3 + $0x4] sm:$0xf]
          %v1776 = vld [vmem:[%s4] sm:$0xff]
          %v1777 = vld [vmem:[%s4 + $0x8] sm:$0xff]
          %v1778 = vld [vmem:[%s4 + $0x10] sm:$0xff]
          %v1779 = vld [vmem:[%s4 + $0x18] sm:$0xff]
          %v1780 = vld [vmem:[%s4 + $0x20] sm:$0xff]
          %v1781 = vld [vmem:[%s4 + $0x28] sm:$0xff]
          %v1782 = vld [vmem:[%s4 + $0x30] sm:$0xff]
          %v1783 = vld [vmem:[%s4 + $0x38] sm:$0xff]
          %v1784 = vld [vmem:[%s4 + $0x40] sm:$0xff]
          %v1785 = vld [vmem:[%s4 + $0x48] sm:$0xff]
          %v1786 = vld [vmem:[%s4 + $0x50] sm:$0xff]
          %v1787 = vld [vmem:[%s4 + $0x58] sm:$0xff]
          %v1788 = vld [vmem:[%s4 + $0x60] sm:$0xff]
          %v1789 = vld [vmem:[%s4 + $0x68] sm:$0xff]
          %v1790 = vld [vmem:[%s4 + $0x70] sm:$0xff]
          %v1791 = vld [vmem:[%s4 + $0x78] sm:$0xff]
          %v1792 = vld [vmem:[%s5] sm:$0x3]
          %v1794 = vlaneseq
          %v1795 = vshrl.u32 %v1794, 7
          %v1796 = vsub.s32 0, %v1795
          %v1797 = vrot.slane %v1792, %v1796
          %v1798 = vlaneseq
          %v1799 = vshrl.u32 %v1798, 7
          %v1800 = vsub.s32 1, %v1799
          %v1801 = vrot.slane %v1792, %v1800
          %v1806 = vunpack.c.l.b16 %v1774
          %v1807 = vunpack.c.l.b16 %v1775
          %v1808 = vpack.c.b16 %v1807, %v1806
          %v1826 = vunpack.c.l.b16 %v1776
          %v1827 = vunpack.c.h.b16 %v1776
          %v1828 = vunpack.c.l.b16 %v1777
          %v1829 = vunpack.c.h.b16 %v1777
          %v1830 = vunpack.c.l.b16 %v1778
          %v1831 = vunpack.c.h.b16 %v1778
          %v1832 = vunpack.c.l.b16 %v1779
          %v1833 = vunpack.c.h.b16 %v1779
          %v1834 = vunpack.c.l.b16 %v1780
          %v1835 = vunpack.c.h.b16 %v1780
          %v1836 = vunpack.c.l.b16 %v1781
          %v1837 = vunpack.c.h.b16 %v1781
          %v1838 = vunpack.c.l.b16 %v1782
          %v1839 = vunpack.c.h.b16 %v1782
          %v1840 = vunpack.c.l.b16 %v1783
          %v1841 = vunpack.c.h.b16 %v1783
          %v1842 = vunpack.c.l.b16 %v1784
          %v1843 = vunpack.c.h.b16 %v1784
          %v1844 = vunpack.c.l.b16 %v1785
          %v1845 = vunpack.c.h.b16 %v1785
          %v1846 = vunpack.c.l.b16 %v1786
          %v1847 = vunpack.c.h.b16 %v1786
          %v1848 = vunpack.c.l.b16 %v1787
          %v1849 = vunpack.c.h.b16 %v1787
          %v1850 = vunpack.c.l.b16 %v1788
          %v1851 = vunpack.c.h.b16 %v1788
          %v1852 = vunpack.c.l.b16 %v1789
          %v1853 = vunpack.c.h.b16 %v1789
          %v1854 = vunpack.c.l.b16 %v1790
          %v1855 = vunpack.c.h.b16 %v1790
          %v1856 = vunpack.c.l.b16 %v1791
          %v1857 = vunpack.c.h.b16 %v1791
          %v1858 = vpack.c.b16 %v1828, %v1826
          %v1859 = vpack.c.b16 %v1829, %v1827
          %v1860 = vpack.c.b16 %v1832, %v1830
          %v1861 = vpack.c.b16 %v1833, %v1831
          %v1862 = vpack.c.b16 %v1836, %v1834
          %v1863 = vpack.c.b16 %v1837, %v1835
          %v1864 = vpack.c.b16 %v1840, %v1838
          %v1865 = vpack.c.b16 %v1841, %v1839
          %v1866 = vpack.c.b16 %v1844, %v1842
          %v1867 = vpack.c.b16 %v1845, %v1843
          %v1868 = vpack.c.b16 %v1848, %v1846
          %v1869 = vpack.c.b16 %v1849, %v1847
          %v1870 = vpack.c.b16 %v1852, %v1850
          %v1871 = vpack.c.b16 %v1853, %v1851
          %v1872 = vpack.c.b16 %v1856, %v1854
          %v1873 = vpack.c.b16 %v1857, %v1855
          %1890 = vmatprep.subr.bf16.mxu0 %v1859
          %1891 = vmatpush1.bf16.msra.mxu0 %v1858
          %1892 = vmatprep.subr.bf16.mxu0 %v1861
          %1893 = vmatpush1.bf16.msra.mxu0 %v1860
          %1894 = vmatprep.subr.bf16.mxu0 %v1863
          %1895 = vmatpush1.bf16.msra.mxu0 %v1862
          %1896 = vmatprep.subr.bf16.mxu0 %v1865
          %1897 = vmatpush1.bf16.msra.mxu0 %v1864
          %1898 = vmatprep.subr.bf16.mxu0 %v1867
          %1899 = vmatpush1.bf16.msra.mxu0 %v1866
          %1900 = vmatprep.subr.bf16.mxu0 %v1869
          %1901 = vmatpush1.bf16.msra.mxu0 %v1868
          %1902 = vmatprep.subr.bf16.mxu0 %v1871
          %1903 = vmatpush1.bf16.msra.mxu0 %v1870
          %1904 = vmatprep.subr.bf16.mxu0 %v1873
          %1905 = vmatpush1.bf16.msra.mxu0 %v1872
          %1906 = vmatprep.subr.bf16.mxu0 0
          %1907 = vmatpush1.bf16.msra.mxu0 0
          %1908 = vmatprep.subr.bf16.mxu0 0
          %1909 = vmatpush1.bf16.msra.mxu0 0
          %1910 = vmatprep.subr.bf16.mxu0 0
          %1911 = vmatpush1.bf16.msra.mxu0 0
          %1912 = vmatprep.subr.bf16.mxu0 0
          %1913 = vmatpush1.bf16.msra.mxu0 0
          %1914 = vmatprep.subr.bf16.mxu0 0
          %1915 = vmatpush1.bf16.msra.mxu0 0
          %1916 = vmatprep.subr.bf16.mxu0 0
          %1917 = vmatpush1.bf16.msra.mxu0 0
          %1918 = vmatprep.subr.bf16.mxu0 0
          %1919 = vmatpush1.bf16.msra.mxu0 0
          %1920 = vmatprep.subr.bf16.mxu0 0
          %1921 = vmatpush1.bf16.msra.mxu0 0
          %1922 = vmatprep.mubr.bf16.mxu0 0
          %1923 = vmatmul.mubr.bf16.gmra.mrb[0].mxu0 %v1808
          %v1924 = vpop.f32.mrb[0].mxu0
          %v1925 = vadd.f32 %v1797, %v1924
          %v1926 = vpop.f32.mrb[0].mxu0
          %v1927 = vadd.f32 %v1801, %v1926
          %v1928 = vpop.f32.mrb[0].mxu0
          %v1929 = vadd.f32 %v1797, %v1928
          %v1930 = vpop.f32.mrb[0].mxu0
          %v1931 = vadd.f32 %v1801, %v1930
          %1932 = vdwg.mxu0
          %v1933 = vmax.f32 %v1925, 0.0
          %v1934 = vmax.f32 %v1927, 0.0
          %v1935 = vmax.f32 %v1929, 0.0
          %v1936 = vmax.f32 %v1931, 0.0
          %v1937 = vpack.c.bf16 %v1770, %v1766
          %v1938 = vpack.c.bf16 %v1771, %v1767
          %v1939 = vpack.c.bf16 %v1772, %v1768
          %v1940 = vpack.c.bf16 %v1773, %v1769
          %v1941 = vld [vmem:[%s6] sm:$0xff]
          %v1942 = vld [vmem:[%s6 + $0x8] sm:$0xff]
          %v1943 = vld [vmem:[%s6 + $0x10] sm:$0xff]
          %v1944 = vld [vmem:[%s6 + $0x18] sm:$0xff]
          %v1945 = vld [vmem:[%s6 + $0x20] sm:$0xff]
          %v1946 = vld [vmem:[%s6 + $0x28] sm:$0xff]
          %v1947 = vld [vmem:[%s6 + $0x30] sm:$0xff]
          %v1948 = vld [vmem:[%s6 + $0x38] sm:$0xff]
          %v1949 = vld [vmem:[%s6 + $0x40] sm:$0xff]
          %v1950 = vld [vmem:[%s6 + $0x48] sm:$0xff]
          %v1951 = vld [vmem:[%s6 + $0x50] sm:$0xff]
          %v1952 = vld [vmem:[%s6 + $0x58] sm:$0xff]
          %v1953 = vld [vmem:[%s6 + $0x60] sm:$0xff]
          %v1954 = vld [vmem:[%s6 + $0x68] sm:$0xff]
          %v1955 = vld [vmem:[%s6 + $0x70] sm:$0xff]
          %v1956 = vld [vmem:[%s6 + $0x78] sm:$0xff]
          %v1957 = vld [vmem:[%s6 + $0x80] sm:$0xff]
          %v1958 = vld [vmem:[%s6 + $0x88] sm:$0xff]
          %v1959 = vld [vmem:[%s6 + $0x90] sm:$0xff]
          %v1960 = vld [vmem:[%s6 + $0x98] sm:$0xff]
          %v1961 = vld [vmem:[%s6 + $0xa0] sm:$0xff]
          %v1962 = vld [vmem:[%s6 + $0xa8] sm:$0xff]
          %v1963 = vld [vmem:[%s6 + $0xb0] sm:$0xff]
          %v1964 = vld [vmem:[%s6 + $0xb8] sm:$0xff]
          %v1965 = vld [vmem:[%s6 + $0xc0] sm:$0xff]
          %v1966 = vld [vmem:[%s6 + $0xc8] sm:$0xff]
          %v1967 = vld [vmem:[%s6 + $0xd0] sm:$0xff]
          %v1968 = vld [vmem:[%s6 + $0xd8] sm:$0xff]
          %v1969 = vld [vmem:[%s6 + $0xe0] sm:$0xff]
          %v1970 = vld [vmem:[%s6 + $0xe8] sm:$0xff]
          %v1971 = vld [vmem:[%s6 + $0xf0] sm:$0xff]
          %v1972 = vld [vmem:[%s6 + $0xf8] sm:$0xff]
          %v1973 = vld [vmem:[%s6 + $0x100] sm:$0xff]
          %v1974 = vld [vmem:[%s6 + $0x108] sm:$0xff]
          %v1975 = vld [vmem:[%s6 + $0x110] sm:$0xff]
          %v1976 = vld [vmem:[%s6 + $0x118] sm:$0xff]
          %v1977 = vld [vmem:[%s6 + $0x120] sm:$0xff]
          %v1978 = vld [vmem:[%s6 + $0x128] sm:$0xff]
          %v1979 = vld [vmem:[%s6 + $0x130] sm:$0xff]
          %v1980 = vld [vmem:[%s6 + $0x138] sm:$0xff]
          %v1981 = vld [vmem:[%s6 + $0x140] sm:$0xff]
          %v1982 = vld [vmem:[%s6 + $0x148] sm:$0xff]
          %v1983 = vld [vmem:[%s6 + $0x150] sm:$0xff]
          %v1984 = vld [vmem:[%s6 + $0x158] sm:$0xff]
          %v1985 = vld [vmem:[%s6 + $0x160] sm:$0xff]
          %v1986 = vld [vmem:[%s6 + $0x168] sm:$0xff]
          %v1987 = vld [vmem:[%s6 + $0x170] sm:$0xff]
          %v1988 = vld [vmem:[%s6 + $0x178] sm:$0xff]
          %v1989 = vld [vmem:[%s6 + $0x180] sm:$0xff]
          %v1990 = vld [vmem:[%s6 + $0x188] sm:$0xff]
          %v1991 = vld [vmem:[%s6 + $0x190] sm:$0xff]
          %v1992 = vld [vmem:[%s6 + $0x198] sm:$0xff]
          %v1993 = vld [vmem:[%s6 + $0x1a0] sm:$0xff]
          %v1994 = vld [vmem:[%s6 + $0x1a8] sm:$0xff]
          %v1995 = vld [vmem:[%s6 + $0x1b0] sm:$0xff]
          %v1996 = vld [vmem:[%s6 + $0x1b8] sm:$0xff]
          %v1997 = vld [vmem:[%s6 + $0x1c0] sm:$0xff]
          %v1998 = vld [vmem:[%s6 + $0x1c8] sm:$0xff]
          %v1999 = vld [vmem:[%s6 + $0x1d0] sm:$0xff]
          %v2000 = vld [vmem:[%s6 + $0x1d8] sm:$0xff]
          %v2001 = vld [vmem:[%s6 + $0x1e0] sm:$0xff]
          %v2002 = vld [vmem:[%s6 + $0x1e8] sm:$0xff]
          %v2003 = vld [vmem:[%s6 + $0x1f0] sm:$0xff]
          %v2004 = vld [vmem:[%s6 + $0x1f8] sm:$0xff]
          %v2005 = vld [vmem:[%s6 + $0x200] sm:$0xff]
          %v2006 = vld [vmem:[%s6 + $0x208] sm:$0xff]
          %v2007 = vld [vmem:[%s6 + $0x210] sm:$0xff]
          %v2008 = vld [vmem:[%s6 + $0x218] sm:$0xff]
          %v2009 = vld [vmem:[%s6 + $0x220] sm:$0xff]
          %v2010 = vld [vmem:[%s6 + $0x228] sm:$0xff]
          %v2011 = vld [vmem:[%s6 + $0x230] sm:$0xff]
          %v2012 = vld [vmem:[%s6 + $0x238] sm:$0xff]
          %v2013 = vld [vmem:[%s6 + $0x240] sm:$0xff]
          %v2014 = vld [vmem:[%s6 + $0x248] sm:$0xff]
          %v2015 = vld [vmem:[%s6 + $0x250] sm:$0xff]
          %v2016 = vld [vmem:[%s6 + $0x258] sm:$0xff]
          %v2017 = vld [vmem:[%s6 + $0x260] sm:$0xff]
          %v2018 = vld [vmem:[%s6 + $0x268] sm:$0xff]
          %v2019 = vld [vmem:[%s6 + $0x270] sm:$0xff]
          %v2020 = vld [vmem:[%s6 + $0x278] sm:$0xff]
          %v2021 = vld [vmem:[%s6 + $0x280] sm:$0xff]
          %v2022 = vld [vmem:[%s6 + $0x288] sm:$0xff]
          %v2023 = vld [vmem:[%s6 + $0x290] sm:$0xff]
          %v2024 = vld [vmem:[%s6 + $0x298] sm:$0xff]
          %v2025 = vld [vmem:[%s6 + $0x2a0] sm:$0xff]
          %v2026 = vld [vmem:[%s6 + $0x2a8] sm:$0xff]
          %v2027 = vld [vmem:[%s6 + $0x2b0] sm:$0xff]
          %v2028 = vld [vmem:[%s6 + $0x2b8] sm:$0xff]
          %v2029 = vld [vmem:[%s6 + $0x2c0] sm:$0xff]
          %v2030 = vld [vmem:[%s6 + $0x2c8] sm:$0xff]
          %v2031 = vld [vmem:[%s6 + $0x2d0] sm:$0xff]
          %v2032 = vld [vmem:[%s6 + $0x2d8] sm:$0xff]
          %v2033 = vld [vmem:[%s6 + $0x2e0] sm:$0xff]
          %v2034 = vld [vmem:[%s6 + $0x2e8] sm:$0xff]
          %v2035 = vld [vmem:[%s6 + $0x2f0] sm:$0xff]
          %v2036 = vld [vmem:[%s6 + $0x2f8] sm:$0xff]
          %v2037 = vld [vmem:[%s6 + $0x300] sm:$0xff]
          %v2038 = vld [vmem:[%s6 + $0x308] sm:$0xff]
          %v2039 = vld [vmem:[%s6 + $0x310] sm:$0xff]
          %v2040 = vld [vmem:[%s6 + $0x318] sm:$0xff]
          %v2041 = vld [vmem:[%s6 + $0x320] sm:$0xff]
          %v2042 = vld [vmem:[%s6 + $0x328] sm:$0xff]
          %v2043 = vld [vmem:[%s6 + $0x330] sm:$0xff]
          %v2044 = vld [vmem:[%s6 + $0x338] sm:$0xff]
          %v2045 = vld [vmem:[%s6 + $0x340] sm:$0xff]
          %v2046 = vld [vmem:[%s6 + $0x348] sm:$0xff]
          %v2047 = vld [vmem:[%s6 + $0x350] sm:$0xff]
          %v2048 = vld [vmem:[%s6 + $0x358] sm:$0xff]
          %v2049 = vld [vmem:[%s6 + $0x360] sm:$0xff]
          %v2050 = vld [vmem:[%s6 + $0x368] sm:$0xff]
          %v2051 = vld [vmem:[%s6 + $0x370] sm:$0xff]
          %v2052 = vld [vmem:[%s6 + $0x378] sm:$0xff]
          %v2053 = vld [vmem:[%s6 + $0x380] sm:$0xff]
          %v2054 = vld [vmem:[%s6 + $0x388] sm:$0xff]
          %v2055 = vld [vmem:[%s6 + $0x390] sm:$0xff]
          %v2056 = vld [vmem:[%s6 + $0x398] sm:$0xff]
          %v2057 = vld [vmem:[%s6 + $0x3a0] sm:$0xff]
          %v2058 = vld [vmem:[%s6 + $0x3a8] sm:$0xff]
          %v2059 = vld [vmem:[%s6 + $0x3b0] sm:$0xff]
          %v2060 = vld [vmem:[%s6 + $0x3b8] sm:$0xff]
          %v2061 = vld [vmem:[%s6 + $0x3c0] sm:$0xff]
          %v2062 = vld [vmem:[%s6 + $0x3c8] sm:$0xff]
          %v2063 = vld [vmem:[%s6 + $0x3d0] sm:$0xff]
          %v2064 = vld [vmem:[%s6 + $0x3d8] sm:$0xff]
          %v2065 = vld [vmem:[%s6 + $0x3e0] sm:$0xff]
          %v2066 = vld [vmem:[%s6 + $0x3e8] sm:$0xff]
          %v2067 = vld [vmem:[%s6 + $0x3f0] sm:$0xff]
          %v2068 = vld [vmem:[%s6 + $0x3f8] sm:$0xff]
          %v2069 = vpack.c.bf16 %v1935, %v1933
          %v2070 = vpack.c.bf16 %v1936, %v1934
          %v2071 = vld [vmem:[%s7] sm:$0xff]
          %v2072 = vld [vmem:[%s7 + $0x8] sm:$0xff]
          %v2073 = vld [vmem:[%s7 + $0x10] sm:$0xff]
          %v2074 = vld [vmem:[%s7 + $0x18] sm:$0xff]
          %v2075 = vld [vmem:[%s7 + $0x20] sm:$0xff]
          %v2076 = vld [vmem:[%s7 + $0x28] sm:$0xff]
          %v2077 = vld [vmem:[%s7 + $0x30] sm:$0xff]
          %v2078 = vld [vmem:[%s7 + $0x38] sm:$0xff]
          %v2079 = vld [vmem:[%s7 + $0x40] sm:$0xff]
          %v2080 = vld [vmem:[%s7 + $0x48] sm:$0xff]
          %v2081 = vld [vmem:[%s7 + $0x50] sm:$0xff]
          %v2082 = vld [vmem:[%s7 + $0x58] sm:$0xff]
          %v2083 = vld [vmem:[%s7 + $0x60] sm:$0xff]
          %v2084 = vld [vmem:[%s7 + $0x68] sm:$0xff]
          %v2085 = vld [vmem:[%s7 + $0x70] sm:$0xff]
          %v2086 = vld [vmem:[%s7 + $0x78] sm:$0xff]
          %v2087 = vld [vmem:[%s7 + $0x80] sm:$0xff]
          %v2088 = vld [vmem:[%s7 + $0x88] sm:$0xff]
          %v2089 = vld [vmem:[%s7 + $0x90] sm:$0xff]
          %v2090 = vld [vmem:[%s7 + $0x98] sm:$0xff]
          %v2091 = vld [vmem:[%s7 + $0xa0] sm:$0xff]
          %v2092 = vld [vmem:[%s7 + $0xa8] sm:$0xff]
          %v2093 = vld [vmem:[%s7 + $0xb0] sm:$0xff]
          %v2094 = vld [vmem:[%s7 + $0xb8] sm:$0xff]
          %v2095 = vld [vmem:[%s7 + $0xc0] sm:$0xff]
          %v2096 = vld [vmem:[%s7 + $0xc8] sm:$0xff]
          %v2097 = vld [vmem:[%s7 + $0xd0] sm:$0xff]
          %v2098 = vld [vmem:[%s7 + $0xd8] sm:$0xff]
          %v2099 = vld [vmem:[%s7 + $0xe0] sm:$0xff]
          %v2100 = vld [vmem:[%s7 + $0xe8] sm:$0xff]
          %v2101 = vld [vmem:[%s7 + $0xf0] sm:$0xff]
          %v2102 = vld [vmem:[%s7 + $0xf8] sm:$0xff]
          %v2103 = vld [vmem:[%s7 + $0x100] sm:$0xff]
          %v2104 = vld [vmem:[%s7 + $0x108] sm:$0xff]
          %v2105 = vld [vmem:[%s7 + $0x110] sm:$0xff]
          %v2106 = vld [vmem:[%s7 + $0x118] sm:$0xff]
          %v2107 = vld [vmem:[%s7 + $0x120] sm:$0xff]
          %v2108 = vld [vmem:[%s7 + $0x128] sm:$0xff]
          %v2109 = vld [vmem:[%s7 + $0x130] sm:$0xff]
          %v2110 = vld [vmem:[%s7 + $0x138] sm:$0xff]
          %v2111 = vld [vmem:[%s7 + $0x140] sm:$0xff]
          %v2112 = vld [vmem:[%s7 + $0x148] sm:$0xff]
          %v2113 = vld [vmem:[%s7 + $0x150] sm:$0xff]
          %v2114 = vld [vmem:[%s7 + $0x158] sm:$0xff]
          %v2115 = vld [vmem:[%s7 + $0x160] sm:$0xff]
          %v2116 = vld [vmem:[%s7 + $0x168] sm:$0xff]
          %v2117 = vld [vmem:[%s7 + $0x170] sm:$0xff]
          %v2118 = vld [vmem:[%s7 + $0x178] sm:$0xff]
          %v2167 = vunpack.c.l.b16 %v2071
          %v2168 = vunpack.c.h.b16 %v2071
          %v2169 = vunpack.c.l.b16 %v2072
          %v2170 = vunpack.c.h.b16 %v2072
          %v2171 = vunpack.c.l.b16 %v2073
          %v2172 = vunpack.c.h.b16 %v2073
          %v2173 = vunpack.c.l.b16 %v2074
          %v2174 = vunpack.c.h.b16 %v2074
          %v2175 = vunpack.c.l.b16 %v2075
          %v2176 = vunpack.c.h.b16 %v2075
          %v2177 = vunpack.c.l.b16 %v2076
          %v2178 = vunpack.c.h.b16 %v2076
          %v2179 = vunpack.c.l.b16 %v2077
          %v2180 = vunpack.c.h.b16 %v2077
          %v2181 = vunpack.c.l.b16 %v2078
          %v2182 = vunpack.c.h.b16 %v2078
          %v2183 = vunpack.c.l.b16 %v2079
          %v2184 = vunpack.c.h.b16 %v2079
          %v2185 = vunpack.c.l.b16 %v2080
          %v2186 = vunpack.c.h.b16 %v2080
          %v2187 = vunpack.c.l.b16 %v2081
          %v2188 = vunpack.c.h.b16 %v2081
          %v2189 = vunpack.c.l.b16 %v2082
          %v2190 = vunpack.c.h.b16 %v2082
          %v2191 = vunpack.c.l.b16 %v2083
          %v2192 = vunpack.c.h.b16 %v2083
          %v2193 = vunpack.c.l.b16 %v2084
          %v2194 = vunpack.c.h.b16 %v2084
          %v2195 = vunpack.c.l.b16 %v2085
          %v2196 = vunpack.c.h.b16 %v2085
          %v2197 = vunpack.c.l.b16 %v2086
          %v2198 = vunpack.c.h.b16 %v2086
          %v2199 = vunpack.c.l.b16 %v2087
          %v2200 = vunpack.c.h.b16 %v2087
          %v2201 = vunpack.c.l.b16 %v2088
          %v2202 = vunpack.c.h.b16 %v2088
          %v2203 = vunpack.c.l.b16 %v2089
          %v2204 = vunpack.c.h.b16 %v2089
          %v2205 = vunpack.c.l.b16 %v2090
          %v2206 = vunpack.c.h.b16 %v2090
          %v2207 = vunpack.c.l.b16 %v2091
          %v2208 = vunpack.c.h.b16 %v2091
          %v2209 = vunpack.c.l.b16 %v2092
          %v2210 = vunpack.c.h.b16 %v2092
          %v2211 = vunpack.c.l.b16 %v2093
          %v2212 = vunpack.c.h.b16 %v2093
          %v2213 = vunpack.c.l.b16 %v2094
          %v2214 = vunpack.c.h.b16 %v2094
          %v2215 = vunpack.c.l.b16 %v2095
          %v2216 = vunpack.c.h.b16 %v2095
          %v2217 = vunpack.c.l.b16 %v2096
          %v2218 = vunpack.c.h.b16 %v2096
          %v2219 = vunpack.c.l.b16 %v2097
          %v2220 = vunpack.c.h.b16 %v2097
          %v2221 = vunpack.c.l.b16 %v2098
          %v2222 = vunpack.c.h.b16 %v2098
          %v2223 = vunpack.c.l.b16 %v2099
          %v2224 = vunpack.c.h.b16 %v2099
          %v2225 = vunpack.c.l.b16 %v2100
          %v2226 = vunpack.c.h.b16 %v2100
          %v2227 = vunpack.c.l.b16 %v2101
          %v2228 = vunpack.c.h.b16 %v2101
          %v2229 = vunpack.c.l.b16 %v2102
          %v2230 = vunpack.c.h.b16 %v2102
          %v2231 = vunpack.c.l.b16 %v2103
          %v2232 = vunpack.c.h.b16 %v2103
          %v2233 = vunpack.c.l.b16 %v2104
          %v2234 = vunpack.c.h.b16 %v2104
          %v2235 = vunpack.c.l.b16 %v2105
          %v2236 = vunpack.c.h.b16 %v2105
          %v2237 = vunpack.c.l.b16 %v2106
          %v2238 = vunpack.c.h.b16 %v2106
          %v2239 = vunpack.c.l.b16 %v2107
          %v2240 = vunpack.c.h.b16 %v2107
          %v2241 = vunpack.c.l.b16 %v2108
          %v2242 = vunpack.c.h.b16 %v2108
          %v2243 = vunpack.c.l.b16 %v2109
          %v2244 = vunpack.c.h.b16 %v2109
          %v2245 = vunpack.c.l.b16 %v2110
          %v2246 = vunpack.c.h.b16 %v2110
          %v2247 = vunpack.c.l.b16 %v2111
          %v2248 = vunpack.c.h.b16 %v2111
          %v2249 = vunpack.c.l.b16 %v2112
          %v2250 = vunpack.c.h.b16 %v2112
          %v2251 = vunpack.c.l.b16 %v2113
          %v2252 = vunpack.c.h.b16 %v2113
          %v2253 = vunpack.c.l.b16 %v2114
          %v2254 = vunpack.c.h.b16 %v2114
          %v2255 = vunpack.c.l.b16 %v2115
          %v2256 = vunpack.c.h.b16 %v2115
          %v2257 = vunpack.c.l.b16 %v2116
          %v2258 = vunpack.c.h.b16 %v2116
          %v2259 = vunpack.c.l.b16 %v2117
          %v2260 = vunpack.c.h.b16 %v2117
          %v2261 = vunpack.c.l.b16 %v2118
          %v2262 = vunpack.c.h.b16 %v2118
          %v2263 = vpack.c.b16 %v2171, %v2167
          %v2264 = vpack.c.b16 %v2172, %v2168
          %v2265 = vpack.c.b16 %v2173, %v2169
          %v2266 = vpack.c.b16 %v2174, %v2170
          %v2267 = vpack.c.b16 %v2179, %v2175
          %v2268 = vpack.c.b16 %v2180, %v2176
          %v2269 = vpack.c.b16 %v2181, %v2177
          %v2270 = vpack.c.b16 %v2182, %v2178
          %v2271 = vpack.c.b16 %v2187, %v2183
          %v2272 = vpack.c.b16 %v2188, %v2184
          %v2273 = vpack.c.b16 %v2189, %v2185
          %v2274 = vpack.c.b16 %v2190, %v2186
          %v2275 = vpack.c.b16 %v2195, %v2191
          %v2276 = vpack.c.b16 %v2196, %v2192
          %v2277 = vpack.c.b16 %v2197, %v2193
          %v2278 = vpack.c.b16 %v2198, %v2194
          %v2279 = vpack.c.b16 %v2203, %v2199
          %v2280 = vpack.c.b16 %v2204, %v2200
          %v2281 = vpack.c.b16 %v2205, %v2201
          %v2282 = vpack.c.b16 %v2206, %v2202
          %v2283 = vpack.c.b16 %v2211, %v2207
          %v2284 = vpack.c.b16 %v2212, %v2208
          %v2285 = vpack.c.b16 %v2213, %v2209
          %v2286 = vpack.c.b16 %v2214, %v2210
          %v2287 = vpack.c.b16 %v2219, %v2215
          %v2288 = vpack.c.b16 %v2220, %v2216
          %v2289 = vpack.c.b16 %v2221, %v2217
          %v2290 = vpack.c.b16 %v2222, %v2218
          %v2291 = vpack.c.b16 %v2227, %v2223
          %v2292 = vpack.c.b16 %v2228, %v2224
          %v2293 = vpack.c.b16 %v2229, %v2225
          %v2294 = vpack.c.b16 %v2230, %v2226
          %v2295 = vpack.c.b16 %v2235, %v2231
          %v2296 = vpack.c.b16 %v2236, %v2232
          %v2297 = vpack.c.b16 %v2237, %v2233
          %v2298 = vpack.c.b16 %v2238, %v2234
          %v2299 = vpack.c.b16 %v2243, %v2239
          %v2300 = vpack.c.b16 %v2244, %v2240
          %v2301 = vpack.c.b16 %v2245, %v2241
          %v2302 = vpack.c.b16 %v2246, %v2242
          %v2303 = vpack.c.b16 %v2251, %v2247
          %v2304 = vpack.c.b16 %v2252, %v2248
          %v2305 = vpack.c.b16 %v2253, %v2249
          %v2306 = vpack.c.b16 %v2254, %v2250
          %v2307 = vpack.c.b16 %v2259, %v2255
          %v2308 = vpack.c.b16 %v2260, %v2256
          %v2309 = vpack.c.b16 %v2261, %v2257
          %v2310 = vpack.c.b16 %v2262, %v2258
          %vm2359 = vcmask 523264
          %v2361 = vsel %vm2359, %v2070, 0
          %2363 = vmatprep.subr.bf16.mxu0 %v2264
          %2364 = vmatpush1.bf16.msra.mxu0 %v2263
          %2365 = vmatprep.subr.bf16.mxu0 %v2268
          %2366 = vmatpush1.bf16.msra.mxu0 %v2267
          %2367 = vmatprep.subr.bf16.mxu0 %v2272
          %2368 = vmatpush1.bf16.msra.mxu0 %v2271
          %2369 = vmatprep.subr.bf16.mxu0 %v2276
          %2370 = vmatpush1.bf16.msra.mxu0 %v2275
          %2371 = vmatprep.subr.bf16.mxu0 %v2280
          %2372 = vmatpush1.bf16.msra.mxu0 %v2279
          %2373 = vmatprep.subr.bf16.mxu0 %v2284
          %2374 = vmatpush1.bf16.msra.mxu0 %v2283
          %2375 = vmatprep.subr.bf16.mxu0 %v2288
          %2376 = vmatpush1.bf16.msra.mxu0 %v2287
          %2377 = vmatprep.subr.bf16.mxu0 %v2292
          %2378 = vmatpush1.bf16.msra.mxu0 %v2291
          %2379 = vmatprep.subr.bf16.mxu0 %v2296
          %2380 = vmatpush1.bf16.msra.mxu0 %v2295
          %2381 = vmatprep.subr.bf16.mxu0 %v2300
          %2382 = vmatpush1.bf16.msra.mxu0 %v2299
          %2383 = vmatprep.subr.bf16.mxu0 %v2304
          %2384 = vmatpush1.bf16.msra.mxu0 %v2303
          %2385 = vmatprep.subr.bf16.mxu0 %v2308
          %2386 = vmatpush1.bf16.msra.mxu0 %v2307
          %2387 = vmatprep.subr.bf16.mxu0 0
          %2388 = vmatpush1.bf16.msra.mxu0 0
          %2389 = vmatprep.subr.bf16.mxu0 0
          %2390 = vmatpush1.bf16.msra.mxu0 0
          %2391 = vmatprep.subr.bf16.mxu0 0
          %2392 = vmatpush1.bf16.msra.mxu0 0
          %2393 = vmatprep.subr.bf16.mxu0 0
          %2394 = vmatpush1.bf16.msra.mxu0 0
          %2395 = vmatprep.mubr.bf16.mxu0 %v2361
          %2396 = vmatmul.mubr.bf16.gmra.mrb[0].mxu0 %v2069
          %v2397 = vpop.f32.mrb[0].mxu0
          %v2398 = vadd.f32 0.0, %v2397
          %v2399 = vpop.f32.mrb[0].mxu0
          %v2400 = vadd.f32 0.0, %v2399
          %v2401 = vpop.f32.mrb[0].mxu0
          %v2402 = vadd.f32 0.0, %v2401
          %v2403 = vpop.f32.mrb[0].mxu0
          %v2404 = vadd.f32 0.0, %v2403
          %2405 = vdwg.mxu0
          %2406 = vmatprep.subr.bf16.mxu0 %v2266
          %2407 = vmatpush1.bf16.msra.mxu0 %v2265
          %2408 = vmatprep.subr.bf16.mxu0 %v2270
          %2409 = vmatpush1.bf16.msra.mxu0 %v2269
          %2410 = vmatprep.subr.bf16.mxu0 %v2274
          %2411 = vmatpush1.bf16.msra.mxu0 %v2273
          %2412 = vmatprep.subr.bf16.mxu0 %v2278
          %2413 = vmatpush1.bf16.msra.mxu0 %v2277
          %2414 = vmatprep.subr.bf16.mxu0 %v2282
          %2415 = vmatpush1.bf16.msra.mxu0 %v2281
          %2416 = vmatprep.subr.bf16.mxu0 %v2286
          %2417 = vmatpush1.bf16.msra.mxu0 %v2285
          %2418 = vmatprep.subr.bf16.mxu0 %v2290
          %2419 = vmatpush1.bf16.msra.mxu0 %v2289
          %2420 = vmatprep.subr.bf16.mxu0 %v2294
          %2421 = vmatpush1.bf16.msra.mxu0 %v2293
          %2422 = vmatprep.subr.bf16.mxu0 %v2298
          %2423 = vmatpush1.bf16.msra.mxu0 %v2297
          %2424 = vmatprep.subr.bf16.mxu0 %v2302
          %2425 = vmatpush1.bf16.msra.mxu0 %v2301
          %2426 = vmatprep.subr.bf16.mxu0 %v2306
          %2427 = vmatpush1.bf16.msra.mxu0 %v2305
          %2428 = vmatprep.subr.bf16.mxu0 %v2310
          %2429 = vmatpush1.bf16.msra.mxu0 %v2309
          %2430 = vmatprep.subr.bf16.mxu0 0
          %2431 = vmatpush1.bf16.msra.mxu0 0
          %2432 = vmatprep.subr.bf16.mxu0 0
          %2433 = vmatpush1.bf16.msra.mxu0 0
          %2434 = vmatprep.subr.bf16.mxu0 0
          %2435 = vmatpush1.bf16.msra.mxu0 0
          %2436 = vmatprep.subr.bf16.mxu0 0
          %2437 = vmatpush1.bf16.msra.mxu0 0
          %2438 = vmatprep.mubr.bf16.mxu0 %v2361
          %2439 = vmatmul.mubr.bf16.gmra.mrb[0].mxu0 %v2069
          %v2440 = vpop.f32.mrb[0].mxu0
          %v2441 = vadd.f32 0.0, %v2440
          %v2442 = vpop.f32.mrb[0].mxu0
          %v2443 = vadd.f32 0.0, %v2442
          %v2444 = vpop.f32.mrb[0].mxu0
          %v2445 = vadd.f32 0.0, %v2444
          %v2446 = vpop.f32.mrb[0].mxu0
          %v2447 = vadd.f32 0.0, %v2446
          %2448 = vdwg.mxu0
          %v2577 = vunpack.c.l.b16 %v1941
          %v2578 = vunpack.c.h.b16 %v1941
          %v2579 = vunpack.c.l.b16 %v1942
          %v2580 = vunpack.c.h.b16 %v1942
          %v2581 = vunpack.c.l.b16 %v1943
          %v2582 = vunpack.c.h.b16 %v1943
          %v2583 = vunpack.c.l.b16 %v1944
          %v2584 = vunpack.c.h.b16 %v1944
          %v2585 = vunpack.c.l.b16 %v1945
          %v2586 = vunpack.c.h.b16 %v1945
          %v2587 = vunpack.c.l.b16 %v1946
          %v2588 = vunpack.c.h.b16 %v1946
          %v2589 = vunpack.c.l.b16 %v1947
          %v2590 = vunpack.c.h.b16 %v1947
          %v2591 = vunpack.c.l.b16 %v1948
          %v2592 = vunpack.c.h.b16 %v1948
          %v2593 = vunpack.c.l.b16 %v1949
          %v2594 = vunpack.c.h.b16 %v1949
          %v2595 = vunpack.c.l.b16 %v1950
          %v2596 = vunpack.c.h.b16 %v1950
          %v2597 = vunpack.c.l.b16 %v1951
          %v2598 = vunpack.c.h.b16 %v1951
          %v2599 = vunpack.c.l.b16 %v1952
          %v2600 = vunpack.c.h.b16 %v1952
          %v2601 = vunpack.c.l.b16 %v1953
          %v2602 = vunpack.c.h.b16 %v1953
          %v2603 = vunpack.c.l.b16 %v1954
          %v2604 = vunpack.c.h.b16 %v1954
          %v2605 = vunpack.c.l.b16 %v1955
          %v2606 = vunpack.c.h.b16 %v1955
          %v2607 = vunpack.c.l.b16 %v1956
          %v2608 = vunpack.c.h.b16 %v1956
          %v2609 = vunpack.c.l.b16 %v1957
          %v2610 = vunpack.c.h.b16 %v1957
          %v2611 = vunpack.c.l.b16 %v1958
          %v2612 = vunpack.c.h.b16 %v1958
          %v2613 = vunpack.c.l.b16 %v1959
          %v2614 = vunpack.c.h.b16 %v1959
          %v2615 = vunpack.c.l.b16 %v1960
          %v2616 = vunpack.c.h.b16 %v1960
          %v2617 = vunpack.c.l.b16 %v1961
          %v2618 = vunpack.c.h.b16 %v1961
          %v2619 = vunpack.c.l.b16 %v1962
          %v2620 = vunpack.c.h.b16 %v1962
          %v2621 = vunpack.c.l.b16 %v1963
          %v2622 = vunpack.c.h.b16 %v1963
          %v2623 = vunpack.c.l.b16 %v1964
          %v2624 = vunpack.c.h.b16 %v1964
          %v2625 = vunpack.c.l.b16 %v1965
          %v2626 = vunpack.c.h.b16 %v1965
          %v2627 = vunpack.c.l.b16 %v1966
          %v2628 = vunpack.c.h.b16 %v1966
          %v2629 = vunpack.c.l.b16 %v1967
          %v2630 = vunpack.c.h.b16 %v1967
          %v2631 = vunpack.c.l.b16 %v1968
          %v2632 = vunpack.c.h.b16 %v1968
          %v2633 = vunpack.c.l.b16 %v1969
          %v2634 = vunpack.c.h.b16 %v1969
          %v2635 = vunpack.c.l.b16 %v1970
          %v2636 = vunpack.c.h.b16 %v1970
          %v2637 = vunpack.c.l.b16 %v1971
          %v2638 = vunpack.c.h.b16 %v1971
          %v2639 = vunpack.c.l.b16 %v1972
          %v2640 = vunpack.c.h.b16 %v1972
          %v2641 = vunpack.c.l.b16 %v1973
          %v2642 = vunpack.c.h.b16 %v1973
          %v2643 = vunpack.c.l.b16 %v1974
          %v2644 = vunpack.c.h.b16 %v1974
          %v2645 = vunpack.c.l.b16 %v1975
          %v2646 = vunpack.c.h.b16 %v1975
          %v2647 = vunpack.c.l.b16 %v1976
          %v2648 = vunpack.c.h.b16 %v1976
          %v2649 = vunpack.c.l.b16 %v1977
          %v2650 = vunpack.c.h.b16 %v1977
          %v2651 = vunpack.c.l.b16 %v1978
          %v2652 = vunpack.c.h.b16 %v1978
          %v2653 = vunpack.c.l.b16 %v1979
          %v2654 = vunpack.c.h.b16 %v1979
          %v2655 = vunpack.c.l.b16 %v1980
          %v2656 = vunpack.c.h.b16 %v1980
          %v2657 = vunpack.c.l.b16 %v1981
          %v2658 = vunpack.c.h.b16 %v1981
          %v2659 = vunpack.c.l.b16 %v1982
          %v2660 = vunpack.c.h.b16 %v1982
          %v2661 = vunpack.c.l.b16 %v1983
          %v2662 = vunpack.c.h.b16 %v1983
          %v2663 = vunpack.c.l.b16 %v1984
          %v2664 = vunpack.c.h.b16 %v1984
          %v2665 = vunpack.c.l.b16 %v1985
          %v2666 = vunpack.c.h.b16 %v1985
          %v2667 = vunpack.c.l.b16 %v1986
          %v2668 = vunpack.c.h.b16 %v1986
          %v2669 = vunpack.c.l.b16 %v1987
          %v2670 = vunpack.c.h.b16 %v1987
          %v2671 = vunpack.c.l.b16 %v1988
          %v2672 = vunpack.c.h.b16 %v1988
          %v2673 = vunpack.c.l.b16 %v1989
          %v2674 = vunpack.c.h.b16 %v1989
          %v2675 = vunpack.c.l.b16 %v1990
          %v2676 = vunpack.c.h.b16 %v1990
          %v2677 = vunpack.c.l.b16 %v1991
          %v2678 = vunpack.c.h.b16 %v1991
          %v2679 = vunpack.c.l.b16 %v1992
          %v2680 = vunpack.c.h.b16 %v1992
          %v2681 = vunpack.c.l.b16 %v1993
          %v2682 = vunpack.c.h.b16 %v1993
          %v2683 = vunpack.c.l.b16 %v1994
          %v2684 = vunpack.c.h.b16 %v1994
          %v2685 = vunpack.c.l.b16 %v1995
          %v2686 = vunpack.c.h.b16 %v1995
          %v2687 = vunpack.c.l.b16 %v1996
          %v2688 = vunpack.c.h.b16 %v1996
          %v2689 = vunpack.c.l.b16 %v1997
          %v2690 = vunpack.c.h.b16 %v1997
          %v2691 = vunpack.c.l.b16 %v1998
          %v2692 = vunpack.c.h.b16 %v1998
          %v2693 = vunpack.c.l.b16 %v1999
          %v2694 = vunpack.c.h.b16 %v1999
          %v2695 = vunpack.c.l.b16 %v2000
          %v2696 = vunpack.c.h.b16 %v2000
          %v2697 = vunpack.c.l.b16 %v2001
          %v2698 = vunpack.c.h.b16 %v2001
          %v2699 = vunpack.c.l.b16 %v2002
          %v2700 = vunpack.c.h.b16 %v2002
          %v2701 = vunpack.c.l.b16 %v2003
          %v2702 = vunpack.c.h.b16 %v2003
          %v2703 = vunpack.c.l.b16 %v2004
          %v2704 = vunpack.c.h.b16 %v2004
          %v2705 = vunpack.c.l.b16 %v2005
          %v2706 = vunpack.c.h.b16 %v2005
          %v2707 = vunpack.c.l.b16 %v2006
          %v2708 = vunpack.c.h.b16 %v2006
          %v2709 = vunpack.c.l.b16 %v2007
          %v2710 = vunpack.c.h.b16 %v2007
          %v2711 = vunpack.c.l.b16 %v2008
          %v2712 = vunpack.c.h.b16 %v2008
          %v2713 = vunpack.c.l.b16 %v2009
          %v2714 = vunpack.c.h.b16 %v2009
          %v2715 = vunpack.c.l.b16 %v2010
          %v2716 = vunpack.c.h.b16 %v2010
          %v2717 = vunpack.c.l.b16 %v2011
          %v2718 = vunpack.c.h.b16 %v2011
          %v2719 = vunpack.c.l.b16 %v2012
          %v2720 = vunpack.c.h.b16 %v2012
          %v2721 = vunpack.c.l.b16 %v2013
          %v2722 = vunpack.c.h.b16 %v2013
          %v2723 = vunpack.c.l.b16 %v2014
          %v2724 = vunpack.c.h.b16 %v2014
          %v2725 = vunpack.c.l.b16 %v2015
          %v2726 = vunpack.c.h.b16 %v2015
          %v2727 = vunpack.c.l.b16 %v2016
          %v2728 = vunpack.c.h.b16 %v2016
          %v2729 = vunpack.c.l.b16 %v2017
          %v2730 = vunpack.c.h.b16 %v2017
          %v2731 = vunpack.c.l.b16 %v2018
          %v2732 = vunpack.c.h.b16 %v2018
          %v2733 = vunpack.c.l.b16 %v2019
          %v2734 = vunpack.c.h.b16 %v2019
          %v2735 = vunpack.c.l.b16 %v2020
          %v2736 = vunpack.c.h.b16 %v2020
          %v2737 = vunpack.c.l.b16 %v2021
          %v2738 = vunpack.c.h.b16 %v2021
          %v2739 = vunpack.c.l.b16 %v2022
          %v2740 = vunpack.c.h.b16 %v2022
          %v2741 = vunpack.c.l.b16 %v2023
          %v2742 = vunpack.c.h.b16 %v2023
          %v2743 = vunpack.c.l.b16 %v2024
          %v2744 = vunpack.c.h.b16 %v2024
          %v2745 = vunpack.c.l.b16 %v2025
          %v2746 = vunpack.c.h.b16 %v2025
          %v2747 = vunpack.c.l.b16 %v2026
          %v2748 = vunpack.c.h.b16 %v2026
          %v2749 = vunpack.c.l.b16 %v2027
          %v2750 = vunpack.c.h.b16 %v2027
          %v2751 = vunpack.c.l.b16 %v2028
          %v2752 = vunpack.c.h.b16 %v2028
          %v2753 = vunpack.c.l.b16 %v2029
          %v2754 = vunpack.c.h.b16 %v2029
          %v2755 = vunpack.c.l.b16 %v2030
          %v2756 = vunpack.c.h.b16 %v2030
          %v2757 = vunpack.c.l.b16 %v2031
          %v2758 = vunpack.c.h.b16 %v2031
          %v2759 = vunpack.c.l.b16 %v2032
          %v2760 = vunpack.c.h.b16 %v2032
          %v2761 = vunpack.c.l.b16 %v2033
          %v2762 = vunpack.c.h.b16 %v2033
          %v2763 = vunpack.c.l.b16 %v2034
          %v2764 = vunpack.c.h.b16 %v2034
          %v2765 = vunpack.c.l.b16 %v2035
          %v2766 = vunpack.c.h.b16 %v2035
          %v2767 = vunpack.c.l.b16 %v2036
          %v2768 = vunpack.c.h.b16 %v2036
          %v2769 = vunpack.c.l.b16 %v2037
          %v2770 = vunpack.c.h.b16 %v2037
          %v2771 = vunpack.c.l.b16 %v2038
          %v2772 = vunpack.c.h.b16 %v2038
          %v2773 = vunpack.c.l.b16 %v2039
          %v2774 = vunpack.c.h.b16 %v2039
          %v2775 = vunpack.c.l.b16 %v2040
          %v2776 = vunpack.c.h.b16 %v2040
          %v2777 = vunpack.c.l.b16 %v2041
          %v2778 = vunpack.c.h.b16 %v2041
          %v2779 = vunpack.c.l.b16 %v2042
          %v2780 = vunpack.c.h.b16 %v2042
          %v2781 = vunpack.c.l.b16 %v2043
          %v2782 = vunpack.c.h.b16 %v2043
          %v2783 = vunpack.c.l.b16 %v2044
          %v2784 = vunpack.c.h.b16 %v2044
          %v2785 = vunpack.c.l.b16 %v2045
          %v2786 = vunpack.c.h.b16 %v2045
          %v2787 = vunpack.c.l.b16 %v2046
          %v2788 = vunpack.c.h.b16 %v2046
          %v2789 = vunpack.c.l.b16 %v2047
          %v2790 = vunpack.c.h.b16 %v2047
          %v2791 = vunpack.c.l.b16 %v2048
          %v2792 = vunpack.c.h.b16 %v2048
          %v2793 = vunpack.c.l.b16 %v2049
          %v2794 = vunpack.c.h.b16 %v2049
          %v2795 = vunpack.c.l.b16 %v2050
          %v2796 = vunpack.c.h.b16 %v2050
          %v2797 = vunpack.c.l.b16 %v2051
          %v2798 = vunpack.c.h.b16 %v2051
          %v2799 = vunpack.c.l.b16 %v2052
          %v2800 = vunpack.c.h.b16 %v2052
          %v2801 = vunpack.c.l.b16 %v2053
          %v2802 = vunpack.c.h.b16 %v2053
          %v2803 = vunpack.c.l.b16 %v2054
          %v2804 = vunpack.c.h.b16 %v2054
          %v2805 = vunpack.c.l.b16 %v2055
          %v2806 = vunpack.c.h.b16 %v2055
          %v2807 = vunpack.c.l.b16 %v2056
          %v2808 = vunpack.c.h.b16 %v2056
          %v2809 = vunpack.c.l.b16 %v2057
          %v2810 = vunpack.c.h.b16 %v2057
          %v2811 = vunpack.c.l.b16 %v2058
          %v2812 = vunpack.c.h.b16 %v2058
          %v2813 = vunpack.c.l.b16 %v2059
          %v2814 = vunpack.c.h.b16 %v2059
          %v2815 = vunpack.c.l.b16 %v2060
          %v2816 = vunpack.c.h.b16 %v2060
          %v2817 = vunpack.c.l.b16 %v2061
          %v2818 = vunpack.c.h.b16 %v2061
          %v2819 = vunpack.c.l.b16 %v2062
          %v2820 = vunpack.c.h.b16 %v2062
          %v2821 = vunpack.c.l.b16 %v2063
          %v2822 = vunpack.c.h.b16 %v2063
          %v2823 = vunpack.c.l.b16 %v2064
          %v2824 = vunpack.c.h.b16 %v2064
          %v2825 = vunpack.c.l.b16 %v2065
          %v2826 = vunpack.c.h.b16 %v2065
          %v2827 = vunpack.c.l.b16 %v2066
          %v2828 = vunpack.c.h.b16 %v2066
          %v2829 = vunpack.c.l.b16 %v2067
          %v2830 = vunpack.c.h.b16 %v2067
          %v2831 = vunpack.c.l.b16 %v2068
          %v2832 = vunpack.c.h.b16 %v2068
          %v2833 = vpack.c.b16 %v2581, %v2577
          %v2834 = vpack.c.b16 %v2582, %v2578
          %v2835 = vpack.c.b16 %v2583, %v2579
          %v2836 = vpack.c.b16 %v2584, %v2580
          %v2837 = vpack.c.b16 %v2589, %v2585
          %v2838 = vpack.c.b16 %v2590, %v2586
          %v2839 = vpack.c.b16 %v2591, %v2587
          %v2840 = vpack.c.b16 %v2592, %v2588
          %v2841 = vpack.c.b16 %v2597, %v2593
          %v2842 = vpack.c.b16 %v2598, %v2594
          %v2843 = vpack.c.b16 %v2599, %v2595
          %v2844 = vpack.c.b16 %v2600, %v2596
          %v2845 = vpack.c.b16 %v2605, %v2601
          %v2846 = vpack.c.b16 %v2606, %v2602
          %v2847 = vpack.c.b16 %v2607, %v2603
          %v2848 = vpack.c.b16 %v2608, %v2604
          %v2849 = vpack.c.b16 %v2613, %v2609
          %v2850 = vpack.c.b16 %v2614, %v2610
          %v2851 = vpack.c.b16 %v2615, %v2611
          %v2852 = vpack.c.b16 %v2616, %v2612
          %v2853 = vpack.c.b16 %v2621, %v2617
          %v2854 = vpack.c.b16 %v2622, %v2618
          %v2855 = vpack.c.b16 %v2623, %v2619
          %v2856 = vpack.c.b16 %v2624, %v2620
          %v2857 = vpack.c.b16 %v2629, %v2625
          %v2858 = vpack.c.b16 %v2630, %v2626
          %v2859 = vpack.c.b16 %v2631, %v2627
          %v2860 = vpack.c.b16 %v2632, %v2628
          %v2861 = vpack.c.b16 %v2637, %v2633
          %v2862 = vpack.c.b16 %v2638, %v2634
          %v2863 = vpack.c.b16 %v2639, %v2635
          %v2864 = vpack.c.b16 %v2640, %v2636
          %v2865 = vpack.c.b16 %v2645, %v2641
          %v2866 = vpack.c.b16 %v2646, %v2642
          %v2867 = vpack.c.b16 %v2647, %v2643
          %v2868 = vpack.c.b16 %v2648, %v2644
          %v2869 = vpack.c.b16 %v2653, %v2649
          %v2870 = vpack.c.b16 %v2654, %v2650
          %v2871 = vpack.c.b16 %v2655, %v2651
          %v2872 = vpack.c.b16 %v2656, %v2652
          %v2873 = vpack.c.b16 %v2661, %v2657
          %v2874 = vpack.c.b16 %v2662, %v2658
          %v2875 = vpack.c.b16 %v2663, %v2659
          %v2876 = vpack.c.b16 %v2664, %v2660
          %v2877 = vpack.c.b16 %v2669, %v2665
          %v2878 = vpack.c.b16 %v2670, %v2666
          %v2879 = vpack.c.b16 %v2671, %v2667
          %v2880 = vpack.c.b16 %v2672, %v2668
          %v2881 = vpack.c.b16 %v2677, %v2673
          %v2882 = vpack.c.b16 %v2678, %v2674
          %v2883 = vpack.c.b16 %v2679, %v2675
          %v2884 = vpack.c.b16 %v2680, %v2676
          %v2885 = vpack.c.b16 %v2685, %v2681
          %v2886 = vpack.c.b16 %v2686, %v2682
          %v2887 = vpack.c.b16 %v2687, %v2683
          %v2888 = vpack.c.b16 %v2688, %v2684
          %v2889 = vpack.c.b16 %v2693, %v2689
          %v2890 = vpack.c.b16 %v2694, %v2690
          %v2891 = vpack.c.b16 %v2695, %v2691
          %v2892 = vpack.c.b16 %v2696, %v2692
          %v2893 = vpack.c.b16 %v2701, %v2697
          %v2894 = vpack.c.b16 %v2702, %v2698
          %v2895 = vpack.c.b16 %v2703, %v2699
          %v2896 = vpack.c.b16 %v2704, %v2700
          %v2897 = vpack.c.b16 %v2709, %v2705
          %v2898 = vpack.c.b16 %v2710, %v2706
          %v2899 = vpack.c.b16 %v2711, %v2707
          %v2900 = vpack.c.b16 %v2712, %v2708
          %v2901 = vpack.c.b16 %v2717, %v2713
          %v2902 = vpack.c.b16 %v2718, %v2714
          %v2903 = vpack.c.b16 %v2719, %v2715
          %v2904 = vpack.c.b16 %v2720, %v2716
          %v2905 = vpack.c.b16 %v2725, %v2721
          %v2906 = vpack.c.b16 %v2726, %v2722
          %v2907 = vpack.c.b16 %v2727, %v2723
          %v2908 = vpack.c.b16 %v2728, %v2724
          %v2909 = vpack.c.b16 %v2733, %v2729
          %v2910 = vpack.c.b16 %v2734, %v2730
          %v2911 = vpack.c.b16 %v2735, %v2731
          %v2912 = vpack.c.b16 %v2736, %v2732
          %v2913 = vpack.c.b16 %v2741, %v2737
          %v2914 = vpack.c.b16 %v2742, %v2738
          %v2915 = vpack.c.b16 %v2743, %v2739
          %v2916 = vpack.c.b16 %v2744, %v2740
          %v2917 = vpack.c.b16 %v2749, %v2745
          %v2918 = vpack.c.b16 %v2750, %v2746
          %v2919 = vpack.c.b16 %v2751, %v2747
          %v2920 = vpack.c.b16 %v2752, %v2748
          %v2921 = vpack.c.b16 %v2757, %v2753
          %v2922 = vpack.c.b16 %v2758, %v2754
          %v2923 = vpack.c.b16 %v2759, %v2755
          %v2924 = vpack.c.b16 %v2760, %v2756
          %v2925 = vpack.c.b16 %v2765, %v2761
          %v2926 = vpack.c.b16 %v2766, %v2762
          %v2927 = vpack.c.b16 %v2767, %v2763
          %v2928 = vpack.c.b16 %v2768, %v2764
          %v2929 = vpack.c.b16 %v2773, %v2769
          %v2930 = vpack.c.b16 %v2774, %v2770
          %v2931 = vpack.c.b16 %v2775, %v2771
          %v2932 = vpack.c.b16 %v2776, %v2772
          %v2933 = vpack.c.b16 %v2781, %v2777
          %v2934 = vpack.c.b16 %v2782, %v2778
          %v2935 = vpack.c.b16 %v2783, %v2779
          %v2936 = vpack.c.b16 %v2784, %v2780
          %v2937 = vpack.c.b16 %v2789, %v2785
          %v2938 = vpack.c.b16 %v2790, %v2786
          %v2939 = vpack.c.b16 %v2791, %v2787
          %v2940 = vpack.c.b16 %v2792, %v2788
          %v2941 = vpack.c.b16 %v2797, %v2793
          %v2942 = vpack.c.b16 %v2798, %v2794
          %v2943 = vpack.c.b16 %v2799, %v2795
          %v2944 = vpack.c.b16 %v2800, %v2796
          %v2945 = vpack.c.b16 %v2805, %v2801
          %v2946 = vpack.c.b16 %v2806, %v2802
          %v2947 = vpack.c.b16 %v2807, %v2803
          %v2948 = vpack.c.b16 %v2808, %v2804
          %v2949 = vpack.c.b16 %v2813, %v2809
          %v2950 = vpack.c.b16 %v2814, %v2810
          %v2951 = vpack.c.b16 %v2815, %v2811
          %v2952 = vpack.c.b16 %v2816, %v2812
          %v2953 = vpack.c.b16 %v2821, %v2817
          %v2954 = vpack.c.b16 %v2822, %v2818
          %v2955 = vpack.c.b16 %v2823, %v2819
          %v2956 = vpack.c.b16 %v2824, %v2820
          %v2957 = vpack.c.b16 %v2829, %v2825
          %v2958 = vpack.c.b16 %v2830, %v2826
          %v2959 = vpack.c.b16 %v2831, %v2827
          %v2960 = vpack.c.b16 %v2832, %v2828
          %3089 = vmatprep.subr.bf16.mxu0 %v2834
          %3090 = vmatpush1.bf16.msra.mxu0 %v2833
          %3091 = vmatprep.subr.bf16.mxu0 %v2838
          %3092 = vmatpush1.bf16.msra.mxu0 %v2837
          %3093 = vmatprep.subr.bf16.mxu0 %v2842
          %3094 = vmatpush1.bf16.msra.mxu0 %v2841
          %3095 = vmatprep.subr.bf16.mxu0 %v2846
          %3096 = vmatpush1.bf16.msra.mxu0 %v2845
          %3097 = vmatprep.subr.bf16.mxu0 %v2850
          %3098 = vmatpush1.bf16.msra.mxu0 %v2849
          %3099 = vmatprep.subr.bf16.mxu0 %v2854
          %3100 = vmatpush1.bf16.msra.mxu0 %v2853
          %3101 = vmatprep.subr.bf16.mxu0 %v2858
          %3102 = vmatpush1.bf16.msra.mxu0 %v2857
          %3103 = vmatprep.subr.bf16.mxu0 %v2862
          %3104 = vmatpush1.bf16.msra.mxu0 %v2861
          %3105 = vmatprep.subr.bf16.mxu0 %v2866
          %3106 = vmatpush1.bf16.msra.mxu0 %v2865
          %3107 = vmatprep.subr.bf16.mxu0 %v2870
          %3108 = vmatpush1.bf16.msra.mxu0 %v2869
          %3109 = vmatprep.subr.bf16.mxu0 %v2874
          %3110 = vmatpush1.bf16.msra.mxu0 %v2873
          %3111 = vmatprep.subr.bf16.mxu0 %v2878
          %3112 = vmatpush1.bf16.msra.mxu0 %v2877
          %3113 = vmatprep.subr.bf16.mxu0 %v2882
          %3114 = vmatpush1.bf16.msra.mxu0 %v2881
          %3115 = vmatprep.subr.bf16.mxu0 %v2886
          %3116 = vmatpush1.bf16.msra.mxu0 %v2885
          %3117 = vmatprep.subr.bf16.mxu0 %v2890
          %3118 = vmatpush1.bf16.msra.mxu0 %v2889
          %3119 = vmatprep.subr.bf16.mxu0 %v2894
          %3120 = vmatpush1.bf16.msra.mxu0 %v2893
          %3121 = vmatprep.mubr.bf16.mxu0 %v1938
          %3122 = vmatmul.mubr.bf16.gmra.mrb[0].mxu0 %v1937
          %v3123 = vpop.f32.mrb[0].mxu0
          %v3124 = vadd.f32 %v2398, %v3123
          %v3125 = vpop.f32.mrb[0].mxu0
          %v3126 = vadd.f32 %v2400, %v3125
          %v3127 = vpop.f32.mrb[0].mxu0
          %v3128 = vadd.f32 %v2402, %v3127
          %v3129 = vpop.f32.mrb[0].mxu0
          %v3130 = vadd.f32 %v2404, %v3129
          %3131 = vdwg.mxu0
          %3132 = vmatprep.subr.bf16.mxu0 %v2898
          %3133 = vmatpush1.bf16.msra.mxu0 %v2897
          %3134 = vmatprep.subr.bf16.mxu0 %v2902
          %3135 = vmatpush1.bf16.msra.mxu0 %v2901
          %3136 = vmatprep.subr.bf16.mxu0 %v2906
          %3137 = vmatpush1.bf16.msra.mxu0 %v2905
          %3138 = vmatprep.subr.bf16.mxu0 %v2910
          %3139 = vmatpush1.bf16.msra.mxu0 %v2909
          %3140 = vmatprep.subr.bf16.mxu0 %v2914
          %3141 = vmatpush1.bf16.msra.mxu0 %v2913
          %3142 = vmatprep.subr.bf16.mxu0 %v2918
          %3143 = vmatpush1.bf16.msra.mxu0 %v2917
          %3144 = vmatprep.subr.bf16.mxu0 %v2922
          %3145 = vmatpush1.bf16.msra.mxu0 %v2921
          %3146 = vmatprep.subr.bf16.mxu0 %v2926
          %3147 = vmatpush1.bf16.msra.mxu0 %v2925
          %3148 = vmatprep.subr.bf16.mxu0 %v2930
          %3149 = vmatpush1.bf16.msra.mxu0 %v2929
          %3150 = vmatprep.subr.bf16.mxu0 %v2934
          %3151 = vmatpush1.bf16.msra.mxu0 %v2933
          %3152 = vmatprep.subr.bf16.mxu0 %v2938
          %3153 = vmatpush1.bf16.msra.mxu0 %v2937
          %3154 = vmatprep.subr.bf16.mxu0 %v2942
          %3155 = vmatpush1.bf16.msra.mxu0 %v2941
          %3156 = vmatprep.subr.bf16.mxu0 %v2946
          %3157 = vmatpush1.bf16.msra.mxu0 %v2945
          %3158 = vmatprep.subr.bf16.mxu0 %v2950
          %3159 = vmatpush1.bf16.msra.mxu0 %v2949
          %3160 = vmatprep.subr.bf16.mxu0 %v2954
          %3161 = vmatpush1.bf16.msra.mxu0 %v2953
          %3162 = vmatprep.subr.bf16.mxu0 %v2958
          %3163 = vmatpush1.bf16.msra.mxu0 %v2957
          %3164 = vmatprep.mubr.bf16.mxu0 %v1940
          %3165 = vmatmul.mubr.bf16.gmra.mrb[0].mxu0 %v1939
          %v3166 = vpop.f32.mrb[0].mxu0
          %v3167 = vadd.f32 %v3124, %v3166
          %v3168 = vpop.f32.mrb[0].mxu0
          %v3169 = vadd.f32 %v3126, %v3168
          %v3170 = vpop.f32.mrb[0].mxu0
          %v3171 = vadd.f32 %v3128, %v3170
          %v3172 = vpop.f32.mrb[0].mxu0
          %v3173 = vadd.f32 %v3130, %v3172
          %3174 = vdwg.mxu0
          %3175 = vmatprep.subr.bf16.mxu0 %v2836
          %3176 = vmatpush1.bf16.msra.mxu0 %v2835
          %3177 = vmatprep.subr.bf16.mxu0 %v2840
          %3178 = vmatpush1.bf16.msra.mxu0 %v2839
          %3179 = vmatprep.subr.bf16.mxu0 %v2844
          %3180 = vmatpush1.bf16.msra.mxu0 %v2843
          %3181 = vmatprep.subr.bf16.mxu0 %v2848
          %3182 = vmatpush1.bf16.msra.mxu0 %v2847
          %3183 = vmatprep.subr.bf16.mxu0 %v2852
          %3184 = vmatpush1.bf16.msra.mxu0 %v2851
          %3185 = vmatprep.subr.bf16.mxu0 %v2856
          %3186 = vmatpush1.bf16.msra.mxu0 %v2855
          %3187 = vmatprep.subr.bf16.mxu0 %v2860
          %3188 = vmatpush1.bf16.msra.mxu0 %v2859
          %3189 = vmatprep.subr.bf16.mxu0 %v2864
          %3190 = vmatpush1.bf16.msra.mxu0 %v2863
          %3191 = vmatprep.subr.bf16.mxu0 %v2868
          %3192 = vmatpush1.bf16.msra.mxu0 %v2867
          %3193 = vmatprep.subr.bf16.mxu0 %v2872
          %3194 = vmatpush1.bf16.msra.mxu0 %v2871
          %3195 = vmatprep.subr.bf16.mxu0 %v2876
          %3196 = vmatpush1.bf16.msra.mxu0 %v2875
          %3197 = vmatprep.subr.bf16.mxu0 %v2880
          %3198 = vmatpush1.bf16.msra.mxu0 %v2879
          %3199 = vmatprep.subr.bf16.mxu0 %v2884
          %3200 = vmatpush1.bf16.msra.mxu0 %v2883
          %3201 = vmatprep.subr.bf16.mxu0 %v2888
          %3202 = vmatpush1.bf16.msra.mxu0 %v2887
          %3203 = vmatprep.subr.bf16.mxu0 %v2892
          %3204 = vmatpush1.bf16.msra.mxu0 %v2891
          %3205 = vmatprep.subr.bf16.mxu0 %v2896
          %3206 = vmatpush1.bf16.msra.mxu0 %v2895
          %3207 = vmatprep.mubr.bf16.mxu0 %v1938
          %3208 = vmatmul.mubr.bf16.gmra.mrb[0].mxu0 %v1937
          %v3209 = vpop.f32.mrb[0].mxu0
          %v3210 = vadd.f32 %v2441, %v3209
          %v3211 = vpop.f32.mrb[0].mxu0
          %v3212 = vadd.f32 %v2443, %v3211
          %v3213 = vpop.f32.mrb[0].mxu0
          %v3214 = vadd.f32 %v2445, %v3213
          %v3215 = vpop.f32.mrb[0].mxu0
          %v3216 = vadd.f32 %v2447, %v3215
          %3217 = vdwg.mxu0
          %3218 = vmatprep.subr.bf16.mxu0 %v2900
          %3219 = vmatpush1.bf16.msra.mxu0 %v2899
          %3220 = vmatprep.subr.bf16.mxu0 %v2904
          %3221 = vmatpush1.bf16.msra.mxu0 %v2903
          %3222 = vmatprep.subr.bf16.mxu0 %v2908
          %3223 = vmatpush1.bf16.msra.mxu0 %v2907
          %3224 = vmatprep.subr.bf16.mxu0 %v2912
          %3225 = vmatpush1.bf16.msra.mxu0 %v2911
          %3226 = vmatprep.subr.bf16.mxu0 %v2916
          %3227 = vmatpush1.bf16.msra.mxu0 %v2915
          %3228 = vmatprep.subr.bf16.mxu0 %v2920
          %3229 = vmatpush1.bf16.msra.mxu0 %v2919
          %3230 = vmatprep.subr.bf16.mxu0 %v2924
          %3231 = vmatpush1.bf16.msra.mxu0 %v2923
          %3232 = vmatprep.subr.bf16.mxu0 %v2928
          %3233 = vmatpush1.bf16.msra.mxu0 %v2927
          %3234 = vmatprep.subr.bf16.mxu0 %v2932
          %3235 = vmatpush1.bf16.msra.mxu0 %v2931
          %3236 = vmatprep.subr.bf16.mxu0 %v2936
          %3237 = vmatpush1.bf16.msra.mxu0 %v2935
          %3238 = vmatprep.subr.bf16.mxu0 %v2940
          %3239 = vmatpush1.bf16.msra.mxu0 %v2939
          %3240 = vmatprep.subr.bf16.mxu0 %v2944
          %3241 = vmatpush1.bf16.msra.mxu0 %v2943
          %3242 = vmatprep.subr.bf16.mxu0 %v2948
          %3243 = vmatpush1.bf16.msra.mxu0 %v2947
          %3244 = vmatprep.subr.bf16.mxu0 %v2952
          %3245 = vmatpush1.bf16.msra.mxu0 %v2951
          %3246 = vmatprep.subr.bf16.mxu0 %v2956
          %3247 = vmatpush1.bf16.msra.mxu0 %v2955
          %3248 = vmatprep.subr.bf16.mxu0 %v2960
          %3249 = vmatpush1.bf16.msra.mxu0 %v2959
          %3250 = vmatprep.mubr.bf16.mxu0 %v1940
          %3251 = vmatmul.mubr.bf16.gmra.mrb[0].mxu0 %v1939
          %v3252 = vpop.f32.mrb[0].mxu0
          %v3253 = vadd.f32 %v3210, %v3252
          %v3254 = vpop.f32.mrb[0].mxu0
          %v3255 = vadd.f32 %v3212, %v3254
          %v3256 = vpop.f32.mrb[0].mxu0
          %v3257 = vadd.f32 %v3214, %v3256
          %v3258 = vpop.f32.mrb[0].mxu0
          %v3259 = vadd.f32 %v3216, %v3258
          %3260 = vdwg.mxu0
          %v3261 = vld [vmem:[%s8] sm:$0xf]
          %v3263 = vlaneseq
          %v3264 = vshrl.u32 %v3263, 7
          %v3265 = vsub.s32 0, %v3264
          %v3266 = vrot.slane %v3261, %v3265
          %v3267 = vlaneseq
          %v3268 = vshrl.u32 %v3267, 7
          %v3269 = vsub.s32 1, %v3268
          %v3270 = vrot.slane %v3261, %v3269
          %v3271 = vlaneseq
          %v3272 = vshrl.u32 %v3271, 7
          %v3273 = vsub.s32 2, %v3272
          %v3274 = vrot.slane %v3261, %v3273
          %v3275 = vlaneseq
          %v3276 = vshrl.u32 %v3275, 7
          %v3277 = vsub.s32 3, %v3276
          %v3278 = vrot.slane %v3261, %v3277
          %v3283 = vadd.f32 %v3167, %v3266
          %v3284 = vadd.f32 %v3169, %v3270
          %v3285 = vadd.f32 %v3253, %v3274
          %v3286 = vadd.f32 %v3255, %v3278
          %v3287 = vadd.f32 %v3171, %v3266
          %v3288 = vadd.f32 %v3173, %v3270
          %v3289 = vadd.f32 %v3257, %v3274
          %v3290 = vadd.f32 %v3259, %v3278
          %v3291 = vmax.f32 %v3283, 0.0
          %v3292 = vmax.f32 %v3284, 0.0
          %v3293 = vmax.f32 %v3285, 0.0
          %v3294 = vmax.f32 %v3286, 0.0
          %v3295 = vmax.f32 %v3287, 0.0
          %v3296 = vmax.f32 %v3288, 0.0
          %v3297 = vmax.f32 %v3289, 0.0
          %v3298 = vmax.f32 %v3290, 0.0
          %v3299 = vpack.c.bf16 %v3295, %v3291
          %v3300 = vpack.c.bf16 %v3296, %v3292
          %v3301 = vpack.c.bf16 %v3297, %v3293
          %v3302 = vpack.c.bf16 %v3298, %v3294
          %v3303 = vld [vmem:[%s9] sm:$0xf]
          %v3304 = vld [vmem:[%s9 + $0x4] sm:$0xf]
          %v3305 = vld [vmem:[%s9 + $0x8] sm:$0xf]
          %v3306 = vld [vmem:[%s9 + $0xc] sm:$0xf]
          %v3307 = vld [vmem:[%s9 + $0x10] sm:$0xf]
          %v3308 = vld [vmem:[%s9 + $0x14] sm:$0xf]
          %v3309 = vld [vmem:[%s9 + $0x18] sm:$0xf]
          %v3310 = vld [vmem:[%s9 + $0x1c] sm:$0xf]
          %v3311 = vld [vmem:[%s9 + $0x20] sm:$0xf]
          %v3312 = vld [vmem:[%s9 + $0x24] sm:$0xf]
          %v3313 = vld [vmem:[%s9 + $0x28] sm:$0xf]
          %v3314 = vld [vmem:[%s9 + $0x2c] sm:$0xf]
          %v3315 = vld [vmem:[%s9 + $0x30] sm:$0xf]
          %v3316 = vld [vmem:[%s9 + $0x34] sm:$0xf]
          %v3317 = vld [vmem:[%s9 + $0x38] sm:$0xf]
          %v3318 = vld [vmem:[%s9 + $0x3c] sm:$0xf]
          %v3319 = vld [vmem:[%s9 + $0x40] sm:$0xf]
          %v3320 = vld [vmem:[%s9 + $0x44] sm:$0xf]
          %v3321 = vld [vmem:[%s9 + $0x48] sm:$0xf]
          %v3322 = vld [vmem:[%s9 + $0x4c] sm:$0xf]
          %v3323 = vld [vmem:[%s9 + $0x50] sm:$0xf]
          %v3324 = vld [vmem:[%s9 + $0x54] sm:$0xf]
          %v3325 = vld [vmem:[%s9 + $0x58] sm:$0xf]
          %v3326 = vld [vmem:[%s9 + $0x5c] sm:$0xf]
          %v3327 = vld [vmem:[%s9 + $0x60] sm:$0xf]
          %v3328 = vld [vmem:[%s9 + $0x64] sm:$0xf]
          %v3329 = vld [vmem:[%s9 + $0x68] sm:$0xf]
          %v3330 = vld [vmem:[%s9 + $0x6c] sm:$0xf]
          %v3331 = vld [vmem:[%s9 + $0x70] sm:$0xf]
          %v3332 = vld [vmem:[%s9 + $0x74] sm:$0xf]
          %v3333 = vld [vmem:[%s9 + $0x78] sm:$0xf]
          %v3334 = vld [vmem:[%s9 + $0x7c] sm:$0xf]
          %v3335 = vld [vmem:[%s9 + $0x80] sm:$0xf]
          %v3336 = vld [vmem:[%s9 + $0x84] sm:$0xf]
          %v3337 = vld [vmem:[%s9 + $0x88] sm:$0xf]
          %v3338 = vld [vmem:[%s9 + $0x8c] sm:$0xf]
          %v3339 = vld [vmem:[%s9 + $0x90] sm:$0xf]
          %v3340 = vld [vmem:[%s9 + $0x94] sm:$0xf]
          %v3341 = vld [vmem:[%s9 + $0x98] sm:$0xf]
          %v3342 = vld [vmem:[%s9 + $0x9c] sm:$0xf]
          %v3343 = vld [vmem:[%s9 + $0xa0] sm:$0xf]
          %v3344 = vld [vmem:[%s9 + $0xa4] sm:$0xf]
          %v3345 = vld [vmem:[%s9 + $0xa8] sm:$0xf]
          %v3346 = vld [vmem:[%s9 + $0xac] sm:$0xf]
          %v3347 = vld [vmem:[%s9 + $0xb0] sm:$0xf]
          %v3348 = vld [vmem:[%s9 + $0xb4] sm:$0xf]
          %v3349 = vld [vmem:[%s9 + $0xb8] sm:$0xf]
          %v3350 = vld [vmem:[%s9 + $0xbc] sm:$0xf]
          %v3351 = vld [vmem:[%s9 + $0xc0] sm:$0xf]
          %v3352 = vld [vmem:[%s9 + $0xc4] sm:$0xf]
          %v3353 = vld [vmem:[%s9 + $0xc8] sm:$0xf]
          %v3354 = vld [vmem:[%s9 + $0xcc] sm:$0xf]
          %v3355 = vld [vmem:[%s9 + $0xd0] sm:$0xf]
          %v3356 = vld [vmem:[%s9 + $0xd4] sm:$0xf]
          %v3357 = vld [vmem:[%s9 + $0xd8] sm:$0xf]
          %v3358 = vld [vmem:[%s9 + $0xdc] sm:$0xf]
          %v3359 = vld [vmem:[%s9 + $0xe0] sm:$0xf]
          %v3360 = vld [vmem:[%s9 + $0xe4] sm:$0xf]
          %v3361 = vld [vmem:[%s9 + $0xe8] sm:$0xf]
          %v3362 = vld [vmem:[%s9 + $0xec] sm:$0xf]
          %v3363 = vld [vmem:[%s9 + $0xf0] sm:$0xf]
          %v3364 = vld [vmem:[%s9 + $0xf4] sm:$0xf]
          %v3365 = vld [vmem:[%s9 + $0xf8] sm:$0xf]
          %v3366 = vld [vmem:[%s9 + $0xfc] sm:$0xf]
          %v3367 = vld [vmem:[%s10] sm:$0x1]
          %v3369 = vlaneseq
          %v3370 = vshrl.u32 %v3369, 7
          %v3371 = vsub.s32 0, %v3370
          %v3372 = vrot.slane %v3367, %v3371
          %v3438 = vunpack.c.l.b16 %v3303
          %v3439 = vunpack.c.l.b16 %v3304
          %v3440 = vunpack.c.l.b16 %v3305
          %v3441 = vunpack.c.l.b16 %v3306
          %v3442 = vunpack.c.l.b16 %v3307
          %v3443 = vunpack.c.l.b16 %v3308
          %v3444 = vunpack.c.l.b16 %v3309
          %v3445 = vunpack.c.l.b16 %v3310
          %v3446 = vunpack.c.l.b16 %v3311
          %v3447 = vunpack.c.l.b16 %v3312
          %v3448 = vunpack.c.l.b16 %v3313
          %v3449 = vunpack.c.l.b16 %v3314
          %v3450 = vunpack.c.l.b16 %v3315
          %v3451 = vunpack.c.l.b16 %v3316
          %v3452 = vunpack.c.l.b16 %v3317
          %v3453 = vunpack.c.l.b16 %v3318
          %v3454 = vunpack.c.l.b16 %v3319
          %v3455 = vunpack.c.l.b16 %v3320
          %v3456 = vunpack.c.l.b16 %v3321
          %v3457 = vunpack.c.l.b16 %v3322
          %v3458 = vunpack.c.l.b16 %v3323
          %v3459 = vunpack.c.l.b16 %v3324
          %v3460 = vunpack.c.l.b16 %v3325
          %v3461 = vunpack.c.l.b16 %v3326
          %v3462 = vunpack.c.l.b16 %v3327
          %v3463 = vunpack.c.l.b16 %v3328
          %v3464 = vunpack.c.l.b16 %v3329
          %v3465 = vunpack.c.l.b16 %v3330
          %v3466 = vunpack.c.l.b16 %v3331
          %v3467 = vunpack.c.l.b16 %v3332
          %v3468 = vunpack.c.l.b16 %v3333
          %v3469 = vunpack.c.l.b16 %v3334
          %v3470 = vunpack.c.l.b16 %v3335
          %v3471 = vunpack.c.l.b16 %v3336
          %v3472 = vunpack.c.l.b16 %v3337
          %v3473 = vunpack.c.l.b16 %v3338
          %v3474 = vunpack.c.l.b16 %v3339
          %v3475 = vunpack.c.l.b16 %v3340
          %v3476 = vunpack.c.l.b16 %v3341
          %v3477 = vunpack.c.l.b16 %v3342
          %v3478 = vunpack.c.l.b16 %v3343
          %v3479 = vunpack.c.l.b16 %v3344
          %v3480 = vunpack.c.l.b16 %v3345
          %v3481 = vunpack.c.l.b16 %v3346
          %v3482 = vunpack.c.l.b16 %v3347
          %v3483 = vunpack.c.l.b16 %v3348
          %v3484 = vunpack.c.l.b16 %v3349
          %v3485 = vunpack.c.l.b16 %v3350
          %v3486 = vunpack.c.l.b16 %v3351
          %v3487 = vunpack.c.l.b16 %v3352
          %v3488 = vunpack.c.l.b16 %v3353
          %v3489 = vunpack.c.l.b16 %v3354
          %v3490 = vunpack.c.l.b16 %v3355
          %v3491 = vunpack.c.l.b16 %v3356
          %v3492 = vunpack.c.l.b16 %v3357
          %v3493 = vunpack.c.l.b16 %v3358
          %v3494 = vunpack.c.l.b16 %v3359
          %v3495 = vunpack.c.l.b16 %v3360
          %v3496 = vunpack.c.l.b16 %v3361
          %v3497 = vunpack.c.l.b16 %v3362
          %v3498 = vunpack.c.l.b16 %v3363
          %v3499 = vunpack.c.l.b16 %v3364
          %v3500 = vunpack.c.l.b16 %v3365
          %v3501 = vunpack.c.l.b16 %v3366
          %v3502 = vpack.c.b16 %v3439, %v3438
          %v3503 = vpack.c.b16 %v3441, %v3440
          %v3504 = vpack.c.b16 %v3443, %v3442
          %v3505 = vpack.c.b16 %v3445, %v3444
          %v3506 = vpack.c.b16 %v3447, %v3446
          %v3507 = vpack.c.b16 %v3449, %v3448
          %v3508 = vpack.c.b16 %v3451, %v3450
          %v3509 = vpack.c.b16 %v3453, %v3452
          %v3510 = vpack.c.b16 %v3455, %v3454
          %v3511 = vpack.c.b16 %v3457, %v3456
          %v3512 = vpack.c.b16 %v3459, %v3458
          %v3513 = vpack.c.b16 %v3461, %v3460
          %v3514 = vpack.c.b16 %v3463, %v3462
          %v3515 = vpack.c.b16 %v3465, %v3464
          %v3516 = vpack.c.b16 %v3467, %v3466
          %v3517 = vpack.c.b16 %v3469, %v3468
          %v3518 = vpack.c.b16 %v3471, %v3470
          %v3519 = vpack.c.b16 %v3473, %v3472
          %v3520 = vpack.c.b16 %v3475, %v3474
          %v3521 = vpack.c.b16 %v3477, %v3476
          %v3522 = vpack.c.b16 %v3479, %v3478
          %v3523 = vpack.c.b16 %v3481, %v3480
          %v3524 = vpack.c.b16 %v3483, %v3482
          %v3525 = vpack.c.b16 %v3485, %v3484
          %v3526 = vpack.c.b16 %v3487, %v3486
          %v3527 = vpack.c.b16 %v3489, %v3488
          %v3528 = vpack.c.b16 %v3491, %v3490
          %v3529 = vpack.c.b16 %v3493, %v3492
          %v3530 = vpack.c.b16 %v3495, %v3494
          %v3531 = vpack.c.b16 %v3497, %v3496
          %v3532 = vpack.c.b16 %v3499, %v3498
          %v3533 = vpack.c.b16 %v3501, %v3500
          %3566 = vmatprep.subr.bf16.mxu0 0
          %3567 = vmatpush1.bf16.msra.mxu0 %v3502
          %3568 = vmatprep.subr.bf16.mxu0 0
          %3569 = vmatpush1.bf16.msra.mxu0 %v3503
          %3570 = vmatprep.subr.bf16.mxu0 0
          %3571 = vmatpush1.bf16.msra.mxu0 %v3504
          %3572 = vmatprep.subr.bf16.mxu0 0
          %3573 = vmatpush1.bf16.msra.mxu0 %v3505
          %3574 = vmatprep.subr.bf16.mxu0 0
          %3575 = vmatpush1.bf16.msra.mxu0 %v3506
          %3576 = vmatprep.subr.bf16.mxu0 0
          %3577 = vmatpush1.bf16.msra.mxu0 %v3507
          %3578 = vmatprep.subr.bf16.mxu0 0
          %3579 = vmatpush1.bf16.msra.mxu0 %v3508
          %3580 = vmatprep.subr.bf16.mxu0 0
          %3581 = vmatpush1.bf16.msra.mxu0 %v3509
          %3582 = vmatprep.subr.bf16.mxu0 0
          %3583 = vmatpush1.bf16.msra.mxu0 %v3510
          %3584 = vmatprep.subr.bf16.mxu0 0
          %3585 = vmatpush1.bf16.msra.mxu0 %v3511
          %3586 = vmatprep.subr.bf16.mxu0 0
          %3587 = vmatpush1.bf16.msra.mxu0 %v3512
          %3588 = vmatprep.subr.bf16.mxu0 0
          %3589 = vmatpush1.bf16.msra.mxu0 %v3513
          %3590 = vmatprep.subr.bf16.mxu0 0
          %3591 = vmatpush1.bf16.msra.mxu0 %v3514
          %3592 = vmatprep.subr.bf16.mxu0 0
          %3593 = vmatpush1.bf16.msra.mxu0 %v3515
          %3594 = vmatprep.subr.bf16.mxu0 0
          %3595 = vmatpush1.bf16.msra.mxu0 %v3516
          %3596 = vmatprep.subr.bf16.mxu0 0
          %3597 = vmatpush1.bf16.msra.mxu0 %v3517
          %3598 = vmatprep.mubr.bf16.mxu0 %v3300
          %3599 = vmatmul.mubr.bf16.gmra.mrb[0].mxu0 %v3299
          %v3600 = vpop.f32.mrb[0].mxu0
          %v3601 = vadd.f32 %v3372, %v3600
          %v3602 = vpop.f32.mrb[0].mxu0
          %v3603 = vpop.f32.mrb[0].mxu0
          %v3604 = vadd.f32 %v3372, %v3603
          %v3605 = vpop.f32.mrb[0].mxu0
          %3606 = vdwg.mxu0
          %3607 = vmatprep.subr.bf16.mxu0 0
          %3608 = vmatpush1.bf16.msra.mxu0 %v3518
          %3609 = vmatprep.subr.bf16.mxu0 0
          %3610 = vmatpush1.bf16.msra.mxu0 %v3519
          %3611 = vmatprep.subr.bf16.mxu0 0
          %3612 = vmatpush1.bf16.msra.mxu0 %v3520
          %3613 = vmatprep.subr.bf16.mxu0 0
          %3614 = vmatpush1.bf16.msra.mxu0 %v3521
          %3615 = vmatprep.subr.bf16.mxu0 0
          %3616 = vmatpush1.bf16.msra.mxu0 %v3522
          %3617 = vmatprep.subr.bf16.mxu0 0
          %3618 = vmatpush1.bf16.msra.mxu0 %v3523
          %3619 = vmatprep.subr.bf16.mxu0 0
          %3620 = vmatpush1.bf16.msra.mxu0 %v3524
          %3621 = vmatprep.subr.bf16.mxu0 0
          %3622 = vmatpush1.bf16.msra.mxu0 %v3525
          %3623 = vmatprep.subr.bf16.mxu0 0
          %3624 = vmatpush1.bf16.msra.mxu0 %v3526
          %3625 = vmatprep.subr.bf16.mxu0 0
          %3626 = vmatpush1.bf16.msra.mxu0 %v3527
          %3627 = vmatprep.subr.bf16.mxu0 0
          %3628 = vmatpush1.bf16.msra.mxu0 %v3528
          %3629 = vmatprep.subr.bf16.mxu0 0
          %3630 = vmatpush1.bf16.msra.mxu0 %v3529
          %3631 = vmatprep.subr.bf16.mxu0 0
          %3632 = vmatpush1.bf16.msra.mxu0 %v3530
          %3633 = vmatprep.subr.bf16.mxu0 0
          %3634 = vmatpush1.bf16.msra.mxu0 %v3531
          %3635 = vmatprep.subr.bf16.mxu0 0
          %3636 = vmatpush1.bf16.msra.mxu0 %v3532
          %3637 = vmatprep.subr.bf16.mxu0 0
          %3638 = vmatpush1.bf16.msra.mxu0 %v3533
          %3639 = vmatprep.mubr.bf16.mxu0 %v3302
          %3640 = vmatmul.mubr.bf16.gmra.mrb[0].mxu0 %v3301
          %v3641 = vpop.f32.mrb[0].mxu0
          %v3642 = vadd.f32 %v3601, %v3641
          %v3643 = vpop.f32.mrb[0].mxu0
          %v3644 = vpop.f32.mrb[0].mxu0
          %v3645 = vadd.f32 %v3604, %v3644
          %v3646 = vpop.f32.mrb[0].mxu0
          %3647 = vdwg.mxu0
          %v3648 = vtanh.pop %v3642
          %v3649 = vtanh.pop %v3645
          %3650 = vst [vmem:[%s11] sm:$0xff] %v3648
          %3651 = vst [vmem:[%s11 + $0x8] sm:$0xff] %v3649
        $region98: #{value_forward.7} parent=85 // pred_fallthru
          _
        // Predicated region
        $region99: #{value_forward.7} parent=85 // pred_check
          %p3652 = pneg %p276
        $region100: #{value_forward.7} parent=85 // pred_check_branch
          %3654 = sbr.rel (%p3652) target = $region102
        $region101: #{value_forward.7} parent=85 // pred_region
          _
        $region102: #{value_forward.7} parent=85 // pred_fallthru
          _
        // Predicated region
        $region103: #{value_forward.7} parent=85 // pred_check
          %p3655 = pneg %p276
        $region104: #{value_forward.7} parent=85 // pred_check_branch
          %3657 = sbr.rel (%p3655) target = $region106
        $region105: #{value_forward.7} parent=85 // pred_region
          _
        $region106: #{value_forward.7} parent=85 // pred_fallthru
          _
      $region86: #{value_forward.7} parent=5 // pred_fallthru
        _
      %p3658 = scmp.le.s32.totalorder 2, %s17
      // Predicated region
      $region107: #{value_forward.7} parent=5 // pred_check
        %p3659 = pneg %p3658
      $region108: #{value_forward.7} parent=5 // pred_check_branch
        %3661 = sbr.rel (%p3659) target = $region110
      $region109: #{value_forward.7} parent=5 // pred_region
        %s3662 = ssub.s32 %s17, 2
      $region110: #{value_forward.7} parent=5 // pred_fallthru
        _
    $region6: #{value_forward.7} parent=1 // loop_footer
      %s21 = sadd.s32 1, %s17
    $region7: #{value_forward.7} parent=1 // loop_footer_branch
      %16 = sbr.rel target = $region3
    $region8: #{value_forward.7} parent=1 // loop_exit
      _

</llo_original>
